<compile_context>
chip_gen: v7x
topology: tpu7x:2x2x1
jax: 0.10.0
libtpu: 0.0.40
codegen_flags: <defaults>
</compile_context>

<pallas_src>
import functools
import math

import jax
import jax.numpy as jnp
from jax import lax
from jax.experimental import pallas as pl
from jax.experimental.pallas import tpu as pltpu


def _fused_decoder_kernel(
        x_ref, selfm_ref, crossm_ref, enck_ref, encv_ref,
        wqkv1_ref, wo1_ref, wq2_ref, wo2_ref,
        w1_ref, b1_ref, w2_ref, b2_ref,
        lng_ref, lnb_ref, wd_ref, bd_ref,
        out_ref, act_ref,
        *, num_heads, batch, matmul_dtype, approx_recip):
    nh = num_heads
    B = batch
    BT, H = act_ref.shape
    T = BT // B
    dh = H // nh
    G = nh * B                                  # fused (head, batch) dim
    cdt = matmul_dtype
    blk = pl.program_id(0)
    nblks = pl.num_programs(0)

    def mm(a, b):
        # 2-D MXU matmul, fp32 accumulation.
        return jnp.dot(a, b, preferred_element_type=jnp.float32)

    def ln(y, idx):
        g = lng_ref[idx:idx + 1, :].astype(jnp.float32)      # [1, H]
        bb = lnb_ref[idx:idx + 1, :].astype(jnp.float32)
        mu = jnp.mean(y, axis=-1, keepdims=True)
        var = jnp.mean(jnp.square(y - mu), axis=-1, keepdims=True)
        return (y - mu) * lax.rsqrt(var + 1e-5) * g + bb

    def attention(q_h, k_h, v_h, keep, wo_ref):
        # q_h: (G, T, dh); k_h / v_h: (G, Tk, dh); keep: bool, broadcastable
        # to (G, T, Tk).  One batched contraction over the fused head*batch
        # dim instead of a per-head Python loop with lane slices.
        s = jnp.einsum('gqd,gkd->gqk', q_h, k_h,
                       preferred_element_type=jnp.float32)    # scale folded in W_q
        s = jnp.where(keep, s, jnp.float32(-1e6))             # masked_softmax
        m = jnp.max(s, axis=-1, keepdims=True)
        e = jnp.exp(s - m)
        denom = jnp.sum(e, axis=-1, keepdims=True)
        ctx = jnp.einsum('gqk,gkd->gqd', e.astype(cdt), v_h,
                         preferred_element_type=jnp.float32)
        # Normalize the narrow context (dh lanes), not the [Tq, Tk] probs.
        ctx = ctx * pl.reciprocal(denom, approx=approx_recip)
        # Fold heads back through W_o: head-batched matmul + static add-reduce
        # (no lane concatenate, no lane slicing).
        ctx_h = ctx.reshape(nh, BT, dh).astype(cdt)           # g = h*B + b
        o = jnp.einsum('hnd,hdo->hno', ctx_h, wo_ref[...],
                       preferred_element_type=jnp.float32)    # (nh, BT, H)
        out = o[0]
        for hh in range(1, nh):
            out = out + o[hh]
        return out                                            # (BT, H) fp32

    # ---- load the input activation once, carry it in VMEM across blocks ----
    @pl.when(blk == 0)
    def _():
        act_ref[...] = x_ref[...].astype(jnp.float32)

    x = act_ref[...]                                          # (BT, H) fp32
    smask = selfm_ref[...] != 0.0                             # (1, T, T) bool
    cmask = crossm_ref[...] != 0.0                            # (G, 1, S) bool

    # ---- masked self-attention + AddNorm1 ----
    xc = x.astype(cdt)                                        # cast once
    xb = jnp.broadcast_to(xc[None], (3 * nh, BT, H))
    qkv = jnp.einsum('gnh,ghd->gnd', xb, wqkv1_ref[...],
                     preferred_element_type=jnp.float32).astype(cdt)
    q1 = qkv[:nh].reshape(G, T, dh)                           # g = h*B + b
    k1 = qkv[nh:2 * nh].reshape(G, T, dh)
    v1 = qkv[2 * nh:].reshape(G, T, dh)
    x2 = attention(q1, k1, v1, smask, wo1_ref)
    y = ln(x + x2, 0)

    # ---- cross-attention over pre-projected encoder K/V + AddNorm2 ----
    yb = jnp.broadcast_to(y.astype(cdt)[None], (nh, BT, H))
    q2 = jnp.einsum('gnh,ghd->gnd', yb, wq2_ref[...],
                    preferred_element_type=jnp.float32).astype(cdt)
    q2 = q2.reshape(G, T, dh)
    y2 = attention(q2, enck_ref[...], encv_ref[...], cmask, wo2_ref)
    z = ln(y + y2, 1)

    # ---- position-wise FFN + AddNorm3 ----
    zc = z.astype(cdt)
    h1 = jnp.maximum(mm(zc, w1_ref[...]) + b1_ref[...].astype(jnp.float32),
                     0.0)
    ff = mm(h1.astype(cdt), w2_ref[...]) + b2_ref[...].astype(jnp.float32)
    outb = ln(z + ff, 2)

    act_ref[...] = outb                                       # carry to block b+1

    # ---- final nn.Linear, fused, applied once after the last block ----
    @pl.when(blk == nblks - 1)
    def _():
        o = mm(outb.astype(cdt), wd_ref[...]) + bd_ref[...].astype(jnp.float32)
        out_ref[...] = o.astype(out_ref.dtype)


def prepare_params(raw, num_heads):
    """One-time parameter repack (outside the kernel):
       * nn.Linear weights transposed to [in, out],
       * 1/sqrt(dh) folded into W_q,
       * per-head slabs stacked on a leading axis (Q|K|V fused for self-attn),
       * everything stacked over blocks for BlockSpec streaming."""
    nh = num_heads
    blocks = raw["blocks"]
    H = blocks[0]["attn1"]["wq"].shape[0]
    dh = H // nh
    scale = 1.0 / math.sqrt(dh)

    def heads_cols(wT):                      # (H, H)[in,out] -> (nh, H, dh)
        return jnp.transpose(wT.reshape(H, nh, dh), (1, 0, 2))

    w_qkv1, wo1, wq2, wk2, wv2, wo2 = [], [], [], [], [], []
    w1, b1, w2, b2, lng, lnb = [], [], [], [], [], []
    for blk in blocks:
        a1, a2 = blk["attn1"], blk["attn2"]
        w_qkv1.append(jnp.concatenate([heads_cols(a1["wq"].T * scale),
                                       heads_cols(a1["wk"].T),
                                       heads_cols(a1["wv"].T)], axis=0))
        wo1.append(a1["wo"].T.reshape(nh, dh, H))
        wq2.append(heads_cols(a2["wq"].T * scale))
        wk2.append(heads_cols(a2["wk"].T))
        wv2.append(heads_cols(a2["wv"].T))
        wo2.append(a2["wo"].T.reshape(nh, dh, H))
        w1.append(blk["w1"].T)
        b1.append(blk["b1"].reshape(1, -1))
        w2.append(blk["w2"].T)
        b2.append(blk["b2"].reshape(1, -1))
        lng.append(jnp.stack([blk["ln1_g"], blk["ln2_g"], blk["ln3_g"]]))
        lnb.append(jnp.stack([blk["ln1_b"], blk["ln2_b"], blk["ln3_b"]]))

    stk = lambda xs: jnp.stack(xs, axis=0)
    return dict(w_qkv1=stk(w_qkv1), wo1=stk(wo1),
                wq2=stk(wq2), wk2=stk(wk2), wv2=stk(wv2), wo2=stk(wo2),
                w1=stk(w1), b1=stk(b1), w2=stk(w2), b2=stk(b2),
                ln_g=stk(lng), ln_b=stk(lnb),
                dense_wT=raw["dense_w"].T,
                dense_b=raw["dense_b"].reshape(1, -1))


def transformer_decoder_forward(X, enc_outputs, enc_valid_lens, params,
                                num_heads, *, training=True,
                                matmul_dtype=jnp.bfloat16):
    """d2l TransformerDecoder forward (dropout=0).  Returns dense(blocks(X))."""
    B, T, H = X.shape
    S = enc_outputs.shape[1]
    nh = num_heads
    dh = H // nh
    G = nh * B
    cdt = matmul_dtype
    nblks = params["w_qkv1"].shape[0]
    F = params["w1"].shape[2]

    # Block-invariant masks, built once outside the kernel.
    if training:
        qpos = jnp.arange(T, dtype=jnp.int32)[:, None]
        kpos = jnp.arange(T, dtype=jnp.int32)[None, :]
        self_mask = (kpos <= qpos).astype(jnp.float32)[None]        # (1,T,T)
    else:
        self_mask = jnp.ones((1, T, T), jnp.float32)
    if enc_valid_lens is None:
        cross_mask = jnp.ones((G, 1, S), jnp.float32)
    else:
        vl = enc_valid_lens.astype(jnp.int32).reshape(B, 1)
        cm = (jnp.arange(S, dtype=jnp.int32)[None, :] < vl).astype(jnp.float32)
        cross_mask = jnp.tile(cm, (nh, 1))[:, None, :]               # (G,1,S)

    # Hoisted, block-invariant cross-attention K/V projection of the encoder
    # outputs for ALL blocks (one einsum instead of 2*NBLKS per-block matmuls
    # on the serial critical path).
    enc_f = enc_outputs.astype(jnp.float32)
    enc_k = jnp.einsum('bsh,nqhd->nqbsd', enc_f,
                       params["wk2"]).reshape(nblks, G, S, dh).astype(cdt)
    enc_v = jnp.einsum('bsh,nqhd->nqbsd', enc_f,
                       params["wv2"]).reshape(nblks, G, S, dh).astype(cdt)

    x2d = X.reshape(B * T, H)

    kernel = functools.partial(
        _fused_decoder_kernel, num_heads=nh, batch=B,
        matmul_dtype=cdt, approx_recip=(cdt != jnp.float32))

    grid_spec = pltpu.PrefetchScalarGridSpec(
        num_scalar_prefetch=0,
        grid=(nblks,),
        in_specs=[
            pl.BlockSpec((B * T, H), lambda b: (0, 0)),               # x
            pl.BlockSpec((1, T, T), lambda b: (0, 0, 0)),             # self mask
            pl.BlockSpec((G, 1, S), lambda b: (0, 0, 0)),             # cross mask
            pl.BlockSpec((None, G, S, dh), lambda b: (b, 0, 0, 0)),   # enc K
            pl.BlockSpec((None, G, S, dh), lambda b: (b, 0, 0, 0)),   # enc V
            pl.BlockSpec((None, 3 * nh, H, dh), lambda b: (b, 0, 0, 0)),  # Wqkv1
            pl.BlockSpec((None, nh, dh, H), lambda b: (b, 0, 0, 0)),  # Wo1
            pl.BlockSpec((None, nh, H, dh), lambda b: (b, 0, 0, 0)),  # Wq2
            pl.BlockSpec((None, nh, dh, H), lambda b: (b, 0, 0, 0)),  # Wo2
            pl.BlockSpec((None, H, F), lambda b: (b, 0, 0)),          # ffn W1
            pl.BlockSpec((None, 1, F), lambda b: (b, 0, 0)),          # ffn b1
            pl.BlockSpec((None, F, H), lambda b: (b, 0, 0)),          # ffn W2
            pl.BlockSpec((None, 1, H), lambda b: (b, 0, 0)),          # ffn b2
            pl.BlockSpec((None, 3, H), lambda b: (b, 0, 0)),          # LN gamma
            pl.BlockSpec((None, 3, H), lambda b: (b, 0, 0)),          # LN beta
            pl.BlockSpec((H, H), lambda b: (0, 0)),                   # dense W
            pl.BlockSpec((1, H), lambda b: (0, 0)),                   # dense b
        ],
        out_specs=pl.BlockSpec((B * T, H), lambda b: (0, 0)),
        scratch_shapes=[pltpu.VMEM((B * T, H), jnp.float32)],         # carried act
    )

    out2d = pl.pallas_call(
        kernel,
        grid_spec=grid_spec,
        out_shape=jax.ShapeDtypeStruct((B * T, H), X.dtype),
        compiler_params=pltpu.CompilerParams(
            dimension_semantics=("arbitrary",),     # carried state across blocks
            vmem_limit_bytes=32 * 1024 * 1024),     # v7x-safe budget
    )(x2d, self_mask, cross_mask, enc_k, enc_v,
      params["w_qkv1"].astype(cdt), params["wo1"].astype(cdt),
      params["wq2"].astype(cdt), params["wo2"].astype(cdt),
      params["w1"].astype(cdt), params["b1"],
      params["w2"].astype(cdt), params["b2"],
      params["ln_g"], params["ln_b"],
      params["dense_wT"].astype(cdt), params["dense_b"])

    return out2d.reshape(B, T, H)


def _reference_decoder(X, enc_outputs, enc_valid_lens, raw, num_heads,
                       training=True):
    """Pure-JAX fp32 mirror of the PyTorch TransformerDecoder forward."""
    B, T, H = X.shape

    def masked_softmax(scores, valid_lens):
        if valid_lens is None:
            return jax.nn.softmax(scores, axis=-1)
        shape = scores.shape
        if valid_lens.ndim == 1:
            vl = jnp.repeat(valid_lens, shape[1])
        else:
            vl = valid_lens.reshape(-1)
        s2 = scores.reshape(-1, shape[-1])
        mask = jnp.arange(shape[-1])[None, :] < vl[:, None]
        s2 = jnp.where(mask, s2, -1e6)
        return jax.nn.softmax(s2.reshape(shape), axis=-1)

    def mha(q, k, v, valid_lens, p):
        def tqkv(x):
            b, s, _ = x.shape
            x = x.reshape(b, s, num_heads, -1).transpose(0, 2, 1, 3)
            return x.reshape(b * num_heads, s, -1)
        Q, K, V = tqkv(q @ p["wq"].T), tqkv(k @ p["wk"].T), tqkv(v @ p["wv"].T)
        d = Q.shape[-1]
        scores = jnp.einsum('bqd,bkd->bqk', Q, K) / math.sqrt(d)
        if valid_lens is not None:
            valid_lens = jnp.repeat(valid_lens, num_heads, axis=0)
        attn = masked_softmax(scores, valid_lens)
        out = jnp.einsum('bqk,bkd->bqd', attn, V)
        out = out.reshape(B, num_heads, q.shape[1], d).transpose(0, 2, 1, 3)
        out = out.reshape(B, q.shape[1], num_heads * d)
        return out @ p["wo"].T

    def layer_norm(x, g, b, eps=1e-5):
        mu = x.mean(-1, keepdims=True)
        var = ((x - mu) ** 2).mean(-1, keepdims=True)
        return (x - mu) / jnp.sqrt(var + eps) * g + b

    dec_valid_lens = (jnp.tile(jnp.arange(1, T + 1), (B, 1))
                      if training else None)
    for blk in raw["blocks"]:
        X2 = mha(X, X, X, dec_valid_lens, blk["attn1"])
        Y = layer_norm(X + X2, blk["ln1_g"], blk["ln1_b"])
        Y2 = mha(Y, enc_outputs, enc_outputs, enc_valid_lens, blk["attn2"])
        Z = layer_norm(Y + Y2, blk["ln2_g"], blk["ln2_b"])
        ff = (jnp.maximum(Z @ blk["w1"].T + blk["b1"], 0.0) @ blk["w2"].T
              + blk["b2"])
        X = layer_norm(Z + ff, blk["ln3_g"], blk["ln3_b"])
    return X @ raw["dense_w"].T + raw["dense_b"]


if __name__ == "__main__":
    B, T, S, H, FFN, NH, NBLKS = 2, 8, 12, 32, 64, 4, 2

    key = jax.random.PRNGKey(0)
    keys = jax.random.split(key, 3 + NBLKS)
    kx, kenc, kdense = keys[0], keys[1], keys[2]

    X = jax.random.normal(kx, (B, T, H), dtype=jnp.float32)
    enc_outputs = jax.random.normal(kenc, (B, S, H), dtype=jnp.float32)
    enc_valid_lens = jnp.array([3, 9], dtype=jnp.int32)

    def linear_w(k, out_dim, in_dim):
        return (jax.random.normal(k, (out_dim, in_dim), jnp.float32)
                / math.sqrt(in_dim))

    blocks = []
    for i in range(NBLKS):
        bk = jax.random.split(keys[3 + i], 18)
        blocks.append(dict(
            attn1=dict(wq=linear_w(bk[0], H, H), wk=linear_w(bk[1], H, H),
                       wv=linear_w(bk[2], H, H), wo=linear_w(bk[3], H, H)),
            ln1_g=1.0 + 0.1 * jax.random.normal(bk[4], (H,), jnp.float32),
            ln1_b=0.1 * jax.random.normal(bk[5], (H,), jnp.float32),
            attn2=dict(wq=linear_w(bk[6], H, H), wk=linear_w(bk[7], H, H),
                       wv=linear_w(bk[8], H, H), wo=linear_w(bk[9], H, H)),
            ln2_g=1.0 + 0.1 * jax.random.normal(bk[10], (H,), jnp.float32),
            ln2_b=0.1 * jax.random.normal(bk[11], (H,), jnp.float32),
            w1=linear_w(bk[12], FFN, H),
            b1=0.1 * jax.random.normal(bk[13], (FFN,), jnp.float32),
            w2=linear_w(bk[14], H, FFN),
            b2=0.1 * jax.random.normal(bk[15], (H,), jnp.float32),
            ln3_g=1.0 + 0.1 * jax.random.normal(bk[16], (H,), jnp.float32),
            ln3_b=0.1 * jax.random.normal(bk[17], (H,), jnp.float32),
        ))
    kdw, kdb = jax.random.split(kdense)
    raw = dict(blocks=blocks, dense_w=linear_w(kdw, H, H),
               dense_b=0.1 * jax.random.normal(kdb, (H,), jnp.float32))

    prep = prepare_params(raw, NH)

    ref = _reference_decoder(X, enc_outputs, enc_valid_lens, raw, NH,
                             training=True)

    # Shipped config: bf16 matmul operands, fp32 accumulation / softmax / LN.
    out_bf16 = jax.block_until_ready(
        transformer_decoder_forward(X, enc_outputs, enc_valid_lens, prep, NH,
                                    training=True,
                                    matmul_dtype=jnp.bfloat16))
    # fp32 path (exact reciprocal) for the tighter correctness check.
    out_f32 = jax.block_until_ready(
        transformer_decoder_forward(X, enc_outputs, enc_valid_lens, prep, NH,
                                    training=True,
                                    matmul_dtype=jnp.float32))

    assert out_f32.shape == (B, T, H) and out_bf16.shape == (B, T, H)
    assert jnp.allclose(out_f32, ref, atol=5e-2, rtol=5e-2), \
        "fp32 kernel mismatch vs reference"
    assert jnp.allclose(out_bf16, ref, atol=1.5e-1, rtol=1.5e-1), \
        "bf16 kernel mismatch vs reference"

    print("KERNEL_OK")
</pallas_src>

<mosaic_0001>
module attributes {stable_mosaic.version = 11 : i64} {
  func.func @_fused_decoder_kernel(%arg0: i32, %arg1: memref<16x32xf32, #tpu.memory_space<vmem>>, %arg2: memref<1x8x8xf32, #tpu.memory_space<vmem>>, %arg3: memref<8x1x12xf32, #tpu.memory_space<vmem>>, %arg4: memref<1x8x12x8xbf16, #tpu.memory_space<vmem>>, %arg5: memref<1x8x12x8xbf16, #tpu.memory_space<vmem>>, %arg6: memref<1x12x32x8xbf16, #tpu.memory_space<vmem>>, %arg7: memref<1x4x8x32xbf16, #tpu.memory_space<vmem>>, %arg8: memref<1x4x32x8xbf16, #tpu.memory_space<vmem>>, %arg9: memref<1x4x8x32xbf16, #tpu.memory_space<vmem>>, %arg10: memref<1x32x64xbf16, #tpu.memory_space<vmem>>, %arg11: memref<1x1x64xf32, #tpu.memory_space<vmem>>, %arg12: memref<1x64x32xbf16, #tpu.memory_space<vmem>>, %arg13: memref<1x1x32xf32, #tpu.memory_space<vmem>>, %arg14: memref<1x3x32xf32, #tpu.memory_space<vmem>>, %arg15: memref<1x3x32xf32, #tpu.memory_space<vmem>>, %arg16: memref<32x32xbf16, #tpu.memory_space<vmem>>, %arg17: memref<1x32xf32, #tpu.memory_space<vmem>>, %arg18: memref<16x32xf32, #tpu.memory_space<vmem>>, %arg19: memref<16x32xf32, #tpu.memory_space<vmem>>) attributes {dimension_semantics = [#tpu.dimension_semantics<arbitrary>], iteration_bounds = array<i64: 2>, scalar_prefetch = 0 : i64, scratch_operands = 1 : i64, tpu.core_type = #tpu.core_type<tc>, window_params = [{pipeline_mode = #tpu.pipeline_mode<synchronous>, transform_indices = @transform_0, window_bounds = array<i64: 16, 32>}, {pipeline_mode = #tpu.pipeline_mode<synchronous>, transform_indices = @transform_1, window_bounds = array<i64: 1, 8, 8>}, {pipeline_mode = #tpu.pipeline_mode<synchronous>, transform_indices = @transform_2, window_bounds = array<i64: 8, 1, 12>}, {transform_indices = @transform_3, window_bounds = array<i64: 1, 8, 12, 8>}, {transform_indices = @transform_4, window_bounds = array<i64: 1, 8, 12, 8>}, {transform_indices = @transform_5, window_bounds = array<i64: 1, 12, 32, 8>}, {transform_indices = @transform_6, window_bounds = array<i64: 1, 4, 8, 32>}, {transform_indices = @transform_7, window_bounds = array<i64: 1, 4, 32, 8>}, {transform_indices = @transform_8, window_bounds = array<i64: 1, 4, 8, 32>}, {transform_indices = @transform_9, window_bounds = array<i64: 1, 32, 64>}, {transform_indices = @transform_10, window_bounds = array<i64: 1, 1, 64>}, {transform_indices = @transform_11, window_bounds = array<i64: 1, 64, 32>}, {transform_indices = @transform_12, window_bounds = array<i64: 1, 1, 32>}, {transform_indices = @transform_13, window_bounds = array<i64: 1, 3, 32>}, {transform_indices = @transform_14, window_bounds = array<i64: 1, 3, 32>}, {pipeline_mode = #tpu.pipeline_mode<synchronous>, transform_indices = @transform_15, window_bounds = array<i64: 32, 32>}, {pipeline_mode = #tpu.pipeline_mode<synchronous>, transform_indices = @transform_16, window_bounds = array<i64: 1, 32>}, {pipeline_mode = #tpu.pipeline_mode<synchronous>, transform_indices = @transform_17, window_bounds = array<i64: 16, 32>}]} {
    %c0_i32 = arith.constant 0 : i32
    %0 = arith.cmpi eq, %arg0, %c0_i32 : i32
    %1 = arith.extui %0 : i1 to i32
    %c0_i32_0 = arith.constant 0 : i32
    %2 = arith.cmpi ne, %1, %c0_i32_0 : i32
    scf.if %2 {
      %c0_96 = arith.constant 0 : index
      %c0_97 = arith.constant 0 : index
      %206 = vector.load %arg1[%c0_96, %c0_97] : memref<16x32xf32, #tpu.memory_space<vmem>>, vector<16x32xf32>
      %c0_98 = arith.constant 0 : index
      %c0_99 = arith.constant 0 : index
      %207 = vector.load %arg19[%c0_98, %c0_99] : memref<16x32xf32, #tpu.memory_space<vmem>>, vector<16x32xf32>
      tpu.vector_store %arg19[%c0_98, %c0_99], %206 {strides = array<i32>} : memref<16x32xf32, #tpu.memory_space<vmem>>, vector<16x32xf32>,
    } else {
    }
    %c0 = arith.constant 0 : index
    %c0_1 = arith.constant 0 : index
    %3 = vector.load %arg19[%c0, %c0_1] : memref<16x32xf32, #tpu.memory_space<vmem>>, vector<16x32xf32>
    %c0_2 = arith.constant 0 : index
    %c0_3 = arith.constant 0 : index
    %c0_4 = arith.constant 0 : index
    %4 = vector.load %arg2[%c0_2, %c0_3, %c0_4] : memref<1x8x8xf32, #tpu.memory_space<vmem>>, vector<1x8x8xf32>
    %cst = arith.constant 0.000000e+00 : f32
    %5 = vector.broadcast %cst : f32 to vector<1x8x8xf32>
    %6 = arith.cmpf one, %4, %5 : vector<1x8x8xf32>
    %c0_5 = arith.constant 0 : index
    %c0_6 = arith.constant 0 : index
    %c0_7 = arith.constant 0 : index
    %7 = vector.load %arg3[%c0_5, %c0_6, %c0_7] : memref<8x1x12xf32, #tpu.memory_space<vmem>>, vector<8x1x12xf32>
    %cst_8 = arith.constant 0.000000e+00 : f32
    %8 = vector.broadcast %cst_8 : f32 to vector<8x1x12xf32>
    %9 = arith.cmpf one, %7, %8 : vector<8x1x12xf32>
    %10 = arith.truncf %3 : vector<16x32xf32> to vector<16x32xbf16>
    %11 = vector.shape_cast %10 : vector<16x32xbf16> to vector<1x16x32xbf16>
    %12 = vector.shape_cast %11 : vector<1x16x32xbf16> to vector<1x16x32xbf16>
    %13 = vector.broadcast %12 : vector<1x16x32xbf16> to vector<12x16x32xbf16>
    %c0_9 = arith.constant 0 : index
    %c0_10 = arith.constant 0 : index
    %c0_11 = arith.constant 0 : index
    %c0_12 = arith.constant 0 : index
    %14 = vector.load %arg6[%c0_9, %c0_10, %c0_11, %c0_12] : memref<1x12x32x8xbf16, #tpu.memory_space<vmem>>, vector<1x12x32x8xbf16>
    %15 = vector.shape_cast %14 : vector<1x12x32x8xbf16> to vector<12x32x8xbf16>
    "tpu.trace_start"() <{level = 10 : i32, message = "gnh,ghd->gnd"}> : () -> ()
    %cst_13 = arith.constant dense<0.000000e+00> : vector<12x16x8xf32>
    %16 = tpu.matmul %13, %15, %cst_13 {dimension_numbers = #tpu.dot_dimension_numbers<[2], [1], [1], [2], [0, 0, 0, 1, 1, 2], [0], [0]>} : vector<12x16x32xbf16>, vector<12x32x8xbf16>, vector<12x16x8xf32> -> vector<12x16x8xf32>
    "tpu.trace_stop"() : () -> ()
    %17 = arith.truncf %16 : vector<12x16x8xf32> to vector<12x16x8xbf16>
    %18 = vector.extract_strided_slice %17 {offsets = [0, 0, 0], sizes = [4, 16, 8], strides = [1, 1, 1]} : vector<12x16x8xbf16> to vector<4x16x8xbf16>
    %19 = vector.shape_cast %18 : vector<4x16x8xbf16> to vector<8x8x8xbf16>
    %20 = vector.extract_strided_slice %17 {offsets = [4, 0, 0], sizes = [4, 16, 8], strides = [1, 1, 1]} : vector<12x16x8xbf16> to vector<4x16x8xbf16>
    %21 = vector.shape_cast %20 : vector<4x16x8xbf16> to vector<8x8x8xbf16>
    %22 = vector.extract_strided_slice %17 {offsets = [8, 0, 0], sizes = [4, 16, 8], strides = [1, 1, 1]} : vector<12x16x8xbf16> to vector<4x16x8xbf16>
    %23 = vector.shape_cast %22 : vector<4x16x8xbf16> to vector<8x8x8xbf16>
    "tpu.trace_start"() <{level = 10 : i32, message = "gqd,gkd->gqk"}> : () -> ()
    %cst_14 = arith.constant dense<0.000000e+00> : vector<8x8x8xf32>
    %24 = tpu.matmul %19, %21, %cst_14 {dimension_numbers = #tpu.dot_dimension_numbers<[2], [2], [1], [1], [0, 0, 0, 1, 1, 1], [0], [0]>} : vector<8x8x8xbf16>, vector<8x8x8xbf16>, vector<8x8x8xf32> -> vector<8x8x8xf32>
    %cst_15 = arith.constant -1.000000e+06 : f32
    "tpu.trace_stop"() : () -> ()
    %25 = vector.shape_cast %6 : vector<1x8x8xi1> to vector<1x8x8xi1>
    %26 = vector.broadcast %25 : vector<1x8x8xi1> to vector<8x8x8xi1>
    %27 = vector.broadcast %cst_15 : f32 to vector<8x8x8xf32>
    %28 = arith.select %26, %24, %27 : vector<8x8x8xi1>, vector<8x8x8xf32>
    %cst_16 = arith.constant dense<0xFF800000> : vector<8x8xf32>
    %29 = vector.multi_reduction <maximumf>, %28, %cst_16 [2] : vector<8x8x8xf32> to vector<8x8xf32>
    %30 = vector.shape_cast %29 : vector<8x8xf32> to vector<8x8x1xf32>
    %31 = vector.broadcast %30 : vector<8x8x1xf32> to vector<8x8x8xf32>
    %32 = arith.subf %28, %31 : vector<8x8x8xf32>
    %33 = math.exp %32 : vector<8x8x8xf32>
    %cst_17 = arith.constant dense<0.000000e+00> : vector<8x8xf32>
    %34 = vector.multi_reduction <add>, %33, %cst_17 [2] : vector<8x8x8xf32> to vector<8x8xf32>
    %35 = vector.shape_cast %34 : vector<8x8xf32> to vector<8x8x1xf32>
    %36 = arith.truncf %33 : vector<8x8x8xf32> to vector<8x8x8xbf16>
    "tpu.trace_start"() <{level = 10 : i32, message = "gqk,gkd->gqd"}> : () -> ()
    %cst_18 = arith.constant dense<0.000000e+00> : vector<8x8x8xf32>
    %37 = tpu.matmul %36, %23, %cst_18 {dimension_numbers = #tpu.dot_dimension_numbers<[2], [1], [1], [2], [0, 0, 0, 1, 1, 2], [0], [0]>} : vector<8x8x8xbf16>, vector<8x8x8xbf16>, vector<8x8x8xf32> -> vector<8x8x8xf32>
    "tpu.trace_stop"() : () -> ()
    %38 = tpu.reciprocal %35 {approx = true} : vector<8x8x1xf32> -> vector<8x8x1xf32>
    %39 = vector.broadcast %38 : vector<8x8x1xf32> to vector<8x8x8xf32>
    %40 = arith.mulf %37, %39 : vector<8x8x8xf32>
    %41 = vector.shape_cast %40 : vector<8x8x8xf32> to vector<4x16x8xf32>
    %42 = arith.truncf %41 : vector<4x16x8xf32> to vector<4x16x8xbf16>
    %c0_19 = arith.constant 0 : index
    %c0_20 = arith.constant 0 : index
    %c0_21 = arith.constant 0 : index
    %c0_22 = arith.constant 0 : index
    %43 = vector.load %arg7[%c0_19, %c0_20, %c0_21, %c0_22] : memref<1x4x8x32xbf16, #tpu.memory_space<vmem>>, vector<1x4x8x32xbf16>
    %44 = vector.shape_cast %43 : vector<1x4x8x32xbf16> to vector<4x8x32xbf16>
    "tpu.trace_start"() <{level = 10 : i32, message = "hnd,hdo->hno"}> : () -> ()
    %cst_23 = arith.constant dense<0.000000e+00> : vector<4x16x32xf32>
    %45 = tpu.matmul %42, %44, %cst_23 {dimension_numbers = #tpu.dot_dimension_numbers<[2], [1], [1], [2], [0, 0, 0, 1, 1, 2], [0], [0]>} : vector<4x16x8xbf16>, vector<4x8x32xbf16>, vector<4x16x32xf32> -> vector<4x16x32xf32>
    "tpu.trace_stop"() : () -> ()
    %46 = vector.extract_strided_slice %45 {offsets = [0, 0, 0], sizes = [1, 16, 32], strides = [1, 1, 1]} : vector<4x16x32xf32> to vector<1x16x32xf32>
    %47 = vector.shape_cast %46 : vector<1x16x32xf32> to vector<16x32xf32>
    %48 = vector.extract_strided_slice %45 {offsets = [1, 0, 0], sizes = [1, 16, 32], strides = [1, 1, 1]} : vector<4x16x32xf32> to vector<1x16x32xf32>
    %49 = vector.shape_cast %48 : vector<1x16x32xf32> to vector<16x32xf32>
    %50 = arith.addf %47, %49 : vector<16x32xf32>
    %51 = vector.extract_strided_slice %45 {offsets = [2, 0, 0], sizes = [1, 16, 32], strides = [1, 1, 1]} : vector<4x16x32xf32> to vector<1x16x32xf32>
    %52 = vector.shape_cast %51 : vector<1x16x32xf32> to vector<16x32xf32>
    %53 = arith.addf %50, %52 : vector<16x32xf32>
    %54 = vector.extract_strided_slice %45 {offsets = [3, 0, 0], sizes = [1, 16, 32], strides = [1, 1, 1]} : vector<4x16x32xf32> to vector<1x16x32xf32>
    %55 = vector.shape_cast %54 : vector<1x16x32xf32> to vector<16x32xf32>
    %56 = arith.addf %53, %55 : vector<16x32xf32>
    %57 = arith.addf %3, %56 : vector<16x32xf32>
    %c0_24 = arith.constant 0 : index
    %c0_25 = arith.constant 0 : index
    %c0_26 = arith.constant 0 : index
    %58 = vector.load %arg14[%c0_24, %c0_25, %c0_26] : memref<1x3x32xf32, #tpu.memory_space<vmem>>, vector<1x1x32xf32>
    %59 = vector.shape_cast %58 : vector<1x1x32xf32> to vector<1x32xf32>
    %c0_27 = arith.constant 0 : index
    %c0_28 = arith.constant 0 : index
    %c0_29 = arith.constant 0 : index
    %60 = vector.load %arg15[%c0_27, %c0_28, %c0_29] : memref<1x3x32xf32, #tpu.memory_space<vmem>>, vector<1x1x32xf32>
    %61 = vector.shape_cast %60 : vector<1x1x32xf32> to vector<1x32xf32>
    %cst_30 = arith.constant dense<0.000000e+00> : vector<16xf32>
    %62 = vector.multi_reduction <add>, %57, %cst_30 [1] : vector<16x32xf32> to vector<16xf32>
    %63 = vector.shape_cast %62 : vector<16xf32> to vector<16x1xf32>
    %cst_31 = arith.constant 3.200000e+01 : f32
    %64 = vector.broadcast %cst_31 : f32 to vector<16x1xf32>
    %65 = arith.divf %63, %64 : vector<16x1xf32>
    %66 = vector.broadcast %65 : vector<16x1xf32> to vector<16x32xf32>
    %67 = arith.subf %57, %66 : vector<16x32xf32>
    %68 = arith.mulf %67, %67 : vector<16x32xf32>
    %cst_32 = arith.constant dense<0.000000e+00> : vector<16xf32>
    %69 = vector.multi_reduction <add>, %68, %cst_32 [1] : vector<16x32xf32> to vector<16xf32>
    %70 = vector.shape_cast %69 : vector<16xf32> to vector<16x1xf32>
    %cst_33 = arith.constant 3.200000e+01 : f32
    %71 = vector.broadcast %cst_33 : f32 to vector<16x1xf32>
    %72 = arith.divf %70, %71 : vector<16x1xf32>
    %73 = vector.broadcast %65 : vector<16x1xf32> to vector<16x32xf32>
    %74 = arith.subf %57, %73 : vector<16x32xf32>
    %cst_34 = arith.constant 9.99999974E-6 : f32
    %75 = vector.broadcast %cst_34 : f32 to vector<16x1xf32>
    %76 = arith.addf %72, %75 : vector<16x1xf32>
    %77 = math.rsqrt %76 : vector<16x1xf32>
    %78 = vector.broadcast %77 : vector<16x1xf32> to vector<16x32xf32>
    %79 = arith.mulf %74, %78 : vector<16x32xf32>
    %80 = vector.broadcast %59 : vector<1x32xf32> to vector<16x32xf32>
    %81 = arith.mulf %79, %80 : vector<16x32xf32>
    %82 = vector.broadcast %61 : vector<1x32xf32> to vector<16x32xf32>
    %83 = arith.addf %81, %82 : vector<16x32xf32>
    %84 = arith.truncf %83 : vector<16x32xf32> to vector<16x32xbf16>
    %85 = vector.shape_cast %84 : vector<16x32xbf16> to vector<1x16x32xbf16>
    %86 = vector.shape_cast %85 : vector<1x16x32xbf16> to vector<1x16x32xbf16>
    %87 = vector.broadcast %86 : vector<1x16x32xbf16> to vector<4x16x32xbf16>
    %c0_35 = arith.constant 0 : index
    %c0_36 = arith.constant 0 : index
    %c0_37 = arith.constant 0 : index
    %c0_38 = arith.constant 0 : index
    %88 = vector.load %arg8[%c0_35, %c0_36, %c0_37, %c0_38] : memref<1x4x32x8xbf16, #tpu.memory_space<vmem>>, vector<1x4x32x8xbf16>
    %89 = vector.shape_cast %88 : vector<1x4x32x8xbf16> to vector<4x32x8xbf16>
    "tpu.trace_start"() <{level = 10 : i32, message = "gnh,ghd->gnd"}> : () -> ()
    %cst_39 = arith.constant dense<0.000000e+00> : vector<4x16x8xf32>
    %90 = tpu.matmul %87, %89, %cst_39 {dimension_numbers = #tpu.dot_dimension_numbers<[2], [1], [1], [2], [0, 0, 0, 1, 1, 2], [0], [0]>} : vector<4x16x32xbf16>, vector<4x32x8xbf16>, vector<4x16x8xf32> -> vector<4x16x8xf32>
    "tpu.trace_stop"() : () -> ()
    %91 = arith.truncf %90 : vector<4x16x8xf32> to vector<4x16x8xbf16>
    %92 = vector.shape_cast %91 : vector<4x16x8xbf16> to vector<8x8x8xbf16>
    %c0_40 = arith.constant 0 : index
    %c0_41 = arith.constant 0 : index
    %c0_42 = arith.constant 0 : index
    %c0_43 = arith.constant 0 : index
    %93 = vector.load %arg4[%c0_40, %c0_41, %c0_42, %c0_43] : memref<1x8x12x8xbf16, #tpu.memory_space<vmem>>, vector<1x8x12x8xbf16>
    %94 = vector.shape_cast %93 : vector<1x8x12x8xbf16> to vector<8x12x8xbf16>
    %c0_44 = arith.constant 0 : index
    %c0_45 = arith.constant 0 : index
    %c0_46 = arith.constant 0 : index
    %c0_47 = arith.constant 0 : index
    %95 = vector.load %arg5[%c0_44, %c0_45, %c0_46, %c0_47] : memref<1x8x12x8xbf16, #tpu.memory_space<vmem>>, vector<1x8x12x8xbf16>
    %96 = vector.shape_cast %95 : vector<1x8x12x8xbf16> to vector<8x12x8xbf16>
    "tpu.trace_start"() <{level = 10 : i32, message = "gqd,gkd->gqk"}> : () -> ()
    %cst_48 = arith.constant dense<0.000000e+00> : vector<8x8x12xf32>
    %97 = tpu.matmul %92, %94, %cst_48 {dimension_numbers = #tpu.dot_dimension_numbers<[2], [2], [1], [1], [0, 0, 0, 1, 1, 1], [0], [0]>} : vector<8x8x8xbf16>, vector<8x12x8xbf16>, vector<8x8x12xf32> -> vector<8x8x12xf32>
    %cst_49 = arith.constant -1.000000e+06 : f32
    "tpu.trace_stop"() : () -> ()
    %98 = vector.shape_cast %9 : vector<8x1x12xi1> to vector<8x1x12xi1>
    %99 = vector.broadcast %98 : vector<8x1x12xi1> to vector<8x8x12xi1>
    %100 = vector.broadcast %cst_49 : f32 to vector<8x8x12xf32>
    %101 = arith.select %99, %97, %100 : vector<8x8x12xi1>, vector<8x8x12xf32>
    %cst_50 = arith.constant dense<0xFF800000> : vector<8x8xf32>
    %102 = vector.multi_reduction <maximumf>, %101, %cst_50 [2] : vector<8x8x12xf32> to vector<8x8xf32>
    %103 = vector.shape_cast %102 : vector<8x8xf32> to vector<8x8x1xf32>
    %104 = vector.broadcast %103 : vector<8x8x1xf32> to vector<8x8x12xf32>
    %105 = arith.subf %101, %104 : vector<8x8x12xf32>
    %106 = math.exp %105 : vector<8x8x12xf32>
    %cst_51 = arith.constant dense<0.000000e+00> : vector<8x8xf32>
    %107 = vector.multi_reduction <add>, %106, %cst_51 [2] : vector<8x8x12xf32> to vector<8x8xf32>
    %108 = vector.shape_cast %107 : vector<8x8xf32> to vector<8x8x1xf32>
    %109 = arith.truncf %106 : vector<8x8x12xf32> to vector<8x8x12xbf16>
    "tpu.trace_start"() <{level = 10 : i32, message = "gqk,gkd->gqd"}> : () -> ()
    %cst_52 = arith.constant dense<0.000000e+00> : vector<8x8x8xf32>
    %110 = tpu.matmul %109, %96, %cst_52 {dimension_numbers = #tpu.dot_dimension_numbers<[2], [1], [1], [2], [0, 0, 0, 1, 1, 2], [0], [0]>} : vector<8x8x12xbf16>, vector<8x12x8xbf16>, vector<8x8x8xf32> -> vector<8x8x8xf32>
    "tpu.trace_stop"() : () -> ()
    %111 = tpu.reciprocal %108 {approx = true} : vector<8x8x1xf32> -> vector<8x8x1xf32>
    %112 = vector.broadcast %111 : vector<8x8x1xf32> to vector<8x8x8xf32>
    %113 = arith.mulf %110, %112 : vector<8x8x8xf32>
    %114 = vector.shape_cast %113 : vector<8x8x8xf32> to vector<4x16x8xf32>
    %115 = arith.truncf %114 : vector<4x16x8xf32> to vector<4x16x8xbf16>
    %c0_53 = arith.constant 0 : index
    %c0_54 = arith.constant 0 : index
    %c0_55 = arith.constant 0 : index
    %c0_56 = arith.constant 0 : index
    %116 = vector.load %arg9[%c0_53, %c0_54, %c0_55, %c0_56] : memref<1x4x8x32xbf16, #tpu.memory_space<vmem>>, vector<1x4x8x32xbf16>
    %117 = vector.shape_cast %116 : vector<1x4x8x32xbf16> to vector<4x8x32xbf16>
    "tpu.trace_start"() <{level = 10 : i32, message = "hnd,hdo->hno"}> : () -> ()
    %cst_57 = arith.constant dense<0.000000e+00> : vector<4x16x32xf32>
    %118 = tpu.matmul %115, %117, %cst_57 {dimension_numbers = #tpu.dot_dimension_numbers<[2], [1], [1], [2], [0, 0, 0, 1, 1, 2], [0], [0]>} : vector<4x16x8xbf16>, vector<4x8x32xbf16>, vector<4x16x32xf32> -> vector<4x16x32xf32>
    "tpu.trace_stop"() : () -> ()
    %119 = vector.extract_strided_slice %118 {offsets = [0, 0, 0], sizes = [1, 16, 32], strides = [1, 1, 1]} : vector<4x16x32xf32> to vector<1x16x32xf32>
    %120 = vector.shape_cast %119 : vector<1x16x32xf32> to vector<16x32xf32>
    %121 = vector.extract_strided_slice %118 {offsets = [1, 0, 0], sizes = [1, 16, 32], strides = [1, 1, 1]} : vector<4x16x32xf32> to vector<1x16x32xf32>
    %122 = vector.shape_cast %121 : vector<1x16x32xf32> to vector<16x32xf32>
    %123 = arith.addf %120, %122 : vector<16x32xf32>
    %124 = vector.extract_strided_slice %118 {offsets = [2, 0, 0], sizes = [1, 16, 32], strides = [1, 1, 1]} : vector<4x16x32xf32> to vector<1x16x32xf32>
    %125 = vector.shape_cast %124 : vector<1x16x32xf32> to vector<16x32xf32>
    %126 = arith.addf %123, %125 : vector<16x32xf32>
    %127 = vector.extract_strided_slice %118 {offsets = [3, 0, 0], sizes = [1, 16, 32], strides = [1, 1, 1]} : vector<4x16x32xf32> to vector<1x16x32xf32>
    %128 = vector.shape_cast %127 : vector<1x16x32xf32> to vector<16x32xf32>
    %129 = arith.addf %126, %128 : vector<16x32xf32>
    %130 = arith.addf %83, %129 : vector<16x32xf32>
    %c0_58 = arith.constant 0 : index
    %c1 = arith.constant 1 : index
    %c0_59 = arith.constant 0 : index
    %131 = vector.load %arg14[%c0_58, %c1, %c0_59] : memref<1x3x32xf32, #tpu.memory_space<vmem>>, vector<1x1x32xf32>
    %132 = vector.shape_cast %131 : vector<1x1x32xf32> to vector<1x32xf32>
    %c0_60 = arith.constant 0 : index
    %c1_61 = arith.constant 1 : index
    %c0_62 = arith.constant 0 : index
    %133 = vector.load %arg15[%c0_60, %c1_61, %c0_62] : memref<1x3x32xf32, #tpu.memory_space<vmem>>, vector<1x1x32xf32>
    %134 = vector.shape_cast %133 : vector<1x1x32xf32> to vector<1x32xf32>
    %cst_63 = arith.constant dense<0.000000e+00> : vector<16xf32>
    %135 = vector.multi_reduction <add>, %130, %cst_63 [1] : vector<16x32xf32> to vector<16xf32>
    %136 = vector.shape_cast %135 : vector<16xf32> to vector<16x1xf32>
    %cst_64 = arith.constant 3.200000e+01 : f32
    %137 = vector.broadcast %cst_64 : f32 to vector<16x1xf32>
    %138 = arith.divf %136, %137 : vector<16x1xf32>
    %139 = vector.broadcast %138 : vector<16x1xf32> to vector<16x32xf32>
    %140 = arith.subf %130, %139 : vector<16x32xf32>
    %141 = arith.mulf %140, %140 : vector<16x32xf32>
    %cst_65 = arith.constant dense<0.000000e+00> : vector<16xf32>
    %142 = vector.multi_reduction <add>, %141, %cst_65 [1] : vector<16x32xf32> to vector<16xf32>
    %143 = vector.shape_cast %142 : vector<16xf32> to vector<16x1xf32>
    %cst_66 = arith.constant 3.200000e+01 : f32
    %144 = vector.broadcast %cst_66 : f32 to vector<16x1xf32>
    %145 = arith.divf %143, %144 : vector<16x1xf32>
    %146 = vector.broadcast %138 : vector<16x1xf32> to vector<16x32xf32>
    %147 = arith.subf %130, %146 : vector<16x32xf32>
    %cst_67 = arith.constant 9.99999974E-6 : f32
    %148 = vector.broadcast %cst_67 : f32 to vector<16x1xf32>
    %149 = arith.addf %145, %148 : vector<16x1xf32>
    %150 = math.rsqrt %149 : vector<16x1xf32>
    %151 = vector.broadcast %150 : vector<16x1xf32> to vector<16x32xf32>
    %152 = arith.mulf %147, %151 : vector<16x32xf32>
    %153 = vector.broadcast %132 : vector<1x32xf32> to vector<16x32xf32>
    %154 = arith.mulf %152, %153 : vector<16x32xf32>
    %155 = vector.broadcast %134 : vector<1x32xf32> to vector<16x32xf32>
    %156 = arith.addf %154, %155 : vector<16x32xf32>
    %157 = arith.truncf %156 : vector<16x32xf32> to vector<16x32xbf16>
    %c0_68 = arith.constant 0 : index
    %c0_69 = arith.constant 0 : index
    %c0_70 = arith.constant 0 : index
    %158 = vector.load %arg10[%c0_68, %c0_69, %c0_70] : memref<1x32x64xbf16, #tpu.memory_space<vmem>>, vector<1x32x64xbf16>
    %159 = vector.shape_cast %158 : vector<1x32x64xbf16> to vector<32x64xbf16>
    %cst_71 = arith.constant dense<0.000000e+00> : vector<16x64xf32>
    %160 = tpu.matmul %157, %159, %cst_71 {dimension_numbers = #tpu.dot_dimension_numbers<[1], [0], [0], [1], [0, 0, 1, 1], [], []>} : vector<16x32xbf16>, vector<32x64xbf16>, vector<16x64xf32> -> vector<16x64xf32>
    %c0_72 = arith.constant 0 : index
    %c0_73 = arith.constant 0 : index
    %c0_74 = arith.constant 0 : index
    %161 = vector.load %arg11[%c0_72, %c0_73, %c0_74] : memref<1x1x64xf32, #tpu.memory_space<vmem>>, vector<1x1x64xf32>
    %162 = vector.shape_cast %161 : vector<1x1x64xf32> to vector<1x64xf32>
    %163 = vector.broadcast %162 : vector<1x64xf32> to vector<16x64xf32>
    %164 = arith.addf %160, %163 : vector<16x64xf32>
    %cst_75 = arith.constant 0.000000e+00 : f32
    %165 = vector.broadcast %cst_75 : f32 to vector<16x64xf32>
    %166 = arith.maximumf %164, %165 : vector<16x64xf32>
    %167 = arith.truncf %166 : vector<16x64xf32> to vector<16x64xbf16>
    %c0_76 = arith.constant 0 : index
    %c0_77 = arith.constant 0 : index
    %c0_78 = arith.constant 0 : index
    %168 = vector.load %arg12[%c0_76, %c0_77, %c0_78] : memref<1x64x32xbf16, #tpu.memory_space<vmem>>, vector<1x64x32xbf16>
    %169 = vector.shape_cast %168 : vector<1x64x32xbf16> to vector<64x32xbf16>
    %cst_79 = arith.constant dense<0.000000e+00> : vector<16x32xf32>
    %170 = tpu.matmul %167, %169, %cst_79 {dimension_numbers = #tpu.dot_dimension_numbers<[1], [0], [0], [1], [0, 0, 1, 1], [], []>} : vector<16x64xbf16>, vector<64x32xbf16>, vector<16x32xf32> -> vector<16x32xf32>
    %c0_80 = arith.constant 0 : index
    %c0_81 = arith.constant 0 : index
    %c0_82 = arith.constant 0 : index
    %171 = vector.load %arg13[%c0_80, %c0_81, %c0_82] : memref<1x1x32xf32, #tpu.memory_space<vmem>>, vector<1x1x32xf32>
    %172 = vector.shape_cast %171 : vector<1x1x32xf32> to vector<1x32xf32>
    %173 = vector.broadcast %172 : vector<1x32xf32> to vector<16x32xf32>
    %174 = arith.addf %170, %173 : vector<16x32xf32>
    %175 = arith.addf %156, %174 : vector<16x32xf32>
    %c0_83 = arith.constant 0 : index
    %c2 = arith.constant 2 : index
    %c0_84 = arith.constant 0 : index
    %176 = vector.load %arg14[%c0_83, %c2, %c0_84] : memref<1x3x32xf32, #tpu.memory_space<vmem>>, vector<1x1x32xf32>
    %177 = vector.shape_cast %176 : vector<1x1x32xf32> to vector<1x32xf32>
    %c0_85 = arith.constant 0 : index
    %c2_86 = arith.constant 2 : index
    %c0_87 = arith.constant 0 : index
    %178 = vector.load %arg15[%c0_85, %c2_86, %c0_87] : memref<1x3x32xf32, #tpu.memory_space<vmem>>, vector<1x1x32xf32>
    %179 = vector.shape_cast %178 : vector<1x1x32xf32> to vector<1x32xf32>
    %cst_88 = arith.constant dense<0.000000e+00> : vector<16xf32>
    %180 = vector.multi_reduction <add>, %175, %cst_88 [1] : vector<16x32xf32> to vector<16xf32>
    %181 = vector.shape_cast %180 : vector<16xf32> to vector<16x1xf32>
    %cst_89 = arith.constant 3.200000e+01 : f32
    %182 = vector.broadcast %cst_89 : f32 to vector<16x1xf32>
    %183 = arith.divf %181, %182 : vector<16x1xf32>
    %184 = vector.broadcast %183 : vector<16x1xf32> to vector<16x32xf32>
    %185 = arith.subf %175, %184 : vector<16x32xf32>
    %186 = arith.mulf %185, %185 : vector<16x32xf32>
    %cst_90 = arith.constant dense<0.000000e+00> : vector<16xf32>
    %187 = vector.multi_reduction <add>, %186, %cst_90 [1] : vector<16x32xf32> to vector<16xf32>
    %188 = vector.shape_cast %187 : vector<16xf32> to vector<16x1xf32>
    %cst_91 = arith.constant 3.200000e+01 : f32
    %189 = vector.broadcast %cst_91 : f32 to vector<16x1xf32>
    %190 = arith.divf %188, %189 : vector<16x1xf32>
    %191 = vector.broadcast %183 : vector<16x1xf32> to vector<16x32xf32>
    %192 = arith.subf %175, %191 : vector<16x32xf32>
    %cst_92 = arith.constant 9.99999974E-6 : f32
    %193 = vector.broadcast %cst_92 : f32 to vector<16x1xf32>
    %194 = arith.addf %190, %193 : vector<16x1xf32>
    %195 = math.rsqrt %194 : vector<16x1xf32>
    %196 = vector.broadcast %195 : vector<16x1xf32> to vector<16x32xf32>
    %197 = arith.mulf %192, %196 : vector<16x32xf32>
    %198 = vector.broadcast %177 : vector<1x32xf32> to vector<16x32xf32>
    %199 = arith.mulf %197, %198 : vector<16x32xf32>
    %200 = vector.broadcast %179 : vector<1x32xf32> to vector<16x32xf32>
    %201 = arith.addf %199, %200 : vector<16x32xf32>
    %c0_93 = arith.constant 0 : index
    %c0_94 = arith.constant 0 : index
    %202 = vector.load %arg19[%c0_93, %c0_94] : memref<16x32xf32, #tpu.memory_space<vmem>>, vector<16x32xf32>
    tpu.vector_store %arg19[%c0_93, %c0_94], %201 {strides = array<i32>} : memref<16x32xf32, #tpu.memory_space<vmem>>, vector<16x32xf32>,
    %c1_i32 = arith.constant 1 : i32
    %203 = arith.cmpi eq, %arg0, %c1_i32 : i32
    %204 = arith.extui %203 : i1 to i32
    %c0_i32_95 = arith.constant 0 : i32
    %205 = arith.cmpi ne, %204, %c0_i32_95 : i32
    scf.if %205 {
      %206 = arith.truncf %201 : vector<16x32xf32> to vector<16x32xbf16>
      %c0_96 = arith.constant 0 : index
      %c0_97 = arith.constant 0 : index
      %207 = vector.load %arg16[%c0_96, %c0_97] : memref<32x32xbf16, #tpu.memory_space<vmem>>, vector<32x32xbf16>
      %cst_98 = arith.constant dense<0.000000e+00> : vector<16x32xf32>
      %208 = tpu.matmul %206, %207, %cst_98 {dimension_numbers = #tpu.dot_dimension_numbers<[1], [0], [0], [1], [0, 0, 1, 1], [], []>} : vector<16x32xbf16>, vector<32x32xbf16>, vector<16x32xf32> -> vector<16x32xf32>
      %c0_99 = arith.constant 0 : index
      %c0_100 = arith.constant 0 : index
      %209 = vector.load %arg17[%c0_99, %c0_100] : memref<1x32xf32, #tpu.memory_space<vmem>>, vector<1x32xf32>
      %210 = vector.broadcast %209 : vector<1x32xf32> to vector<16x32xf32>
      %211 = arith.addf %208, %210 : vector<16x32xf32>
      %c0_101 = arith.constant 0 : index
      %c0_102 = arith.constant 0 : index
      %212 = vector.load %arg18[%c0_101, %c0_102] : memref<16x32xf32, #tpu.memory_space<vmem>>, vector<16x32xf32>
      tpu.vector_store %arg18[%c0_101, %c0_102], %211 {strides = array<i32>} : memref<16x32xf32, #tpu.memory_space<vmem>>, vector<16x32xf32>,
    } else {
    }
    return
  }
  func.func @transform_0(%arg0: i32) -> (i32, i32) {
    %c0_i32 = arith.constant 0 : i32
    %c0_i32_0 = arith.constant 0 : i32
    %c0_i32_1 = arith.constant 0 : i32
    return %c0_i32, %c0_i32_0 : i32, i32
  }
  func.func @transform_1(%arg0: i32) -> (i32, i32, i32) {
    %c0_i32 = arith.constant 0 : i32
    %c0_i32_0 = arith.constant 0 : i32
    %c0_i32_1 = arith.constant 0 : i32
    %c0_i32_2 = arith.constant 0 : i32
    return %c0_i32, %c0_i32_0, %c0_i32_1 : i32, i32, i32
  }
  func.func @transform_2(%arg0: i32) -> (i32, i32, i32) {
    %c0_i32 = arith.constant 0 : i32
    %c0_i32_0 = arith.constant 0 : i32
    %c0_i32_1 = arith.constant 0 : i32
    %c0_i32_2 = arith.constant 0 : i32
    return %c0_i32, %c0_i32_0, %c0_i32_1 : i32, i32, i32
  }
  func.func @transform_3(%arg0: i32) -> (i32, i32, i32, i32) {
    %c0_i32 = arith.constant 0 : i32
    %c0_i32_0 = arith.constant 0 : i32
    %c0_i32_1 = arith.constant 0 : i32
    %c0_i32_2 = arith.constant 0 : i32
    return %arg0, %c0_i32, %c0_i32_0, %c0_i32_1 : i32, i32, i32, i32
  }
  func.func @transform_4(%arg0: i32) -> (i32, i32, i32, i32) {
    %c0_i32 = arith.constant 0 : i32
    %c0_i32_0 = arith.constant 0 : i32
    %c0_i32_1 = arith.constant 0 : i32
    %c0_i32_2 = arith.constant 0 : i32
    return %arg0, %c0_i32, %c0_i32_0, %c0_i32_1 : i32, i32, i32, i32
  }
  func.func @transform_5(%arg0: i32) -> (i32, i32, i32, i32) {
    %c0_i32 = arith.constant 0 : i32
    %c0_i32_0 = arith.constant 0 : i32
    %c0_i32_1 = arith.constant 0 : i32
    %c0_i32_2 = arith.constant 0 : i32
    return %arg0, %c0_i32, %c0_i32_0, %c0_i32_1 : i32, i32, i32, i32
  }
  func.func @transform_6(%arg0: i32) -> (i32, i32, i32, i32) {
    %c0_i32 = arith.constant 0 : i32
    %c0_i32_0 = arith.constant 0 : i32
    %c0_i32_1 = arith.constant 0 : i32
    %c0_i32_2 = arith.constant 0 : i32
    return %arg0, %c0_i32, %c0_i32_0, %c0_i32_1 : i32, i32, i32, i32
  }
  func.func @transform_7(%arg0: i32) -> (i32, i32, i32, i32) {
    %c0_i32 = arith.constant 0 : i32
    %c0_i32_0 = arith.constant 0 : i32
    %c0_i32_1 = arith.constant 0 : i32
    %c0_i32_2 = arith.constant 0 : i32
    return %arg0, %c0_i32, %c0_i32_0, %c0_i32_1 : i32, i32, i32, i32
  }
  func.func @transform_8(%arg0: i32) -> (i32, i32, i32, i32) {
    %c0_i32 = arith.constant 0 : i32
    %c0_i32_0 = arith.constant 0 : i32
    %c0_i32_1 = arith.constant 0 : i32
    %c0_i32_2 = arith.constant 0 : i32
    return %arg0, %c0_i32, %c0_i32_0, %c0_i32_1 : i32, i32, i32, i32
  }
  func.func @transform_9(%arg0: i32) -> (i32, i32, i32) {
    %c0_i32 = arith.constant 0 : i32
    %c0_i32_0 = arith.constant 0 : i32
    %c0_i32_1 = arith.constant 0 : i32
    return %arg0, %c0_i32, %c0_i32_0 : i32, i32, i32
  }
  func.func @transform_10(%arg0: i32) -> (i32, i32, i32) {
    %c0_i32 = arith.constant 0 : i32
    %c0_i32_0 = arith.constant 0 : i32
    %c0_i32_1 = arith.constant 0 : i32
    return %arg0, %c0_i32, %c0_i32_0 : i32, i32, i32
  }
  func.func @transform_11(%arg0: i32) -> (i32, i32, i32) {
    %c0_i32 = arith.constant 0 : i32
    %c0_i32_0 = arith.constant 0 : i32
    %c0_i32_1 = arith.constant 0 : i32
    return %arg0, %c0_i32, %c0_i32_0 : i32, i32, i32
  }
  func.func @transform_12(%arg0: i32) -> (i32, i32, i32) {
    %c0_i32 = arith.constant 0 : i32
    %c0_i32_0 = arith.constant 0 : i32
    %c0_i32_1 = arith.constant 0 : i32
    return %arg0, %c0_i32, %c0_i32_0 : i32, i32, i32
  }
  func.func @transform_13(%arg0: i32) -> (i32, i32, i32) {
    %c0_i32 = arith.constant 0 : i32
    %c0_i32_0 = arith.constant 0 : i32
    %c0_i32_1 = arith.constant 0 : i32
    return %arg0, %c0_i32, %c0_i32_0 : i32, i32, i32
  }
  func.func @transform_14(%arg0: i32) -> (i32, i32, i32) {
    %c0_i32 = arith.constant 0 : i32
    %c0_i32_0 = arith.constant 0 : i32
    %c0_i32_1 = arith.constant 0 : i32
    return %arg0, %c0_i32, %c0_i32_0 : i32, i32, i32
  }
  func.func @transform_15(%arg0: i32) -> (i32, i32) {
    %c0_i32 = arith.constant 0 : i32
    %c0_i32_0 = arith.constant 0 : i32
    %c0_i32_1 = arith.constant 0 : i32
    return %c0_i32, %c0_i32_0 : i32, i32
  }
  func.func @transform_16(%arg0: i32) -> (i32, i32) {
    %c0_i32 = arith.constant 0 : i32
    %c0_i32_0 = arith.constant 0 : i32
    %c0_i32_1 = arith.constant 0 : i32
    return %c0_i32, %c0_i32_0 : i32, i32
  }
  func.func @transform_17(%arg0: i32) -> (i32, i32) {
    %c0_i32 = arith.constant 0 : i32
    %c0_i32_0 = arith.constant 0 : i32
    %c0_i32_1 = arith.constant 0 : i32
    return %c0_i32, %c0_i32_0 : i32, i32
  }
}

</mosaic_0001>

<llo_original>
// kernel: tpu_custom_call.1
$region0: #{tpu_custom_call.1}
  #allocation0 [shape = 'u32[]', space=smem, size = 0x4, offset = 0x4, fixed_abs, tag = 'smem constant byte address 0x4 - core index']
  #allocation1 [shape = 'u32[144,128]{1,0:T(1,128)}', space=vmem, size = 0x12000, scoped, tag = 'internal scratch']
  #allocation2 [shape = 'f32[16,32]{1,0:T(8,128)}', space=vmem, size = 0x2000, scoped, tag = 'scratch operand']
  %s0 = inlined_call_operand.vmem [shape: f32[16,32], index: 0, kind: input, shape index: {}]
  %s1 = inlined_call_operand.vmem [shape: f32[1,8,8], index: 1, kind: input, shape index: {}]
  %s2 = inlined_call_operand.vmem [shape: f32[8,1,12], index: 2, kind: input, shape index: {}]
  %s3 = inlined_call_operand.vmem [shape: bf16[2,8,12,8], index: 3, kind: input, shape index: {}]
  %s4 = inlined_call_operand.vmem [shape: bf16[2,8,12,8], index: 4, kind: input, shape index: {}]
  %s5 = inlined_call_operand.vmem [shape: bf16[2,12,32,8], index: 5, kind: input, shape index: {}]
  %s6 = inlined_call_operand.vmem [shape: bf16[2,4,8,32], index: 6, kind: input, shape index: {}]
  %s7 = inlined_call_operand.vmem [shape: bf16[2,4,32,8], index: 7, kind: input, shape index: {}]
  %s8 = inlined_call_operand.vmem [shape: bf16[2,4,8,32], index: 8, kind: input, shape index: {}]
  %s9 = inlined_call_operand.vmem [shape: bf16[2,32,64], index: 9, kind: input, shape index: {}]
  %s10 = inlined_call_operand.vmem [shape: f32[2,1,64], index: 10, kind: input, shape index: {}]
  %s11 = inlined_call_operand.vmem [shape: bf16[2,64,32], index: 11, kind: input, shape index: {}]
  %s12 = inlined_call_operand.vmem [shape: f32[2,1,32], index: 12, kind: input, shape index: {}]
  %s13 = inlined_call_operand.vmem [shape: f32[2,3,32], index: 13, kind: input, shape index: {}]
  %s14 = inlined_call_operand.vmem [shape: f32[2,3,32], index: 14, kind: input, shape index: {}]
  %s15 = inlined_call_operand.vmem [shape: bf16[32,32], index: 15, kind: input, shape index: {}]
  %s16 = inlined_call_operand.vmem [shape: f32[1,32], index: 16, kind: input, shape index: {}]
  %s17 = inlined_call_operand.hbm [shape: f32[16,32], index: 17, kind: output, shape index: {}]
  %s18 = sld [smem:[#allocation0]]
  $region109: #{tpu_custom_call.1} parent=0
    _
  %s20 = ssub.s32 1, %s18
  %s21 = scalar_select 0, %s20, %s18
  $region1: #{tpu_custom_call.1} parent=0
    #allocation3 [shape = 'u8[8192]{0}', space=vmem, size = 0x2000, scoped, tag = 'output window, operand 0, single buffered']
    #allocation4 [shape = 's32[2]{0}', space=sflag, size = 0x8, scoped, tag = 'scoped memory for tpu_custom_call.1']
    %22 = vsyncpa [#allocation4], 0
    loop: start=0, step=1, limit=4
    $region2: #{tpu_custom_call.1} parent=1 // loop_pre_header
      _
    $region3: #{tpu_custom_call.1} parent=1 // loop_header
      %s24 = sphi 0, %s28
      %p25 = scmp.ge.s32.totalorder %s24, 4
      %s32 = sphi 0, %s32
      %s34 = sphi 0, %s32
      %s35 = sphi 0, %s34
      %s49 = sphi 0, %s35
      %s53 = sphi 0, %s53
      %s55 = sphi 0, %s53
      %s56 = sphi 0, %s55
      %s70 = sphi 0, %s56
      %s74 = sphi 0, %s74
      %s76 = sphi 0, %s74
      %s77 = sphi 0, %s76
      %s91 = sphi 0, %s77
      %s97 = sphi 0, %s99
      %s100 = sphi 0, %s97
      %s101 = sphi 0, %s100
      %s117 = sphi 0, %s101
      %s123 = sphi 0, %s125
      %s126 = sphi 0, %s123
      %s127 = sphi 0, %s126
      %s143 = sphi 0, %s127
      %s149 = sphi 0, %s151
      %s152 = sphi 0, %s149
      %s153 = sphi 0, %s152
      %s169 = sphi 0, %s153
      %s175 = sphi 0, %s177
      %s178 = sphi 0, %s175
      %s179 = sphi 0, %s178
      %s195 = sphi 0, %s179
      %s201 = sphi 0, %s203
      %s204 = sphi 0, %s201
      %s205 = sphi 0, %s204
      %s221 = sphi 0, %s205
      %s227 = sphi 0, %s229
      %s230 = sphi 0, %s227
      %s231 = sphi 0, %s230
      %s247 = sphi 0, %s231
      %s253 = sphi 0, %s255
      %s256 = sphi 0, %s253
      %s257 = sphi 0, %s256
      %s273 = sphi 0, %s257
      %s279 = sphi 0, %s281
      %s282 = sphi 0, %s279
      %s283 = sphi 0, %s282
      %s299 = sphi 0, %s283
      %s305 = sphi 0, %s307
      %s308 = sphi 0, %s305
      %s309 = sphi 0, %s308
      %s325 = sphi 0, %s309
      %s331 = sphi 0, %s333
      %s334 = sphi 0, %s331
      %s335 = sphi 0, %s334
      %s351 = sphi 0, %s335
      %s357 = sphi 0, %s359
      %s360 = sphi 0, %s357
      %s361 = sphi 0, %s360
      %s377 = sphi 0, %s361
      %s383 = sphi 0, %s385
      %s386 = sphi 0, %s383
      %s387 = sphi 0, %s386
      %s403 = sphi 0, %s387
      %s407 = sphi 0, %s407
      %s409 = sphi 0, %s407
      %s410 = sphi 0, %s409
      %s424 = sphi 0, %s410
      %s428 = sphi 0, %s428
      %s430 = sphi 0, %s428
      %s431 = sphi 0, %s430
      %s445 = sphi 0, %s431
      %s449 = sphi 0, %s449
      %s451 = sphi 0, %s449
      %s452 = sphi 0, %s451
      %s466 = sphi 0, %s452
    $region4: #{tpu_custom_call.1} parent=1 // loop_header_branch
      %27 = sbr.rel (%p25) target = $region8
    $region5: #{tpu_custom_call.1} parent=1 // loop_body
      %s29 = ssub.s32 %s24, 1
      %s30 = ssub.s32 %s24, 2
      %s31 = sadd.s32 %s24, 1
      %s33 = sadd.s32 %s32, 1
      %p36 = scmp.eq.s32.totalorder %s24, 1
      %p37 = scmp.ne.s32.totalorder %s32, %s34
      %p38 = scmp.eq.s32.totalorder %s24, 0
      %p39 = por %p37, %p38
      %p40 = scmp.ne.s32.totalorder %s32, %s34
      %p41 = scmp.eq.s32.totalorder %s29, 1
      %p42 = por %p40, %p41
      %p43 = scmp.ne.s32.totalorder %s34, %s35
      %p44 = scmp.eq.s32.totalorder %s29, 0
      %p45 = por %p43, %p44
      %p46 = scmp.ne.s32.totalorder %s34, %s35
      %p47 = scmp.eq.s32.totalorder %s30, 1
      %p48 = por %p46, %p47
      %p50 = scmp.ne.s32.totalorder %s35, %s49
      %p51 = scmp.eq.s32.totalorder %s30, 0
      %p52 = por %p50, %p51
      %s54 = sadd.s32 %s53, 1
      %p57 = scmp.eq.s32.totalorder %s24, 1
      %p58 = scmp.ne.s32.totalorder %s53, %s55
      %p59 = scmp.eq.s32.totalorder %s24, 0
      %p60 = por %p58, %p59
      %p61 = scmp.ne.s32.totalorder %s53, %s55
      %p62 = scmp.eq.s32.totalorder %s29, 1
      %p63 = por %p61, %p62
      %p64 = scmp.ne.s32.totalorder %s55, %s56
      %p65 = scmp.eq.s32.totalorder %s29, 0
      %p66 = por %p64, %p65
      %p67 = scmp.ne.s32.totalorder %s55, %s56
      %p68 = scmp.eq.s32.totalorder %s30, 1
      %p69 = por %p67, %p68
      %p71 = scmp.ne.s32.totalorder %s56, %s70
      %p72 = scmp.eq.s32.totalorder %s30, 0
      %p73 = por %p71, %p72
      %s75 = sadd.s32 %s74, 1
      %p78 = scmp.eq.s32.totalorder %s24, 1
      %p79 = scmp.ne.s32.totalorder %s74, %s76
      %p80 = scmp.eq.s32.totalorder %s24, 0
      %p81 = por %p79, %p80
      %p82 = scmp.ne.s32.totalorder %s74, %s76
      %p83 = scmp.eq.s32.totalorder %s29, 1
      %p84 = por %p82, %p83
      %p85 = scmp.ne.s32.totalorder %s76, %s77
      %p86 = scmp.eq.s32.totalorder %s29, 0
      %p87 = por %p85, %p86
      %p88 = scmp.ne.s32.totalorder %s76, %s77
      %p89 = scmp.eq.s32.totalorder %s30, 1
      %p90 = por %p88, %p89
      %p92 = scmp.ne.s32.totalorder %s77, %s91
      %p93 = scmp.eq.s32.totalorder %s30, 0
      %p94 = por %p92, %p93
      %s95 = ssub.s32 %s24, %s31
      %p96 = scmp.eq.s32.totalorder %s95, 0
      %s98 = sadd.s32 %s97, 1
      %s99 = scalar_select %p96, %s97, %s98
      %p102 = pneg %p96
      %p103 = scmp.eq.s32.totalorder %s24, 1
      %p104 = por %p102, %p103
      %p105 = scmp.ne.s32.totalorder %s97, %s100
      %p106 = scmp.eq.s32.totalorder %s24, 0
      %p107 = por %p105, %p106
      %p108 = scmp.ne.s32.totalorder %s97, %s100
      %p109 = scmp.eq.s32.totalorder %s29, 1
      %p110 = por %p108, %p109
      %p111 = scmp.ne.s32.totalorder %s100, %s101
      %p112 = scmp.eq.s32.totalorder %s29, 0
      %p113 = por %p111, %p112
      %p114 = scmp.ne.s32.totalorder %s100, %s101
      %p115 = scmp.eq.s32.totalorder %s30, 1
      %p116 = por %p114, %p115
      %p118 = scmp.ne.s32.totalorder %s101, %s117
      %p119 = scmp.eq.s32.totalorder %s30, 0
      %p120 = por %p118, %p119
      %s121 = ssub.s32 %s24, %s31
      %p122 = scmp.eq.s32.totalorder %s121, 0
      %s124 = sadd.s32 %s123, 1
      %s125 = scalar_select %p122, %s123, %s124
      %p128 = pneg %p122
      %p129 = scmp.eq.s32.totalorder %s24, 1
      %p130 = por %p128, %p129
      %p131 = scmp.ne.s32.totalorder %s123, %s126
      %p132 = scmp.eq.s32.totalorder %s24, 0
      %p133 = por %p131, %p132
      %p134 = scmp.ne.s32.totalorder %s123, %s126
      %p135 = scmp.eq.s32.totalorder %s29, 1
      %p136 = por %p134, %p135
      %p137 = scmp.ne.s32.totalorder %s126, %s127
      %p138 = scmp.eq.s32.totalorder %s29, 0
      %p139 = por %p137, %p138
      %p140 = scmp.ne.s32.totalorder %s126, %s127
      %p141 = scmp.eq.s32.totalorder %s30, 1
      %p142 = por %p140, %p141
      %p144 = scmp.ne.s32.totalorder %s127, %s143
      %p145 = scmp.eq.s32.totalorder %s30, 0
      %p146 = por %p144, %p145
      %s147 = ssub.s32 %s24, %s31
      %p148 = scmp.eq.s32.totalorder %s147, 0
      %s150 = sadd.s32 %s149, 1
      %s151 = scalar_select %p148, %s149, %s150
      %p154 = pneg %p148
      %p155 = scmp.eq.s32.totalorder %s24, 1
      %p156 = por %p154, %p155
      %p157 = scmp.ne.s32.totalorder %s149, %s152
      %p158 = scmp.eq.s32.totalorder %s24, 0
      %p159 = por %p157, %p158
      %p160 = scmp.ne.s32.totalorder %s149, %s152
      %p161 = scmp.eq.s32.totalorder %s29, 1
      %p162 = por %p160, %p161
      %p163 = scmp.ne.s32.totalorder %s152, %s153
      %p164 = scmp.eq.s32.totalorder %s29, 0
      %p165 = por %p163, %p164
      %p166 = scmp.ne.s32.totalorder %s152, %s153
      %p167 = scmp.eq.s32.totalorder %s30, 1
      %p168 = por %p166, %p167
      %p170 = scmp.ne.s32.totalorder %s153, %s169
      %p171 = scmp.eq.s32.totalorder %s30, 0
      %p172 = por %p170, %p171
      %s173 = ssub.s32 %s24, %s31
      %p174 = scmp.eq.s32.totalorder %s173, 0
      %s176 = sadd.s32 %s175, 1
      %s177 = scalar_select %p174, %s175, %s176
      %p180 = pneg %p174
      %p181 = scmp.eq.s32.totalorder %s24, 1
      %p182 = por %p180, %p181
      %p183 = scmp.ne.s32.totalorder %s175, %s178
      %p184 = scmp.eq.s32.totalorder %s24, 0
      %p185 = por %p183, %p184
      %p186 = scmp.ne.s32.totalorder %s175, %s178
      %p187 = scmp.eq.s32.totalorder %s29, 1
      %p188 = por %p186, %p187
      %p189 = scmp.ne.s32.totalorder %s178, %s179
      %p190 = scmp.eq.s32.totalorder %s29, 0
      %p191 = por %p189, %p190
      %p192 = scmp.ne.s32.totalorder %s178, %s179
      %p193 = scmp.eq.s32.totalorder %s30, 1
      %p194 = por %p192, %p193
      %p196 = scmp.ne.s32.totalorder %s179, %s195
      %p197 = scmp.eq.s32.totalorder %s30, 0
      %p198 = por %p196, %p197
      %s199 = ssub.s32 %s24, %s31
      %p200 = scmp.eq.s32.totalorder %s199, 0
      %s202 = sadd.s32 %s201, 1
      %s203 = scalar_select %p200, %s201, %s202
      %p206 = pneg %p200
      %p207 = scmp.eq.s32.totalorder %s24, 1
      %p208 = por %p206, %p207
      %p209 = scmp.ne.s32.totalorder %s201, %s204
      %p210 = scmp.eq.s32.totalorder %s24, 0
      %p211 = por %p209, %p210
      %p212 = scmp.ne.s32.totalorder %s201, %s204
      %p213 = scmp.eq.s32.totalorder %s29, 1
      %p214 = por %p212, %p213
      %p215 = scmp.ne.s32.totalorder %s204, %s205
      %p216 = scmp.eq.s32.totalorder %s29, 0
      %p217 = por %p215, %p216
      %p218 = scmp.ne.s32.totalorder %s204, %s205
      %p219 = scmp.eq.s32.totalorder %s30, 1
      %p220 = por %p218, %p219
      %p222 = scmp.ne.s32.totalorder %s205, %s221
      %p223 = scmp.eq.s32.totalorder %s30, 0
      %p224 = por %p222, %p223
      %s225 = ssub.s32 %s24, %s31
      %p226 = scmp.eq.s32.totalorder %s225, 0
      %s228 = sadd.s32 %s227, 1
      %s229 = scalar_select %p226, %s227, %s228
      %p232 = pneg %p226
      %p233 = scmp.eq.s32.totalorder %s24, 1
      %p234 = por %p232, %p233
      %p235 = scmp.ne.s32.totalorder %s227, %s230
      %p236 = scmp.eq.s32.totalorder %s24, 0
      %p237 = por %p235, %p236
      %p238 = scmp.ne.s32.totalorder %s227, %s230
      %p239 = scmp.eq.s32.totalorder %s29, 1
      %p240 = por %p238, %p239
      %p241 = scmp.ne.s32.totalorder %s230, %s231
      %p242 = scmp.eq.s32.totalorder %s29, 0
      %p243 = por %p241, %p242
      %p244 = scmp.ne.s32.totalorder %s230, %s231
      %p245 = scmp.eq.s32.totalorder %s30, 1
      %p246 = por %p244, %p245
      %p248 = scmp.ne.s32.totalorder %s231, %s247
      %p249 = scmp.eq.s32.totalorder %s30, 0
      %p250 = por %p248, %p249
      %s251 = ssub.s32 %s24, %s31
      %p252 = scmp.eq.s32.totalorder %s251, 0
      %s254 = sadd.s32 %s253, 1
      %s255 = scalar_select %p252, %s253, %s254
      %p258 = pneg %p252
      %p259 = scmp.eq.s32.totalorder %s24, 1
      %p260 = por %p258, %p259
      %p261 = scmp.ne.s32.totalorder %s253, %s256
      %p262 = scmp.eq.s32.totalorder %s24, 0
      %p263 = por %p261, %p262
      %p264 = scmp.ne.s32.totalorder %s253, %s256
      %p265 = scmp.eq.s32.totalorder %s29, 1
      %p266 = por %p264, %p265
      %p267 = scmp.ne.s32.totalorder %s256, %s257
      %p268 = scmp.eq.s32.totalorder %s29, 0
      %p269 = por %p267, %p268
      %p270 = scmp.ne.s32.totalorder %s256, %s257
      %p271 = scmp.eq.s32.totalorder %s30, 1
      %p272 = por %p270, %p271
      %p274 = scmp.ne.s32.totalorder %s257, %s273
      %p275 = scmp.eq.s32.totalorder %s30, 0
      %p276 = por %p274, %p275
      %s277 = ssub.s32 %s24, %s31
      %p278 = scmp.eq.s32.totalorder %s277, 0
      %s280 = sadd.s32 %s279, 1
      %s281 = scalar_select %p278, %s279, %s280
      %p284 = pneg %p278
      %p285 = scmp.eq.s32.totalorder %s24, 1
      %p286 = por %p284, %p285
      %p287 = scmp.ne.s32.totalorder %s279, %s282
      %p288 = scmp.eq.s32.totalorder %s24, 0
      %p289 = por %p287, %p288
      %p290 = scmp.ne.s32.totalorder %s279, %s282
      %p291 = scmp.eq.s32.totalorder %s29, 1
      %p292 = por %p290, %p291
      %p293 = scmp.ne.s32.totalorder %s282, %s283
      %p294 = scmp.eq.s32.totalorder %s29, 0
      %p295 = por %p293, %p294
      %p296 = scmp.ne.s32.totalorder %s282, %s283
      %p297 = scmp.eq.s32.totalorder %s30, 1
      %p298 = por %p296, %p297
      %p300 = scmp.ne.s32.totalorder %s283, %s299
      %p301 = scmp.eq.s32.totalorder %s30, 0
      %p302 = por %p300, %p301
      %s303 = ssub.s32 %s24, %s31
      %p304 = scmp.eq.s32.totalorder %s303, 0
      %s306 = sadd.s32 %s305, 1
      %s307 = scalar_select %p304, %s305, %s306
      %p310 = pneg %p304
      %p311 = scmp.eq.s32.totalorder %s24, 1
      %p312 = por %p310, %p311
      %p313 = scmp.ne.s32.totalorder %s305, %s308
      %p314 = scmp.eq.s32.totalorder %s24, 0
      %p315 = por %p313, %p314
      %p316 = scmp.ne.s32.totalorder %s305, %s308
      %p317 = scmp.eq.s32.totalorder %s29, 1
      %p318 = por %p316, %p317
      %p319 = scmp.ne.s32.totalorder %s308, %s309
      %p320 = scmp.eq.s32.totalorder %s29, 0
      %p321 = por %p319, %p320
      %p322 = scmp.ne.s32.totalorder %s308, %s309
      %p323 = scmp.eq.s32.totalorder %s30, 1
      %p324 = por %p322, %p323
      %p326 = scmp.ne.s32.totalorder %s309, %s325
      %p327 = scmp.eq.s32.totalorder %s30, 0
      %p328 = por %p326, %p327
      %s329 = ssub.s32 %s24, %s31
      %p330 = scmp.eq.s32.totalorder %s329, 0
      %s332 = sadd.s32 %s331, 1
      %s333 = scalar_select %p330, %s331, %s332
      %p336 = pneg %p330
      %p337 = scmp.eq.s32.totalorder %s24, 1
      %p338 = por %p336, %p337
      %p339 = scmp.ne.s32.totalorder %s331, %s334
      %p340 = scmp.eq.s32.totalorder %s24, 0
      %p341 = por %p339, %p340
      %p342 = scmp.ne.s32.totalorder %s331, %s334
      %p343 = scmp.eq.s32.totalorder %s29, 1
      %p344 = por %p342, %p343
      %p345 = scmp.ne.s32.totalorder %s334, %s335
      %p346 = scmp.eq.s32.totalorder %s29, 0
      %p347 = por %p345, %p346
      %p348 = scmp.ne.s32.totalorder %s334, %s335
      %p349 = scmp.eq.s32.totalorder %s30, 1
      %p350 = por %p348, %p349
      %p352 = scmp.ne.s32.totalorder %s335, %s351
      %p353 = scmp.eq.s32.totalorder %s30, 0
      %p354 = por %p352, %p353
      %s355 = ssub.s32 %s24, %s31
      %p356 = scmp.eq.s32.totalorder %s355, 0
      %s358 = sadd.s32 %s357, 1
      %s359 = scalar_select %p356, %s357, %s358
      %p362 = pneg %p356
      %p363 = scmp.eq.s32.totalorder %s24, 1
      %p364 = por %p362, %p363
      %p365 = scmp.ne.s32.totalorder %s357, %s360
      %p366 = scmp.eq.s32.totalorder %s24, 0
      %p367 = por %p365, %p366
      %p368 = scmp.ne.s32.totalorder %s357, %s360
      %p369 = scmp.eq.s32.totalorder %s29, 1
      %p370 = por %p368, %p369
      %p371 = scmp.ne.s32.totalorder %s360, %s361
      %p372 = scmp.eq.s32.totalorder %s29, 0
      %p373 = por %p371, %p372
      %p374 = scmp.ne.s32.totalorder %s360, %s361
      %p375 = scmp.eq.s32.totalorder %s30, 1
      %p376 = por %p374, %p375
      %p378 = scmp.ne.s32.totalorder %s361, %s377
      %p379 = scmp.eq.s32.totalorder %s30, 0
      %p380 = por %p378, %p379
      %s381 = ssub.s32 %s24, %s31
      %p382 = scmp.eq.s32.totalorder %s381, 0
      %s384 = sadd.s32 %s383, 1
      %s385 = scalar_select %p382, %s383, %s384
      %p388 = pneg %p382
      %p389 = scmp.eq.s32.totalorder %s24, 1
      %p390 = por %p388, %p389
      %p391 = scmp.ne.s32.totalorder %s383, %s386
      %p392 = scmp.eq.s32.totalorder %s24, 0
      %p393 = por %p391, %p392
      %p394 = scmp.ne.s32.totalorder %s383, %s386
      %p395 = scmp.eq.s32.totalorder %s29, 1
      %p396 = por %p394, %p395
      %p397 = scmp.ne.s32.totalorder %s386, %s387
      %p398 = scmp.eq.s32.totalorder %s29, 0
      %p399 = por %p397, %p398
      %p400 = scmp.ne.s32.totalorder %s386, %s387
      %p401 = scmp.eq.s32.totalorder %s30, 1
      %p402 = por %p400, %p401
      %p404 = scmp.ne.s32.totalorder %s387, %s403
      %p405 = scmp.eq.s32.totalorder %s30, 0
      %p406 = por %p404, %p405
      %s408 = sadd.s32 %s407, 1
      %p411 = scmp.eq.s32.totalorder %s24, 1
      %p412 = scmp.ne.s32.totalorder %s407, %s409
      %p413 = scmp.eq.s32.totalorder %s24, 0
      %p414 = por %p412, %p413
      %p415 = scmp.ne.s32.totalorder %s407, %s409
      %p416 = scmp.eq.s32.totalorder %s29, 1
      %p417 = por %p415, %p416
      %p418 = scmp.ne.s32.totalorder %s409, %s410
      %p419 = scmp.eq.s32.totalorder %s29, 0
      %p420 = por %p418, %p419
      %p421 = scmp.ne.s32.totalorder %s409, %s410
      %p422 = scmp.eq.s32.totalorder %s30, 1
      %p423 = por %p421, %p422
      %p425 = scmp.ne.s32.totalorder %s410, %s424
      %p426 = scmp.eq.s32.totalorder %s30, 0
      %p427 = por %p425, %p426
      %s429 = sadd.s32 %s428, 1
      %p432 = scmp.eq.s32.totalorder %s24, 1
      %p433 = scmp.ne.s32.totalorder %s428, %s430
      %p434 = scmp.eq.s32.totalorder %s24, 0
      %p435 = por %p433, %p434
      %p436 = scmp.ne.s32.totalorder %s428, %s430
      %p437 = scmp.eq.s32.totalorder %s29, 1
      %p438 = por %p436, %p437
      %p439 = scmp.ne.s32.totalorder %s430, %s431
      %p440 = scmp.eq.s32.totalorder %s29, 0
      %p441 = por %p439, %p440
      %p442 = scmp.ne.s32.totalorder %s430, %s431
      %p443 = scmp.eq.s32.totalorder %s30, 1
      %p444 = por %p442, %p443
      %p446 = scmp.ne.s32.totalorder %s431, %s445
      %p447 = scmp.eq.s32.totalorder %s30, 0
      %p448 = por %p446, %p447
      %s450 = sadd.s32 %s449, 1
      %p453 = scmp.eq.s32.totalorder %s24, 1
      %p454 = scmp.ne.s32.totalorder %s449, %s451
      %p455 = scmp.eq.s32.totalorder %s24, 0
      %p456 = por %p454, %p455
      %p457 = scmp.ne.s32.totalorder %s449, %s451
      %p458 = scmp.eq.s32.totalorder %s29, 1
      %p459 = por %p457, %p458
      %p460 = scmp.ne.s32.totalorder %s451, %s452
      %p461 = scmp.eq.s32.totalorder %s29, 0
      %p462 = por %p460, %p461
      %p463 = scmp.ne.s32.totalorder %s451, %s452
      %p464 = scmp.eq.s32.totalorder %s30, 1
      %p465 = por %p463, %p464
      %p467 = scmp.ne.s32.totalorder %s452, %s466
      %p468 = scmp.eq.s32.totalorder %s30, 0
      %p469 = por %p467, %p468
      %p470 = scmp.le.s32.totalorder 1, %s24
      %p471 = scmp.lt.s32.totalorder %s24, 3
      %p472 = pnand %p470, %p471
      %p473 = pneg %p472
      // Predicated region
      $region9: #{tpu_custom_call.1} parent=5 // pred_check
        _
      $region10: #{tpu_custom_call.1} parent=5 // pred_check_branch
        %475 = sbr.rel (%p472) target = $region12
      $region11: #{tpu_custom_call.1} parent=5 // pred_region
        %s476 = ssub.s32 %s24, 1
        // Predicated region
        $region13: #{tpu_custom_call.1} parent=11 // pred_check
          %p477 = pneg %p45
        $region14: #{tpu_custom_call.1} parent=11 // pred_check_branch
          %479 = sbr.rel (%p477) target = $region16
        $region15: #{tpu_custom_call.1} parent=11 // pred_region
          _
        $region16: #{tpu_custom_call.1} parent=11 // pred_fallthru
          _
        // Predicated region
        $region17: #{tpu_custom_call.1} parent=11 // pred_check
          %p480 = pneg %p66
        $region18: #{tpu_custom_call.1} parent=11 // pred_check_branch
          %482 = sbr.rel (%p480) target = $region20
        $region19: #{tpu_custom_call.1} parent=11 // pred_region
          _
        $region20: #{tpu_custom_call.1} parent=11 // pred_fallthru
          _
        // Predicated region
        $region21: #{tpu_custom_call.1} parent=11 // pred_check
          %p483 = pneg %p87
        $region22: #{tpu_custom_call.1} parent=11 // pred_check_branch
          %485 = sbr.rel (%p483) target = $region24
        $region23: #{tpu_custom_call.1} parent=11 // pred_region
          _
        $region24: #{tpu_custom_call.1} parent=11 // pred_fallthru
          _
        // Predicated region
        $region25: #{tpu_custom_call.1} parent=11 // pred_check
          %p486 = pneg %p420
        $region26: #{tpu_custom_call.1} parent=11 // pred_check_branch
          %488 = sbr.rel (%p486) target = $region28
        $region27: #{tpu_custom_call.1} parent=11 // pred_region
          _
        $region28: #{tpu_custom_call.1} parent=11 // pred_fallthru
          _
        // Predicated region
        $region29: #{tpu_custom_call.1} parent=11 // pred_check
          %p489 = pneg %p441
        $region30: #{tpu_custom_call.1} parent=11 // pred_check_branch
          %491 = sbr.rel (%p489) target = $region32
        $region31: #{tpu_custom_call.1} parent=11 // pred_region
          _
        $region32: #{tpu_custom_call.1} parent=11 // pred_fallthru
          _
      $region12: #{tpu_custom_call.1} parent=5 // pred_fallthru
        _
      %p492 = scmp.lt.s32.totalorder %s24, 2
      // Predicated region
      $region33: #{tpu_custom_call.1} parent=5 // pred_check
        %p493 = pneg %p492
      $region34: #{tpu_custom_call.1} parent=5 // pred_check_branch
        %495 = sbr.rel (%p493) target = $region36
      $region35: #{tpu_custom_call.1} parent=5 // pred_region
        // Predicated region
        $region37: #{tpu_custom_call.1} parent=35 // pred_check
          %p496 = pneg %p107
        $region38: #{tpu_custom_call.1} parent=35 // pred_check_branch
          %498 = sbr.rel (%p496) target = $region40
        $region39: #{tpu_custom_call.1} parent=35 // pred_region
          %p499 = scmp.lt.s32.totalorder %s24, 1
          %s500 = scalar_select %p499, %s24, 1
          %s501 = smul.addr %s500, 16
          %s502 = smul.addr %s501, 4
          %s503 = scalar_lea.vmem %s3, %s502
        $region40: #{tpu_custom_call.1} parent=35 // pred_fallthru
          _
        // Predicated region
        $region41: #{tpu_custom_call.1} parent=35 // pred_check
          %p504 = pneg %p133
        $region42: #{tpu_custom_call.1} parent=35 // pred_check_branch
          %506 = sbr.rel (%p504) target = $region44
        $region43: #{tpu_custom_call.1} parent=35 // pred_region
          %p507 = scmp.lt.s32.totalorder %s24, 1
          %s508 = scalar_select %p507, %s24, 1
          %s509 = smul.addr %s508, 16
          %s510 = smul.addr %s509, 4
          %s511 = scalar_lea.vmem %s4, %s510
        $region44: #{tpu_custom_call.1} parent=35 // pred_fallthru
          _
        // Predicated region
        $region45: #{tpu_custom_call.1} parent=35 // pred_check
          %p512 = pneg %p159
        $region46: #{tpu_custom_call.1} parent=35 // pred_check_branch
          %514 = sbr.rel (%p512) target = $region48
        $region47: #{tpu_custom_call.1} parent=35 // pred_region
          %p515 = scmp.lt.s32.totalorder %s24, 1
          %s516 = scalar_select %p515, %s24, 1
          %s517 = smul.addr %s516, 48
          %s518 = smul.addr %s517, 4
          %s519 = scalar_lea.vmem %s5, %s518
        $region48: #{tpu_custom_call.1} parent=35 // pred_fallthru
          _
        // Predicated region
        $region49: #{tpu_custom_call.1} parent=35 // pred_check
          %p520 = pneg %p185
        $region50: #{tpu_custom_call.1} parent=35 // pred_check_branch
          %522 = sbr.rel (%p520) target = $region52
        $region51: #{tpu_custom_call.1} parent=35 // pred_region
          %p523 = scmp.lt.s32.totalorder %s24, 1
          %s524 = scalar_select %p523, %s24, 1
          %s525 = smul.addr %s524, 4
          %s526 = smul.addr %s525, 4
          %s527 = scalar_lea.vmem %s6, %s526
        $region52: #{tpu_custom_call.1} parent=35 // pred_fallthru
          _
        // Predicated region
        $region53: #{tpu_custom_call.1} parent=35 // pred_check
          %p528 = pneg %p211
        $region54: #{tpu_custom_call.1} parent=35 // pred_check_branch
          %530 = sbr.rel (%p528) target = $region56
        $region55: #{tpu_custom_call.1} parent=35 // pred_region
          %p531 = scmp.lt.s32.totalorder %s24, 1
          %s532 = scalar_select %p531, %s24, 1
          %s533 = smul.addr %s532, 16
          %s534 = smul.addr %s533, 4
          %s535 = scalar_lea.vmem %s7, %s534
        $region56: #{tpu_custom_call.1} parent=35 // pred_fallthru
          _
        // Predicated region
        $region57: #{tpu_custom_call.1} parent=35 // pred_check
          %p536 = pneg %p237
        $region58: #{tpu_custom_call.1} parent=35 // pred_check_branch
          %538 = sbr.rel (%p536) target = $region60
        $region59: #{tpu_custom_call.1} parent=35 // pred_region
          %p539 = scmp.lt.s32.totalorder %s24, 1
          %s540 = scalar_select %p539, %s24, 1
          %s541 = smul.addr %s540, 4
          %s542 = smul.addr %s541, 4
          %s543 = scalar_lea.vmem %s8, %s542
        $region60: #{tpu_custom_call.1} parent=35 // pred_fallthru
          _
        // Predicated region
        $region61: #{tpu_custom_call.1} parent=35 // pred_check
          %p544 = pneg %p263
        $region62: #{tpu_custom_call.1} parent=35 // pred_check_branch
          %546 = sbr.rel (%p544) target = $region64
        $region63: #{tpu_custom_call.1} parent=35 // pred_region
          %p547 = scmp.lt.s32.totalorder %s24, 1
          %s548 = scalar_select %p547, %s24, 1
          %s549 = smul.addr %s548, 4
          %s550 = smul.addr %s549, 4
          %s551 = scalar_lea.vmem %s9, %s550
        $region64: #{tpu_custom_call.1} parent=35 // pred_fallthru
          _
        // Predicated region
        $region65: #{tpu_custom_call.1} parent=35 // pred_check
          %p552 = pneg %p289
        $region66: #{tpu_custom_call.1} parent=35 // pred_check_branch
          %554 = sbr.rel (%p552) target = $region68
        $region67: #{tpu_custom_call.1} parent=35 // pred_region
          %p555 = scmp.lt.s32.totalorder %s24, 1
          %s556 = scalar_select %p555, %s24, 1
          %s557 = scalar_lea.vmem %s10, %s556
        $region68: #{tpu_custom_call.1} parent=35 // pred_fallthru
          _
        // Predicated region
        $region69: #{tpu_custom_call.1} parent=35 // pred_check
          %p558 = pneg %p315
        $region70: #{tpu_custom_call.1} parent=35 // pred_check_branch
          %560 = sbr.rel (%p558) target = $region72
        $region71: #{tpu_custom_call.1} parent=35 // pred_region
          %p561 = scmp.lt.s32.totalorder %s24, 1
          %s562 = scalar_select %p561, %s24, 1
          %s563 = smul.addr %s562, 8
          %s564 = smul.addr %s563, 4
          %s565 = scalar_lea.vmem %s11, %s564
        $region72: #{tpu_custom_call.1} parent=35 // pred_fallthru
          _
        // Predicated region
        $region73: #{tpu_custom_call.1} parent=35 // pred_check
          %p566 = pneg %p341
        $region74: #{tpu_custom_call.1} parent=35 // pred_check_branch
          %568 = sbr.rel (%p566) target = $region76
        $region75: #{tpu_custom_call.1} parent=35 // pred_region
          %p569 = scmp.lt.s32.totalorder %s24, 1
          %s570 = scalar_select %p569, %s24, 1
          %s571 = scalar_lea.vmem %s12, %s570
        $region76: #{tpu_custom_call.1} parent=35 // pred_fallthru
          _
        // Predicated region
        $region77: #{tpu_custom_call.1} parent=35 // pred_check
          %p572 = pneg %p367
        $region78: #{tpu_custom_call.1} parent=35 // pred_check_branch
          %574 = sbr.rel (%p572) target = $region80
        $region79: #{tpu_custom_call.1} parent=35 // pred_region
          %p575 = scmp.lt.s32.totalorder %s24, 1
          %s576 = scalar_select %p575, %s24, 1
          %s577 = smul.addr %s576, 4
          %s578 = scalar_lea.vmem %s13, %s577
        $region80: #{tpu_custom_call.1} parent=35 // pred_fallthru
          _
        // Predicated region
        $region81: #{tpu_custom_call.1} parent=35 // pred_check
          %p579 = pneg %p393
        $region82: #{tpu_custom_call.1} parent=35 // pred_check_branch
          %581 = sbr.rel (%p579) target = $region84
        $region83: #{tpu_custom_call.1} parent=35 // pred_region
          %p582 = scmp.lt.s32.totalorder %s24, 1
          %s583 = scalar_select %p582, %s24, 1
          %s584 = smul.addr %s583, 4
          %s585 = scalar_lea.vmem %s14, %s584
        $region84: #{tpu_custom_call.1} parent=35 // pred_fallthru
          _
      $region36: #{tpu_custom_call.1} parent=5 // pred_fallthru
        _
      %p586 = scmp.le.s32.totalorder 1, %s24
      %p587 = scmp.lt.s32.totalorder %s24, 3
      %p588 = pnand %p586, %p587
      %p589 = pneg %p588
      // Predicated region
      $region85: #{tpu_custom_call.1} parent=5 // pred_check
        _
      $region86: #{tpu_custom_call.1} parent=5 // pred_check_branch
        %591 = sbr.rel (%p588) target = $region88
      $region87: #{tpu_custom_call.1} parent=5 // pred_region
        %s592 = ssub.s32 %s24, 1
        %p593 = pneg %p45
        %p594 = pneg %p42
        %p595 = pneg %p66
        %p596 = pneg %p63
        %p597 = pneg %p87
        %p598 = pneg %p84
        %p599 = scmp.lt.s32.totalorder %s29, 1
        %s600 = scalar_select %p599, %s29, 1
        %s601 = smul.addr %s600, 16
        %s602 = smul.addr %s601, 4
        %s603 = scalar_lea.vmem %s3, %s602
        %p604 = pneg %p113
        %p605 = pneg %p110
        %p606 = scmp.lt.s32.totalorder %s29, 1
        %s607 = scalar_select %p606, %s29, 1
        %s608 = smul.addr %s607, 16
        %s609 = smul.addr %s608, 4
        %s610 = scalar_lea.vmem %s4, %s609
        %p611 = pneg %p139
        %p612 = pneg %p136
        %p613 = scmp.lt.s32.totalorder %s29, 1
        %s614 = scalar_select %p613, %s29, 1
        %s615 = smul.addr %s614, 48
        %s616 = smul.addr %s615, 4
        %s617 = scalar_lea.vmem %s5, %s616
        %p618 = pneg %p165
        %p619 = pneg %p162
        %p620 = scmp.lt.s32.totalorder %s29, 1
        %s621 = scalar_select %p620, %s29, 1
        %s622 = smul.addr %s621, 4
        %s623 = smul.addr %s622, 4
        %s624 = scalar_lea.vmem %s6, %s623
        %p625 = pneg %p191
        %p626 = pneg %p188
        %p627 = scmp.lt.s32.totalorder %s29, 1
        %s628 = scalar_select %p627, %s29, 1
        %s629 = smul.addr %s628, 16
        %s630 = smul.addr %s629, 4
        %s631 = scalar_lea.vmem %s7, %s630
        %p632 = pneg %p217
        %p633 = pneg %p214
        %p634 = scmp.lt.s32.totalorder %s29, 1
        %s635 = scalar_select %p634, %s29, 1
        %s636 = smul.addr %s635, 4
        %s637 = smul.addr %s636, 4
        %s638 = scalar_lea.vmem %s8, %s637
        %p639 = pneg %p243
        %p640 = pneg %p240
        %p641 = scmp.lt.s32.totalorder %s29, 1
        %s642 = scalar_select %p641, %s29, 1
        %s643 = smul.addr %s642, 4
        %s644 = smul.addr %s643, 4
        %s645 = scalar_lea.vmem %s9, %s644
        %p646 = pneg %p269
        %p647 = pneg %p266
        %p648 = scmp.lt.s32.totalorder %s29, 1
        %s649 = scalar_select %p648, %s29, 1
        %s650 = scalar_lea.vmem %s10, %s649
        %p651 = pneg %p295
        %p652 = pneg %p292
        %p653 = scmp.lt.s32.totalorder %s29, 1
        %s654 = scalar_select %p653, %s29, 1
        %s655 = smul.addr %s654, 8
        %s656 = smul.addr %s655, 4
        %s657 = scalar_lea.vmem %s11, %s656
        %p658 = pneg %p321
        %p659 = pneg %p318
        %p660 = scmp.lt.s32.totalorder %s29, 1
        %s661 = scalar_select %p660, %s29, 1
        %s662 = scalar_lea.vmem %s12, %s661
        %p663 = pneg %p347
        %p664 = pneg %p344
        %p665 = scmp.lt.s32.totalorder %s29, 1
        %s666 = scalar_select %p665, %s29, 1
        %s667 = smul.addr %s666, 4
        %s668 = scalar_lea.vmem %s13, %s667
        %p669 = pneg %p373
        %p670 = pneg %p370
        %p671 = scmp.lt.s32.totalorder %s29, 1
        %s672 = scalar_select %p671, %s29, 1
        %s673 = smul.addr %s672, 4
        %s674 = scalar_lea.vmem %s14, %s673
        %p675 = pneg %p399
        %p676 = pneg %p396
        %p677 = pneg %p420
        %p678 = pneg %p417
        %p679 = pneg %p441
        %p680 = pneg %p438
        %p681 = pneg %p462
        %p682 = pneg %p459
        %p683 = scmp.lt.s32.totalorder %s29, 1
        %s684 = scalar_select %p683, %s29, 1
        %s685 = smul.addr %s684, 16
        %s686 = smul.addr %s685, 4
        %s687 = scalar_lea.vmem %s3, %s686
        %p688 = scmp.lt.s32.totalorder %s29, 1
        %s689 = scalar_select %p688, %s29, 1
        %s690 = smul.addr %s689, 16
        %s691 = smul.addr %s690, 4
        %s692 = scalar_lea.vmem %s4, %s691
        %p693 = scmp.lt.s32.totalorder %s29, 1
        %s694 = scalar_select %p693, %s29, 1
        %s695 = smul.addr %s694, 48
        %s696 = smul.addr %s695, 4
        %s697 = scalar_lea.vmem %s5, %s696
        %p698 = scmp.lt.s32.totalorder %s29, 1
        %s699 = scalar_select %p698, %s29, 1
        %s700 = smul.addr %s699, 4
        %s701 = smul.addr %s700, 4
        %s702 = scalar_lea.vmem %s6, %s701
        %p703 = scmp.lt.s32.totalorder %s29, 1
        %s704 = scalar_select %p703, %s29, 1
        %s705 = smul.addr %s704, 16
        %s706 = smul.addr %s705, 4
        %s707 = scalar_lea.vmem %s7, %s706
        %p708 = scmp.lt.s32.totalorder %s29, 1
        %s709 = scalar_select %p708, %s29, 1
        %s710 = smul.addr %s709, 4
        %s711 = smul.addr %s710, 4
        %s712 = scalar_lea.vmem %s8, %s711
        %p713 = scmp.lt.s32.totalorder %s29, 1
        %s714 = scalar_select %p713, %s29, 1
        %s715 = smul.addr %s714, 4
        %s716 = smul.addr %s715, 4
        %s717 = scalar_lea.vmem %s9, %s716
        %p718 = scmp.lt.s32.totalorder %s29, 1
        %s719 = scalar_select %p718, %s29, 1
        %s720 = scalar_lea.vmem %s10, %s719
        %p721 = scmp.lt.s32.totalorder %s29, 1
        %s722 = scalar_select %p721, %s29, 1
        %s723 = smul.addr %s722, 8
        %s724 = smul.addr %s723, 4
        %s725 = scalar_lea.vmem %s11, %s724
        %p726 = scmp.lt.s32.totalorder %s29, 1
        %s727 = scalar_select %p726, %s29, 1
        %s728 = scalar_lea.vmem %s12, %s727
        %p729 = scmp.lt.s32.totalorder %s29, 1
        %s730 = scalar_select %p729, %s29, 1
        %s731 = smul.addr %s730, 4
        %s732 = scalar_lea.vmem %s13, %s731
        %p733 = scmp.lt.s32.totalorder %s29, 1
        %s734 = scalar_select %p733, %s29, 1
        %s735 = smul.addr %s734, 4
        %s736 = scalar_lea.vmem %s14, %s735
        %p738 = scmp.eq.s32.totalorder %s29, 0
        // Predicated region
        $region89: #{tpu_custom_call.1} parent=87 // pred_check
          %p739 = pneg %p738
        $region90: #{tpu_custom_call.1} parent=87 // pred_check_branch
          %741 = sbr.rel (%p739) target = $region92
        $region91: #{tpu_custom_call.1} parent=87 // pred_region
          %v742 = vld [vmem:[%s0] sm:$0xff]
          %v743 = vld [vmem:[%s0 + $0x8] sm:$0xff]
          %vm744 = vcmask 261120
          %745 = vst.msk [vmem:[#allocation2] sm:$0xff] %vm744, %v742
          %746 = vst.msk [vmem:[#allocation2 + $0x8] sm:$0xff] %vm744, %v743
        $region92: #{tpu_custom_call.1} parent=87 // pred_fallthru
          _
        %v747 = vld [vmem:[#allocation2] sm:$0xff]
        %v748 = vld [vmem:[#allocation2 + $0x8] sm:$0xff]
        %v749 = vld [vmem:[%s1] sm:$0xff]
        %vm750 = vcmp.ne.f32.partialorder %v749, 0.0
        %v751 = vld [vmem:[%s2] sm:$0x1]
        %v752 = vld [vmem:[%s2 + $0x1] sm:$0x1]
        %v753 = vld [vmem:[%s2 + $0x2] sm:$0x1]
        %v754 = vld [vmem:[%s2 + $0x3] sm:$0x1]
        %v755 = vld [vmem:[%s2 + $0x4] sm:$0x1]
        %v756 = vld [vmem:[%s2 + $0x5] sm:$0x1]
        %v757 = vld [vmem:[%s2 + $0x6] sm:$0x1]
        %v758 = vld [vmem:[%s2 + $0x7] sm:$0x1]
        %vm759 = vcmp.ne.f32.partialorder %v751, 0.0
        %vm760 = vcmp.ne.f32.partialorder %v752, 0.0
        %vm761 = vcmp.ne.f32.partialorder %v753, 0.0
        %vm762 = vcmp.ne.f32.partialorder %v754, 0.0
        %vm763 = vcmp.ne.f32.partialorder %v755, 0.0
        %vm764 = vcmp.ne.f32.partialorder %v756, 0.0
        %vm765 = vcmp.ne.f32.partialorder %v757, 0.0
        %vm766 = vcmp.ne.f32.partialorder %v758, 0.0
        %v767 = vpack.c.bf16 %v748, %v747
        %v768 = vld [vmem:[%s697] sm:$0xf]
        %v769 = vld [vmem:[%s697 + $0x4] sm:$0xf]
        %v770 = vld [vmem:[%s697 + $0x8] sm:$0xf]
        %v771 = vld [vmem:[%s697 + $0xc] sm:$0xf]
        %v772 = vld [vmem:[%s697 + $0x10] sm:$0xf]
        %v773 = vld [vmem:[%s697 + $0x14] sm:$0xf]
        %v774 = vld [vmem:[%s697 + $0x18] sm:$0xf]
        %v775 = vld [vmem:[%s697 + $0x1c] sm:$0xf]
        %v776 = vld [vmem:[%s697 + $0x20] sm:$0xf]
        %v777 = vld [vmem:[%s697 + $0x24] sm:$0xf]
        %v778 = vld [vmem:[%s697 + $0x28] sm:$0xf]
        %v779 = vld [vmem:[%s697 + $0x2c] sm:$0xf]
        %v780 = vld [vmem:[%s697 + $0x30] sm:$0xf]
        %v781 = vld [vmem:[%s697 + $0x34] sm:$0xf]
        %v782 = vld [vmem:[%s697 + $0x38] sm:$0xf]
        %v783 = vld [vmem:[%s697 + $0x3c] sm:$0xf]
        %v784 = vld [vmem:[%s697 + $0x40] sm:$0xf]
        %v785 = vld [vmem:[%s697 + $0x44] sm:$0xf]
        %v786 = vld [vmem:[%s697 + $0x48] sm:$0xf]
        %v787 = vld [vmem:[%s697 + $0x4c] sm:$0xf]
        %v788 = vld [vmem:[%s697 + $0x50] sm:$0xf]
        %v789 = vld [vmem:[%s697 + $0x54] sm:$0xf]
        %v790 = vld [vmem:[%s697 + $0x58] sm:$0xf]
        %v791 = vld [vmem:[%s697 + $0x5c] sm:$0xf]
        %v792 = vld [vmem:[%s697 + $0x60] sm:$0xf]
        %v793 = vld [vmem:[%s697 + $0x64] sm:$0xf]
        %v794 = vld [vmem:[%s697 + $0x68] sm:$0xf]
        %v795 = vld [vmem:[%s697 + $0x6c] sm:$0xf]
        %v796 = vld [vmem:[%s697 + $0x70] sm:$0xf]
        %v797 = vld [vmem:[%s697 + $0x74] sm:$0xf]
        %v798 = vld [vmem:[%s697 + $0x78] sm:$0xf]
        %v799 = vld [vmem:[%s697 + $0x7c] sm:$0xf]
        %v800 = vld [vmem:[%s697 + $0x80] sm:$0xf]
        %v801 = vld [vmem:[%s697 + $0x84] sm:$0xf]
        %v802 = vld [vmem:[%s697 + $0x88] sm:$0xf]
        %v803 = vld [vmem:[%s697 + $0x8c] sm:$0xf]
        %v804 = vld [vmem:[%s697 + $0x90] sm:$0xf]
        %v805 = vld [vmem:[%s697 + $0x94] sm:$0xf]
        %v806 = vld [vmem:[%s697 + $0x98] sm:$0xf]
        %v807 = vld [vmem:[%s697 + $0x9c] sm:$0xf]
        %v808 = vld [vmem:[%s697 + $0xa0] sm:$0xf]
        %v809 = vld [vmem:[%s697 + $0xa4] sm:$0xf]
        %v810 = vld [vmem:[%s697 + $0xa8] sm:$0xf]
        %v811 = vld [vmem:[%s697 + $0xac] sm:$0xf]
        %v812 = vld [vmem:[%s697 + $0xb0] sm:$0xf]
        %v813 = vld [vmem:[%s697 + $0xb4] sm:$0xf]
        %v814 = vld [vmem:[%s697 + $0xb8] sm:$0xf]
        %v815 = vld [vmem:[%s697 + $0xbc] sm:$0xf]
        %v820 = vunpack.c.l.b16 %v768
        %v821 = vunpack.c.l.b16 %v769
        %v822 = vunpack.c.l.b16 %v770
        %v823 = vunpack.c.l.b16 %v771
        %v824 = vpack.c.b16 %v821, %v820
        %v825 = vpack.c.b16 %v823, %v822
        %vm828 = vcmask 261120
        %v830 = vsel %vm828, %v767, 0
        %832 = vmatprep.subr.bf16.mxu0 0
        %833 = vmatpush1.bf16.msra.mxu0 %v824
        %834 = vmatprep.subr.bf16.mxu0 0
        %835 = vmatpush1.bf16.msra.mxu0 %v825
        %836 = vmatprep.subr.bf16.mxu0 0
        %837 = vmatpush1.bf16.msra.mxu0 0
        %838 = vmatprep.subr.bf16.mxu0 0
        %839 = vmatpush1.bf16.msra.mxu0 0
        %840 = vmatprep.subr.bf16.mxu0 0
        %841 = vmatpush1.bf16.msra.mxu0 0
        %842 = vmatprep.subr.bf16.mxu0 0
        %843 = vmatpush1.bf16.msra.mxu0 0
        %844 = vmatprep.subr.bf16.mxu0 0
        %845 = vmatpush1.bf16.msra.mxu0 0
        %846 = vmatprep.subr.bf16.mxu0 0
        %847 = vmatpush1.bf16.msra.mxu0 0
        %848 = vmatprep.subr.bf16.mxu0 0
        %849 = vmatpush1.bf16.msra.mxu0 0
        %850 = vmatprep.subr.bf16.mxu0 0
        %851 = vmatpush1.bf16.msra.mxu0 0
        %852 = vmatprep.subr.bf16.mxu0 0
        %853 = vmatpush1.bf16.msra.mxu0 0
        %854 = vmatprep.subr.bf16.mxu0 0
        %855 = vmatpush1.bf16.msra.mxu0 0
        %856 = vmatprep.subr.bf16.mxu0 0
        %857 = vmatpush1.bf16.msra.mxu0 0
        %858 = vmatprep.subr.bf16.mxu0 0
        %859 = vmatpush1.bf16.msra.mxu0 0
        %860 = vmatprep.subr.bf16.mxu0 0
        %861 = vmatpush1.bf16.msra.mxu0 0
        %862 = vmatprep.subr.bf16.mxu0 0
        %863 = vmatpush1.bf16.msra.mxu0 0
        %864 = vmatprep.mubr.bf16.mxu0 0
        %865 = vmatmul.mubr.bf16.gmra.mrb[0].mxu0 %v830
        %v866 = vpop.f32.mrb[0].mxu0
        %v867 = vadd.f32 0.0, %v866
        %v868 = vpop.f32.mrb[0].mxu0
        %v869 = vpop.f32.mrb[0].mxu0
        %v870 = vadd.f32 0.0, %v869
        %v871 = vpop.f32.mrb[0].mxu0
        %872 = vdwg.mxu0
        %v877 = vunpack.c.l.b16 %v772
        %v878 = vunpack.c.l.b16 %v773
        %v879 = vunpack.c.l.b16 %v774
        %v880 = vunpack.c.l.b16 %v775
        %v881 = vpack.c.b16 %v878, %v877
        %v882 = vpack.c.b16 %v880, %v879
        %885 = vmatprep.subr.bf16.mxu0 0
        %886 = vmatpush1.bf16.msra.mxu0 %v881
        %887 = vmatprep.subr.bf16.mxu0 0
        %888 = vmatpush1.bf16.msra.mxu0 %v882
        %889 = vmatprep.subr.bf16.mxu0 0
        %890 = vmatpush1.bf16.msra.mxu0 0
        %891 = vmatprep.subr.bf16.mxu0 0
        %892 = vmatpush1.bf16.msra.mxu0 0
        %893 = vmatprep.subr.bf16.mxu0 0
        %894 = vmatpush1.bf16.msra.mxu0 0
        %895 = vmatprep.subr.bf16.mxu0 0
        %896 = vmatpush1.bf16.msra.mxu0 0
        %897 = vmatprep.subr.bf16.mxu0 0
        %898 = vmatpush1.bf16.msra.mxu0 0
        %899 = vmatprep.subr.bf16.mxu0 0
        %900 = vmatpush1.bf16.msra.mxu0 0
        %901 = vmatprep.subr.bf16.mxu0 0
        %902 = vmatpush1.bf16.msra.mxu0 0
        %903 = vmatprep.subr.bf16.mxu0 0
        %904 = vmatpush1.bf16.msra.mxu0 0
        %905 = vmatprep.subr.bf16.mxu0 0
        %906 = vmatpush1.bf16.msra.mxu0 0
        %907 = vmatprep.subr.bf16.mxu0 0
        %908 = vmatpush1.bf16.msra.mxu0 0
        %909 = vmatprep.subr.bf16.mxu0 0
        %910 = vmatpush1.bf16.msra.mxu0 0
        %911 = vmatprep.subr.bf16.mxu0 0
        %912 = vmatpush1.bf16.msra.mxu0 0
        %913 = vmatprep.subr.bf16.mxu0 0
        %914 = vmatpush1.bf16.msra.mxu0 0
        %915 = vmatprep.subr.bf16.mxu0 0
        %916 = vmatpush1.bf16.msra.mxu0 0
        %917 = vmatprep.mubr.bf16.mxu0 0
        %918 = vmatmul.mubr.bf16.gmra.mrb[0].mxu0 %v830
        %v919 = vpop.f32.mrb[0].mxu0
        %v920 = vadd.f32 0.0, %v919
        %v921 = vpop.f32.mrb[0].mxu0
        %v922 = vpop.f32.mrb[0].mxu0
        %v923 = vadd.f32 0.0, %v922
        %v924 = vpop.f32.mrb[0].mxu0
        %925 = vdwg.mxu0
        %v930 = vunpack.c.l.b16 %v776
        %v931 = vunpack.c.l.b16 %v777
        %v932 = vunpack.c.l.b16 %v778
        %v933 = vunpack.c.l.b16 %v779
        %v934 = vpack.c.b16 %v931, %v930
        %v935 = vpack.c.b16 %v933, %v932
        %938 = vmatprep.subr.bf16.mxu0 0
        %939 = vmatpush1.bf16.msra.mxu0 %v934
        %940 = vmatprep.subr.bf16.mxu0 0
        %941 = vmatpush1.bf16.msra.mxu0 %v935
        %942 = vmatprep.subr.bf16.mxu0 0
        %943 = vmatpush1.bf16.msra.mxu0 0
        %944 = vmatprep.subr.bf16.mxu0 0
        %945 = vmatpush1.bf16.msra.mxu0 0
        %946 = vmatprep.subr.bf16.mxu0 0
        %947 = vmatpush1.bf16.msra.mxu0 0
        %948 = vmatprep.subr.bf16.mxu0 0
        %949 = vmatpush1.bf16.msra.mxu0 0
        %950 = vmatprep.subr.bf16.mxu0 0
        %951 = vmatpush1.bf16.msra.mxu0 0
        %952 = vmatprep.subr.bf16.mxu0 0
        %953 = vmatpush1.bf16.msra.mxu0 0
        %954 = vmatprep.subr.bf16.mxu0 0
        %955 = vmatpush1.bf16.msra.mxu0 0
        %956 = vmatprep.subr.bf16.mxu0 0
        %957 = vmatpush1.bf16.msra.mxu0 0
        %958 = vmatprep.subr.bf16.mxu0 0
        %959 = vmatpush1.bf16.msra.mxu0 0
        %960 = vmatprep.subr.bf16.mxu0 0
        %961 = vmatpush1.bf16.msra.mxu0 0
        %962 = vmatprep.subr.bf16.mxu0 0
        %963 = vmatpush1.bf16.msra.mxu0 0
        %964 = vmatprep.subr.bf16.mxu0 0
        %965 = vmatpush1.bf16.msra.mxu0 0
        %966 = vmatprep.subr.bf16.mxu0 0
        %967 = vmatpush1.bf16.msra.mxu0 0
        %968 = vmatprep.subr.bf16.mxu0 0
        %969 = vmatpush1.bf16.msra.mxu0 0
        %970 = vmatprep.mubr.bf16.mxu0 0
        %971 = vmatmul.mubr.bf16.gmra.mrb[0].mxu0 %v830
        %v972 = vpop.f32.mrb[0].mxu0
        %v973 = vadd.f32 0.0, %v972
        %v974 = vpop.f32.mrb[0].mxu0
        %v975 = vpop.f32.mrb[0].mxu0
        %v976 = vadd.f32 0.0, %v975
        %v977 = vpop.f32.mrb[0].mxu0
        %978 = vdwg.mxu0
        %v983 = vunpack.c.l.b16 %v780
        %v984 = vunpack.c.l.b16 %v781
        %v985 = vunpack.c.l.b16 %v782
        %v986 = vunpack.c.l.b16 %v783
        %v987 = vpack.c.b16 %v984, %v983
        %v988 = vpack.c.b16 %v986, %v985
        %991 = vmatprep.subr.bf16.mxu0 0
        %992 = vmatpush1.bf16.msra.mxu0 %v987
        %993 = vmatprep.subr.bf16.mxu0 0
        %994 = vmatpush1.bf16.msra.mxu0 %v988
        %995 = vmatprep.subr.bf16.mxu0 0
        %996 = vmatpush1.bf16.msra.mxu0 0
        %997 = vmatprep.subr.bf16.mxu0 0
        %998 = vmatpush1.bf16.msra.mxu0 0
        %999 = vmatprep.subr.bf16.mxu0 0
        %1000 = vmatpush1.bf16.msra.mxu0 0
        %1001 = vmatprep.subr.bf16.mxu0 0
        %1002 = vmatpush1.bf16.msra.mxu0 0
        %1003 = vmatprep.subr.bf16.mxu0 0
        %1004 = vmatpush1.bf16.msra.mxu0 0
        %1005 = vmatprep.subr.bf16.mxu0 0
        %1006 = vmatpush1.bf16.msra.mxu0 0
        %1007 = vmatprep.subr.bf16.mxu0 0
        %1008 = vmatpush1.bf16.msra.mxu0 0
        %1009 = vmatprep.subr.bf16.mxu0 0
        %1010 = vmatpush1.bf16.msra.mxu0 0
        %1011 = vmatprep.subr.bf16.mxu0 0
        %1012 = vmatpush1.bf16.msra.mxu0 0
        %1013 = vmatprep.subr.bf16.mxu0 0
        %1014 = vmatpush1.bf16.msra.mxu0 0
        %1015 = vmatprep.subr.bf16.mxu0 0
        %1016 = vmatpush1.bf16.msra.mxu0 0
        %1017 = vmatprep.subr.bf16.mxu0 0
        %1018 = vmatpush1.bf16.msra.mxu0 0
        %1019 = vmatprep.subr.bf16.mxu0 0
        %1020 = vmatpush1.bf16.msra.mxu0 0
        %1021 = vmatprep.subr.bf16.mxu0 0
        %1022 = vmatpush1.bf16.msra.mxu0 0
        %1023 = vmatprep.mubr.bf16.mxu0 0
        %1024 = vmatmul.mubr.bf16.gmra.mrb[0].mxu0 %v830
        %v1025 = vpop.f32.mrb[0].mxu0
        %v1026 = vadd.f32 0.0, %v1025
        %v1027 = vpop.f32.mrb[0].mxu0
        %v1028 = vpop.f32.mrb[0].mxu0
        %v1029 = vadd.f32 0.0, %v1028
        %v1030 = vpop.f32.mrb[0].mxu0
        %1031 = vdwg.mxu0
        %v1036 = vunpack.c.l.b16 %v784
        %v1037 = vunpack.c.l.b16 %v785
        %v1038 = vunpack.c.l.b16 %v786
        %v1039 = vunpack.c.l.b16 %v787
        %v1040 = vpack.c.b16 %v1037, %v1036
        %v1041 = vpack.c.b16 %v1039, %v1038
        %1044 = vmatprep.subr.bf16.mxu0 0
        %1045 = vmatpush1.bf16.msra.mxu0 %v1040
        %1046 = vmatprep.subr.bf16.mxu0 0
        %1047 = vmatpush1.bf16.msra.mxu0 %v1041
        %1048 = vmatprep.subr.bf16.mxu0 0
        %1049 = vmatpush1.bf16.msra.mxu0 0
        %1050 = vmatprep.subr.bf16.mxu0 0
        %1051 = vmatpush1.bf16.msra.mxu0 0
        %1052 = vmatprep.subr.bf16.mxu0 0
        %1053 = vmatpush1.bf16.msra.mxu0 0
        %1054 = vmatprep.subr.bf16.mxu0 0
        %1055 = vmatpush1.bf16.msra.mxu0 0
        %1056 = vmatprep.subr.bf16.mxu0 0
        %1057 = vmatpush1.bf16.msra.mxu0 0
        %1058 = vmatprep.subr.bf16.mxu0 0
        %1059 = vmatpush1.bf16.msra.mxu0 0
        %1060 = vmatprep.subr.bf16.mxu0 0
        %1061 = vmatpush1.bf16.msra.mxu0 0
        %1062 = vmatprep.subr.bf16.mxu0 0
        %1063 = vmatpush1.bf16.msra.mxu0 0
        %1064 = vmatprep.subr.bf16.mxu0 0
        %1065 = vmatpush1.bf16.msra.mxu0 0
        %1066 = vmatprep.subr.bf16.mxu0 0
        %1067 = vmatpush1.bf16.msra.mxu0 0
        %1068 = vmatprep.subr.bf16.mxu0 0
        %1069 = vmatpush1.bf16.msra.mxu0 0
        %1070 = vmatprep.subr.bf16.mxu0 0
        %1071 = vmatpush1.bf16.msra.mxu0 0
        %1072 = vmatprep.subr.bf16.mxu0 0
        %1073 = vmatpush1.bf16.msra.mxu0 0
        %1074 = vmatprep.subr.bf16.mxu0 0
        %1075 = vmatpush1.bf16.msra.mxu0 0
        %1076 = vmatprep.mubr.bf16.mxu0 0
        %1077 = vmatmul.mubr.bf16.gmra.mrb[0].mxu0 %v830
        %v1078 = vpop.f32.mrb[0].mxu0
        %v1079 = vadd.f32 0.0, %v1078
        %v1080 = vpop.f32.mrb[0].mxu0
        %v1081 = vpop.f32.mrb[0].mxu0
        %v1082 = vadd.f32 0.0, %v1081
        %v1083 = vpop.f32.mrb[0].mxu0
        %1084 = vdwg.mxu0
        %v1089 = vunpack.c.l.b16 %v788
        %v1090 = vunpack.c.l.b16 %v789
        %v1091 = vunpack.c.l.b16 %v790
        %v1092 = vunpack.c.l.b16 %v791
        %v1093 = vpack.c.b16 %v1090, %v1089
        %v1094 = vpack.c.b16 %v1092, %v1091
        %1097 = vmatprep.subr.bf16.mxu0 0
        %1098 = vmatpush1.bf16.msra.mxu0 %v1093
        %1099 = vmatprep.subr.bf16.mxu0 0
        %1100 = vmatpush1.bf16.msra.mxu0 %v1094
        %1101 = vmatprep.subr.bf16.mxu0 0
        %1102 = vmatpush1.bf16.msra.mxu0 0
        %1103 = vmatprep.subr.bf16.mxu0 0
        %1104 = vmatpush1.bf16.msra.mxu0 0
        %1105 = vmatprep.subr.bf16.mxu0 0
        %1106 = vmatpush1.bf16.msra.mxu0 0
        %1107 = vmatprep.subr.bf16.mxu0 0
        %1108 = vmatpush1.bf16.msra.mxu0 0
        %1109 = vmatprep.subr.bf16.mxu0 0
        %1110 = vmatpush1.bf16.msra.mxu0 0
        %1111 = vmatprep.subr.bf16.mxu0 0
        %1112 = vmatpush1.bf16.msra.mxu0 0
        %1113 = vmatprep.subr.bf16.mxu0 0
        %1114 = vmatpush1.bf16.msra.mxu0 0
        %1115 = vmatprep.subr.bf16.mxu0 0
        %1116 = vmatpush1.bf16.msra.mxu0 0
        %1117 = vmatprep.subr.bf16.mxu0 0
        %1118 = vmatpush1.bf16.msra.mxu0 0
        %1119 = vmatprep.subr.bf16.mxu0 0
        %1120 = vmatpush1.bf16.msra.mxu0 0
        %1121 = vmatprep.subr.bf16.mxu0 0
        %1122 = vmatpush1.bf16.msra.mxu0 0
        %1123 = vmatprep.subr.bf16.mxu0 0
        %1124 = vmatpush1.bf16.msra.mxu0 0
        %1125 = vmatprep.subr.bf16.mxu0 0
        %1126 = vmatpush1.bf16.msra.mxu0 0
        %1127 = vmatprep.subr.bf16.mxu0 0
        %1128 = vmatpush1.bf16.msra.mxu0 0
        %1129 = vmatprep.mubr.bf16.mxu0 0
        %1130 = vmatmul.mubr.bf16.gmra.mrb[0].mxu0 %v830
        %v1131 = vpop.f32.mrb[0].mxu0
        %v1132 = vadd.f32 0.0, %v1131
        %v1133 = vpop.f32.mrb[0].mxu0
        %v1134 = vpop.f32.mrb[0].mxu0
        %v1135 = vadd.f32 0.0, %v1134
        %v1136 = vpop.f32.mrb[0].mxu0
        %1137 = vdwg.mxu0
        %v1142 = vunpack.c.l.b16 %v792
        %v1143 = vunpack.c.l.b16 %v793
        %v1144 = vunpack.c.l.b16 %v794
        %v1145 = vunpack.c.l.b16 %v795
        %v1146 = vpack.c.b16 %v1143, %v1142
        %v1147 = vpack.c.b16 %v1145, %v1144
        %1150 = vmatprep.subr.bf16.mxu0 0
        %1151 = vmatpush1.bf16.msra.mxu0 %v1146
        %1152 = vmatprep.subr.bf16.mxu0 0
        %1153 = vmatpush1.bf16.msra.mxu0 %v1147
        %1154 = vmatprep.subr.bf16.mxu0 0
        %1155 = vmatpush1.bf16.msra.mxu0 0
        %1156 = vmatprep.subr.bf16.mxu0 0
        %1157 = vmatpush1.bf16.msra.mxu0 0
        %1158 = vmatprep.subr.bf16.mxu0 0
        %1159 = vmatpush1.bf16.msra.mxu0 0
        %1160 = vmatprep.subr.bf16.mxu0 0
        %1161 = vmatpush1.bf16.msra.mxu0 0
        %1162 = vmatprep.subr.bf16.mxu0 0
        %1163 = vmatpush1.bf16.msra.mxu0 0
        %1164 = vmatprep.subr.bf16.mxu0 0
        %1165 = vmatpush1.bf16.msra.mxu0 0
        %1166 = vmatprep.subr.bf16.mxu0 0
        %1167 = vmatpush1.bf16.msra.mxu0 0
        %1168 = vmatprep.subr.bf16.mxu0 0
        %1169 = vmatpush1.bf16.msra.mxu0 0
        %1170 = vmatprep.subr.bf16.mxu0 0
        %1171 = vmatpush1.bf16.msra.mxu0 0
        %1172 = vmatprep.subr.bf16.mxu0 0
        %1173 = vmatpush1.bf16.msra.mxu0 0
        %1174 = vmatprep.subr.bf16.mxu0 0
        %1175 = vmatpush1.bf16.msra.mxu0 0
        %1176 = vmatprep.subr.bf16.mxu0 0
        %1177 = vmatpush1.bf16.msra.mxu0 0
        %1178 = vmatprep.subr.bf16.mxu0 0
        %1179 = vmatpush1.bf16.msra.mxu0 0
        %1180 = vmatprep.subr.bf16.mxu0 0
        %1181 = vmatpush1.bf16.msra.mxu0 0
        %1182 = vmatprep.mubr.bf16.mxu0 0
        %1183 = vmatmul.mubr.bf16.gmra.mrb[0].mxu0 %v830
        %v1184 = vpop.f32.mrb[0].mxu0
        %v1185 = vadd.f32 0.0, %v1184
        %v1186 = vpop.f32.mrb[0].mxu0
        %v1187 = vpop.f32.mrb[0].mxu0
        %v1188 = vadd.f32 0.0, %v1187
        %v1189 = vpop.f32.mrb[0].mxu0
        %1190 = vdwg.mxu0
        %v1195 = vunpack.c.l.b16 %v796
        %v1196 = vunpack.c.l.b16 %v797
        %v1197 = vunpack.c.l.b16 %v798
        %v1198 = vunpack.c.l.b16 %v799
        %v1199 = vpack.c.b16 %v1196, %v1195
        %v1200 = vpack.c.b16 %v1198, %v1197
        %1203 = vmatprep.subr.bf16.mxu0 0
        %1204 = vmatpush1.bf16.msra.mxu0 %v1199
        %1205 = vmatprep.subr.bf16.mxu0 0
        %1206 = vmatpush1.bf16.msra.mxu0 %v1200
        %1207 = vmatprep.subr.bf16.mxu0 0
        %1208 = vmatpush1.bf16.msra.mxu0 0
        %1209 = vmatprep.subr.bf16.mxu0 0
        %1210 = vmatpush1.bf16.msra.mxu0 0
        %1211 = vmatprep.subr.bf16.mxu0 0
        %1212 = vmatpush1.bf16.msra.mxu0 0
        %1213 = vmatprep.subr.bf16.mxu0 0
        %1214 = vmatpush1.bf16.msra.mxu0 0
        %1215 = vmatprep.subr.bf16.mxu0 0
        %1216 = vmatpush1.bf16.msra.mxu0 0
        %1217 = vmatprep.subr.bf16.mxu0 0
        %1218 = vmatpush1.bf16.msra.mxu0 0
        %1219 = vmatprep.subr.bf16.mxu0 0
        %1220 = vmatpush1.bf16.msra.mxu0 0
        %1221 = vmatprep.subr.bf16.mxu0 0
        %1222 = vmatpush1.bf16.msra.mxu0 0
        %1223 = vmatprep.subr.bf16.mxu0 0
        %1224 = vmatpush1.bf16.msra.mxu0 0
        %1225 = vmatprep.subr.bf16.mxu0 0
        %1226 = vmatpush1.bf16.msra.mxu0 0
        %1227 = vmatprep.subr.bf16.mxu0 0
        %1228 = vmatpush1.bf16.msra.mxu0 0
        %1229 = vmatprep.subr.bf16.mxu0 0
        %1230 = vmatpush1.bf16.msra.mxu0 0
        %1231 = vmatprep.subr.bf16.mxu0 0
        %1232 = vmatpush1.bf16.msra.mxu0 0
        %1233 = vmatprep.subr.bf16.mxu0 0
        %1234 = vmatpush1.bf16.msra.mxu0 0
        %1235 = vmatprep.mubr.bf16.mxu0 0
        %1236 = vmatmul.mubr.bf16.gmra.mrb[0].mxu0 %v830
        %v1237 = vpop.f32.mrb[0].mxu0
        %v1238 = vadd.f32 0.0, %v1237
        %v1239 = vpop.f32.mrb[0].mxu0
        %v1240 = vpop.f32.mrb[0].mxu0
        %v1241 = vadd.f32 0.0, %v1240
        %v1242 = vpop.f32.mrb[0].mxu0
        %1243 = vdwg.mxu0
        %v1248 = vunpack.c.l.b16 %v800
        %v1249 = vunpack.c.l.b16 %v801
        %v1250 = vunpack.c.l.b16 %v802
        %v1251 = vunpack.c.l.b16 %v803
        %v1252 = vpack.c.b16 %v1249, %v1248
        %v1253 = vpack.c.b16 %v1251, %v1250
        %1256 = vmatprep.subr.bf16.mxu0 0
        %1257 = vmatpush1.bf16.msra.mxu0 %v1252
        %1258 = vmatprep.subr.bf16.mxu0 0
        %1259 = vmatpush1.bf16.msra.mxu0 %v1253
        %1260 = vmatprep.subr.bf16.mxu0 0
        %1261 = vmatpush1.bf16.msra.mxu0 0
        %1262 = vmatprep.subr.bf16.mxu0 0
        %1263 = vmatpush1.bf16.msra.mxu0 0
        %1264 = vmatprep.subr.bf16.mxu0 0
        %1265 = vmatpush1.bf16.msra.mxu0 0
        %1266 = vmatprep.subr.bf16.mxu0 0
        %1267 = vmatpush1.bf16.msra.mxu0 0
        %1268 = vmatprep.subr.bf16.mxu0 0
        %1269 = vmatpush1.bf16.msra.mxu0 0
        %1270 = vmatprep.subr.bf16.mxu0 0
        %1271 = vmatpush1.bf16.msra.mxu0 0
        %1272 = vmatprep.subr.bf16.mxu0 0
        %1273 = vmatpush1.bf16.msra.mxu0 0
        %1274 = vmatprep.subr.bf16.mxu0 0
        %1275 = vmatpush1.bf16.msra.mxu0 0
        %1276 = vmatprep.subr.bf16.mxu0 0
        %1277 = vmatpush1.bf16.msra.mxu0 0
        %1278 = vmatprep.subr.bf16.mxu0 0
        %1279 = vmatpush1.bf16.msra.mxu0 0
        %1280 = vmatprep.subr.bf16.mxu0 0
        %1281 = vmatpush1.bf16.msra.mxu0 0
        %1282 = vmatprep.subr.bf16.mxu0 0
        %1283 = vmatpush1.bf16.msra.mxu0 0
        %1284 = vmatprep.subr.bf16.mxu0 0
        %1285 = vmatpush1.bf16.msra.mxu0 0
        %1286 = vmatprep.subr.bf16.mxu0 0
        %1287 = vmatpush1.bf16.msra.mxu0 0
        %1288 = vmatprep.mubr.bf16.mxu0 0
        %1289 = vmatmul.mubr.bf16.gmra.mrb[0].mxu0 %v830
        %v1290 = vpop.f32.mrb[0].mxu0
        %v1291 = vadd.f32 0.0, %v1290
        %v1292 = vpop.f32.mrb[0].mxu0
        %v1293 = vpop.f32.mrb[0].mxu0
        %v1294 = vadd.f32 0.0, %v1293
        %v1295 = vpop.f32.mrb[0].mxu0
        %1296 = vdwg.mxu0
        %v1301 = vunpack.c.l.b16 %v804
        %v1302 = vunpack.c.l.b16 %v805
        %v1303 = vunpack.c.l.b16 %v806
        %v1304 = vunpack.c.l.b16 %v807
        %v1305 = vpack.c.b16 %v1302, %v1301
        %v1306 = vpack.c.b16 %v1304, %v1303
        %1309 = vmatprep.subr.bf16.mxu0 0
        %1310 = vmatpush1.bf16.msra.mxu0 %v1305
        %1311 = vmatprep.subr.bf16.mxu0 0
        %1312 = vmatpush1.bf16.msra.mxu0 %v1306
        %1313 = vmatprep.subr.bf16.mxu0 0
        %1314 = vmatpush1.bf16.msra.mxu0 0
        %1315 = vmatprep.subr.bf16.mxu0 0
        %1316 = vmatpush1.bf16.msra.mxu0 0
        %1317 = vmatprep.subr.bf16.mxu0 0
        %1318 = vmatpush1.bf16.msra.mxu0 0
        %1319 = vmatprep.subr.bf16.mxu0 0
        %1320 = vmatpush1.bf16.msra.mxu0 0
        %1321 = vmatprep.subr.bf16.mxu0 0
        %1322 = vmatpush1.bf16.msra.mxu0 0
        %1323 = vmatprep.subr.bf16.mxu0 0
        %1324 = vmatpush1.bf16.msra.mxu0 0
        %1325 = vmatprep.subr.bf16.mxu0 0
        %1326 = vmatpush1.bf16.msra.mxu0 0
        %1327 = vmatprep.subr.bf16.mxu0 0
        %1328 = vmatpush1.bf16.msra.mxu0 0
        %1329 = vmatprep.subr.bf16.mxu0 0
        %1330 = vmatpush1.bf16.msra.mxu0 0
        %1331 = vmatprep.subr.bf16.mxu0 0
        %1332 = vmatpush1.bf16.msra.mxu0 0
        %1333 = vmatprep.subr.bf16.mxu0 0
        %1334 = vmatpush1.bf16.msra.mxu0 0
        %1335 = vmatprep.subr.bf16.mxu0 0
        %1336 = vmatpush1.bf16.msra.mxu0 0
        %1337 = vmatprep.subr.bf16.mxu0 0
        %1338 = vmatpush1.bf16.msra.mxu0 0
        %1339 = vmatprep.subr.bf16.mxu0 0
        %1340 = vmatpush1.bf16.msra.mxu0 0
        %1341 = vmatprep.mubr.bf16.mxu0 0
        %1342 = vmatmul.mubr.bf16.gmra.mrb[0].mxu0 %v830
        %v1343 = vpop.f32.mrb[0].mxu0
        %v1344 = vadd.f32 0.0, %v1343
        %v1345 = vpop.f32.mrb[0].mxu0
        %v1346 = vpop.f32.mrb[0].mxu0
        %v1347 = vadd.f32 0.0, %v1346
        %v1348 = vpop.f32.mrb[0].mxu0
        %1349 = vdwg.mxu0
        %v1354 = vunpack.c.l.b16 %v808
        %v1355 = vunpack.c.l.b16 %v809
        %v1356 = vunpack.c.l.b16 %v810
        %v1357 = vunpack.c.l.b16 %v811
        %v1358 = vpack.c.b16 %v1355, %v1354
        %v1359 = vpack.c.b16 %v1357, %v1356
        %1362 = vmatprep.subr.bf16.mxu0 0
        %1363 = vmatpush1.bf16.msra.mxu0 %v1358
        %1364 = vmatprep.subr.bf16.mxu0 0
        %1365 = vmatpush1.bf16.msra.mxu0 %v1359
        %1366 = vmatprep.subr.bf16.mxu0 0
        %1367 = vmatpush1.bf16.msra.mxu0 0
        %1368 = vmatprep.subr.bf16.mxu0 0
        %1369 = vmatpush1.bf16.msra.mxu0 0
        %1370 = vmatprep.subr.bf16.mxu0 0
        %1371 = vmatpush1.bf16.msra.mxu0 0
        %1372 = vmatprep.subr.bf16.mxu0 0
        %1373 = vmatpush1.bf16.msra.mxu0 0
        %1374 = vmatprep.subr.bf16.mxu0 0
        %1375 = vmatpush1.bf16.msra.mxu0 0
        %1376 = vmatprep.subr.bf16.mxu0 0
        %1377 = vmatpush1.bf16.msra.mxu0 0
        %1378 = vmatprep.subr.bf16.mxu0 0
        %1379 = vmatpush1.bf16.msra.mxu0 0
        %1380 = vmatprep.subr.bf16.mxu0 0
        %1381 = vmatpush1.bf16.msra.mxu0 0
        %1382 = vmatprep.subr.bf16.mxu0 0
        %1383 = vmatpush1.bf16.msra.mxu0 0
        %1384 = vmatprep.subr.bf16.mxu0 0
        %1385 = vmatpush1.bf16.msra.mxu0 0
        %1386 = vmatprep.subr.bf16.mxu0 0
        %1387 = vmatpush1.bf16.msra.mxu0 0
        %1388 = vmatprep.subr.bf16.mxu0 0
        %1389 = vmatpush1.bf16.msra.mxu0 0
        %1390 = vmatprep.subr.bf16.mxu0 0
        %1391 = vmatpush1.bf16.msra.mxu0 0
        %1392 = vmatprep.subr.bf16.mxu0 0
        %1393 = vmatpush1.bf16.msra.mxu0 0
        %1394 = vmatprep.mubr.bf16.mxu0 0
        %1395 = vmatmul.mubr.bf16.gmra.mrb[0].mxu0 %v830
        %v1396 = vpop.f32.mrb[0].mxu0
        %v1397 = vadd.f32 0.0, %v1396
        %v1398 = vpop.f32.mrb[0].mxu0
        %v1399 = vpop.f32.mrb[0].mxu0
        %v1400 = vadd.f32 0.0, %v1399
        %v1401 = vpop.f32.mrb[0].mxu0
        %1402 = vdwg.mxu0
        %v1407 = vunpack.c.l.b16 %v812
        %v1408 = vunpack.c.l.b16 %v813
        %v1409 = vunpack.c.l.b16 %v814
        %v1410 = vunpack.c.l.b16 %v815
        %v1411 = vpack.c.b16 %v1408, %v1407
        %v1412 = vpack.c.b16 %v1410, %v1409
        %1415 = vmatprep.subr.bf16.mxu0 0
        %1416 = vmatpush1.bf16.msra.mxu0 %v1411
        %1417 = vmatprep.subr.bf16.mxu0 0
        %1418 = vmatpush1.bf16.msra.mxu0 %v1412
        %1419 = vmatprep.subr.bf16.mxu0 0
        %1420 = vmatpush1.bf16.msra.mxu0 0
        %1421 = vmatprep.subr.bf16.mxu0 0
        %1422 = vmatpush1.bf16.msra.mxu0 0
        %1423 = vmatprep.subr.bf16.mxu0 0
        %1424 = vmatpush1.bf16.msra.mxu0 0
        %1425 = vmatprep.subr.bf16.mxu0 0
        %1426 = vmatpush1.bf16.msra.mxu0 0
        %1427 = vmatprep.subr.bf16.mxu0 0
        %1428 = vmatpush1.bf16.msra.mxu0 0
        %1429 = vmatprep.subr.bf16.mxu0 0
        %1430 = vmatpush1.bf16.msra.mxu0 0
        %1431 = vmatprep.subr.bf16.mxu0 0
        %1432 = vmatpush1.bf16.msra.mxu0 0
        %1433 = vmatprep.subr.bf16.mxu0 0
        %1434 = vmatpush1.bf16.msra.mxu0 0
        %1435 = vmatprep.subr.bf16.mxu0 0
        %1436 = vmatpush1.bf16.msra.mxu0 0
        %1437 = vmatprep.subr.bf16.mxu0 0
        %1438 = vmatpush1.bf16.msra.mxu0 0
        %1439 = vmatprep.subr.bf16.mxu0 0
        %1440 = vmatpush1.bf16.msra.mxu0 0
        %1441 = vmatprep.subr.bf16.mxu0 0
        %1442 = vmatpush1.bf16.msra.mxu0 0
        %1443 = vmatprep.subr.bf16.mxu0 0
        %1444 = vmatpush1.bf16.msra.mxu0 0
        %1445 = vmatprep.subr.bf16.mxu0 0
        %1446 = vmatpush1.bf16.msra.mxu0 0
        %1447 = vmatprep.mubr.bf16.mxu0 0
        %1448 = vmatmul.mubr.bf16.gmra.mrb[0].mxu0 %v830
        %v1449 = vpop.f32.mrb[0].mxu0
        %v1450 = vadd.f32 0.0, %v1449
        %v1451 = vpop.f32.mrb[0].mxu0
        %v1452 = vpop.f32.mrb[0].mxu0
        %v1453 = vadd.f32 0.0, %v1452
        %v1454 = vpop.f32.mrb[0].mxu0
        %1455 = vdwg.mxu0
        %v1456 = vpack.c.bf16 %v870, %v867
        %v1457 = vpack.c.bf16 %v923, %v920
        %v1458 = vpack.c.bf16 %v976, %v973
        %v1459 = vpack.c.bf16 %v1029, %v1026
        %v1460 = vpack.c.bf16 %v1082, %v1079
        %v1461 = vpack.c.bf16 %v1135, %v1132
        %v1462 = vpack.c.bf16 %v1188, %v1185
        %v1463 = vpack.c.bf16 %v1241, %v1238
        %v1464 = vpack.c.bf16 %v1294, %v1291
        %v1465 = vpack.c.bf16 %v1347, %v1344
        %v1466 = vpack.c.bf16 %v1400, %v1397
        %v1467 = vpack.c.bf16 %v1453, %v1450
        %v1472 = vunpack.c.l.b16 %v1456
        %v1473 = vunpack.c.h.b16 %v1456
        %v1474 = vunpack.c.l.b16 %v1457
        %v1475 = vunpack.c.h.b16 %v1457
        %v1476 = vunpack.c.l.b16 %v1458
        %v1477 = vunpack.c.h.b16 %v1458
        %v1478 = vunpack.c.l.b16 %v1459
        %v1479 = vunpack.c.h.b16 %v1459
        %v1480 = vpack.c.b16 %v1472, %v1472
        %v1481 = vpack.c.b16 %v1473, %v1473
        %v1482 = vpack.c.b16 %v1474, %v1474
        %v1483 = vpack.c.b16 %v1475, %v1475
        %v1484 = vpack.c.b16 %v1476, %v1476
        %v1485 = vpack.c.b16 %v1477, %v1477
        %v1486 = vpack.c.b16 %v1478, %v1478
        %v1487 = vpack.c.b16 %v1479, %v1479
        %v1492 = vunpack.c.l.b16 %v1460
        %v1493 = vunpack.c.h.b16 %v1460
        %v1494 = vunpack.c.l.b16 %v1461
        %v1495 = vunpack.c.h.b16 %v1461
        %v1496 = vunpack.c.l.b16 %v1462
        %v1497 = vunpack.c.h.b16 %v1462
        %v1498 = vunpack.c.l.b16 %v1463
        %v1499 = vunpack.c.h.b16 %v1463
        %v1500 = vpack.c.b16 %v1492, %v1492
        %v1501 = vpack.c.b16 %v1493, %v1493
        %v1502 = vpack.c.b16 %v1494, %v1494
        %v1503 = vpack.c.b16 %v1495, %v1495
        %v1504 = vpack.c.b16 %v1496, %v1496
        %v1505 = vpack.c.b16 %v1497, %v1497
        %v1506 = vpack.c.b16 %v1498, %v1498
        %v1507 = vpack.c.b16 %v1499, %v1499
        %v1512 = vunpack.c.l.b16 %v1464
        %v1513 = vunpack.c.h.b16 %v1464
        %v1514 = vunpack.c.l.b16 %v1465
        %v1515 = vunpack.c.h.b16 %v1465
        %v1516 = vunpack.c.l.b16 %v1466
        %v1517 = vunpack.c.h.b16 %v1466
        %v1518 = vunpack.c.l.b16 %v1467
        %v1519 = vunpack.c.h.b16 %v1467
        %v1520 = vpack.c.b16 %v1512, %v1512
        %v1521 = vpack.c.b16 %v1513, %v1513
        %v1522 = vpack.c.b16 %v1514, %v1514
        %v1523 = vpack.c.b16 %v1515, %v1515
        %v1524 = vpack.c.b16 %v1516, %v1516
        %v1525 = vpack.c.b16 %v1517, %v1517
        %v1526 = vpack.c.b16 %v1518, %v1518
        %v1527 = vpack.c.b16 %v1519, %v1519
        %vm1528 = vcmask 64512
        %v1530 = vsel %vm1528, %v1480, 0
        %v1533 = vsel %vm1528, %v1500, 0
        %1535 = vmatprep.subr.bf16.mxu0 0
        %1536 = vmatpush1.bf16.xpose.msra.mxu0 %v1533
        %1537 = vmatprep.subr.bf16.mxu0 0
        %1538 = vmatpush1.bf16.xpose.msra.mxu0 0
        %1539 = vmatprep.subr.bf16.mxu0 0
        %1540 = vmatpush1.bf16.xpose.msra.mxu0 0
        %1541 = vmatprep.subr.bf16.mxu0 0
        %1542 = vmatpush1.bf16.xpose.msra.mxu0 0
        %1543 = vmatprep.subr.bf16.mxu0 0
        %1544 = vmatpush1.bf16.xpose.msra.mxu0 0
        %1545 = vmatprep.subr.bf16.mxu0 0
        %1546 = vmatpush1.bf16.xpose.msra.mxu0 0
        %1547 = vmatprep.subr.bf16.mxu0 0
        %1548 = vmatpush1.bf16.xpose.msra.mxu0 0
        %1549 = vmatprep.subr.bf16.mxu0 0
        %1550 = vmatpush1.bf16.xpose.msra.mxu0 0
        %1551 = vmatprep.subr.bf16.mxu0 0
        %1552 = vmatpush1.bf16.xpose.msra.mxu0 0
        %1553 = vmatprep.subr.bf16.mxu0 0
        %1554 = vmatpush1.bf16.xpose.msra.mxu0 0
        %1555 = vmatprep.subr.bf16.mxu0 0
        %1556 = vmatpush1.bf16.xpose.msra.mxu0 0
        %1557 = vmatprep.subr.bf16.mxu0 0
        %1558 = vmatpush1.bf16.xpose.msra.mxu0 0
        %1559 = vmatprep.subr.bf16.mxu0 0
        %1560 = vmatpush1.bf16.xpose.msra.mxu0 0
        %1561 = vmatprep.subr.bf16.mxu0 0
        %1562 = vmatpush1.bf16.xpose.msra.mxu0 0
        %1563 = vmatprep.subr.bf16.mxu0 0
        %1564 = vmatpush1.bf16.xpose.msra.mxu0 0
        %1565 = vmatprep.subr.bf16.mxu0 0
        %1566 = vmatpush1.bf16.xpose.msra.mxu0 0
        %1567 = vmatprep.mubr.bf16.mxu0 0
        %1568 = vmatmul.mubr.bf16.gmra.mrb[0].mxu0 %v1530
        %v1569 = vpop.f32.mrb[0].mxu0
        %v1570 = vadd.f32 0.0, %v1569
        %v1571 = vpop.f32.mrb[0].mxu0
        %v1572 = vpop.f32.mrb[0].mxu0
        %v1573 = vpop.f32.mrb[0].mxu0
        %1574 = vdwg.mxu0
        %v1576 = vsel %vm1528, %v1481, 0
        %v1579 = vsel %vm1528, %v1501, 0
        %1581 = vmatprep.subr.bf16.mxu0 0
        %1582 = vmatpush1.bf16.xpose.msra.mxu0 %v1579
        %1583 = vmatprep.subr.bf16.mxu0 0
        %1584 = vmatpush1.bf16.xpose.msra.mxu0 0
        %1585 = vmatprep.subr.bf16.mxu0 0
        %1586 = vmatpush1.bf16.xpose.msra.mxu0 0
        %1587 = vmatprep.subr.bf16.mxu0 0
        %1588 = vmatpush1.bf16.xpose.msra.mxu0 0
        %1589 = vmatprep.subr.bf16.mxu0 0
        %1590 = vmatpush1.bf16.xpose.msra.mxu0 0
        %1591 = vmatprep.subr.bf16.mxu0 0
        %1592 = vmatpush1.bf16.xpose.msra.mxu0 0
        %1593 = vmatprep.subr.bf16.mxu0 0
        %1594 = vmatpush1.bf16.xpose.msra.mxu0 0
        %1595 = vmatprep.subr.bf16.mxu0 0
        %1596 = vmatpush1.bf16.xpose.msra.mxu0 0
        %1597 = vmatprep.subr.bf16.mxu0 0
        %1598 = vmatpush1.bf16.xpose.msra.mxu0 0
        %1599 = vmatprep.subr.bf16.mxu0 0
        %1600 = vmatpush1.bf16.xpose.msra.mxu0 0
        %1601 = vmatprep.subr.bf16.mxu0 0
        %1602 = vmatpush1.bf16.xpose.msra.mxu0 0
        %1603 = vmatprep.subr.bf16.mxu0 0
        %1604 = vmatpush1.bf16.xpose.msra.mxu0 0
        %1605 = vmatprep.subr.bf16.mxu0 0
        %1606 = vmatpush1.bf16.xpose.msra.mxu0 0
        %1607 = vmatprep.subr.bf16.mxu0 0
        %1608 = vmatpush1.bf16.xpose.msra.mxu0 0
        %1609 = vmatprep.subr.bf16.mxu0 0
        %1610 = vmatpush1.bf16.xpose.msra.mxu0 0
        %1611 = vmatprep.subr.bf16.mxu0 0
        %1612 = vmatpush1.bf16.xpose.msra.mxu0 0
        %1613 = vmatprep.mubr.bf16.mxu0 0
        %1614 = vmatmul.mubr.bf16.gmra.mrb[0].mxu0 %v1576
        %v1615 = vpop.f32.mrb[0].mxu0
        %v1616 = vadd.f32 0.0, %v1615
        %v1617 = vpop.f32.mrb[0].mxu0
        %v1618 = vpop.f32.mrb[0].mxu0
        %v1619 = vpop.f32.mrb[0].mxu0
        %1620 = vdwg.mxu0
        %v1622 = vsel %vm1528, %v1482, 0
        %v1625 = vsel %vm1528, %v1502, 0
        %1627 = vmatprep.subr.bf16.mxu0 0
        %1628 = vmatpush1.bf16.xpose.msra.mxu0 %v1625
        %1629 = vmatprep.subr.bf16.mxu0 0
        %1630 = vmatpush1.bf16.xpose.msra.mxu0 0
        %1631 = vmatprep.subr.bf16.mxu0 0
        %1632 = vmatpush1.bf16.xpose.msra.mxu0 0
        %1633 = vmatprep.subr.bf16.mxu0 0
        %1634 = vmatpush1.bf16.xpose.msra.mxu0 0
        %1635 = vmatprep.subr.bf16.mxu0 0
        %1636 = vmatpush1.bf16.xpose.msra.mxu0 0
        %1637 = vmatprep.subr.bf16.mxu0 0
        %1638 = vmatpush1.bf16.xpose.msra.mxu0 0
        %1639 = vmatprep.subr.bf16.mxu0 0
        %1640 = vmatpush1.bf16.xpose.msra.mxu0 0
        %1641 = vmatprep.subr.bf16.mxu0 0
        %1642 = vmatpush1.bf16.xpose.msra.mxu0 0
        %1643 = vmatprep.subr.bf16.mxu0 0
        %1644 = vmatpush1.bf16.xpose.msra.mxu0 0
        %1645 = vmatprep.subr.bf16.mxu0 0
        %1646 = vmatpush1.bf16.xpose.msra.mxu0 0
        %1647 = vmatprep.subr.bf16.mxu0 0
        %1648 = vmatpush1.bf16.xpose.msra.mxu0 0
        %1649 = vmatprep.subr.bf16.mxu0 0
        %1650 = vmatpush1.bf16.xpose.msra.mxu0 0
        %1651 = vmatprep.subr.bf16.mxu0 0
        %1652 = vmatpush1.bf16.xpose.msra.mxu0 0
        %1653 = vmatprep.subr.bf16.mxu0 0
        %1654 = vmatpush1.bf16.xpose.msra.mxu0 0
        %1655 = vmatprep.subr.bf16.mxu0 0
        %1656 = vmatpush1.bf16.xpose.msra.mxu0 0
        %1657 = vmatprep.subr.bf16.mxu0 0
        %1658 = vmatpush1.bf16.xpose.msra.mxu0 0
        %1659 = vmatprep.mubr.bf16.mxu0 0
        %1660 = vmatmul.mubr.bf16.gmra.mrb[0].mxu0 %v1622
        %v1661 = vpop.f32.mrb[0].mxu0
        %v1662 = vadd.f32 0.0, %v1661
        %v1663 = vpop.f32.mrb[0].mxu0
        %v1664 = vpop.f32.mrb[0].mxu0
        %v1665 = vpop.f32.mrb[0].mxu0
        %1666 = vdwg.mxu0
        %v1668 = vsel %vm1528, %v1483, 0
        %v1671 = vsel %vm1528, %v1503, 0
        %1673 = vmatprep.subr.bf16.mxu0 0
        %1674 = vmatpush1.bf16.xpose.msra.mxu0 %v1671
        %1675 = vmatprep.subr.bf16.mxu0 0
        %1676 = vmatpush1.bf16.xpose.msra.mxu0 0
        %1677 = vmatprep.subr.bf16.mxu0 0
        %1678 = vmatpush1.bf16.xpose.msra.mxu0 0
        %1679 = vmatprep.subr.bf16.mxu0 0
        %1680 = vmatpush1.bf16.xpose.msra.mxu0 0
        %1681 = vmatprep.subr.bf16.mxu0 0
        %1682 = vmatpush1.bf16.xpose.msra.mxu0 0
        %1683 = vmatprep.subr.bf16.mxu0 0
        %1684 = vmatpush1.bf16.xpose.msra.mxu0 0
        %1685 = vmatprep.subr.bf16.mxu0 0
        %1686 = vmatpush1.bf16.xpose.msra.mxu0 0
        %1687 = vmatprep.subr.bf16.mxu0 0
        %1688 = vmatpush1.bf16.xpose.msra.mxu0 0
        %1689 = vmatprep.subr.bf16.mxu0 0
        %1690 = vmatpush1.bf16.xpose.msra.mxu0 0
        %1691 = vmatprep.subr.bf16.mxu0 0
        %1692 = vmatpush1.bf16.xpose.msra.mxu0 0
        %1693 = vmatprep.subr.bf16.mxu0 0
        %1694 = vmatpush1.bf16.xpose.msra.mxu0 0
        %1695 = vmatprep.subr.bf16.mxu0 0
        %1696 = vmatpush1.bf16.xpose.msra.mxu0 0
        %1697 = vmatprep.subr.bf16.mxu0 0
        %1698 = vmatpush1.bf16.xpose.msra.mxu0 0
        %1699 = vmatprep.subr.bf16.mxu0 0
        %1700 = vmatpush1.bf16.xpose.msra.mxu0 0
        %1701 = vmatprep.subr.bf16.mxu0 0
        %1702 = vmatpush1.bf16.xpose.msra.mxu0 0
        %1703 = vmatprep.subr.bf16.mxu0 0
        %1704 = vmatpush1.bf16.xpose.msra.mxu0 0
        %1705 = vmatprep.mubr.bf16.mxu0 0
        %1706 = vmatmul.mubr.bf16.gmra.mrb[0].mxu0 %v1668
        %v1707 = vpop.f32.mrb[0].mxu0
        %v1708 = vadd.f32 0.0, %v1707
        %v1709 = vpop.f32.mrb[0].mxu0
        %v1710 = vpop.f32.mrb[0].mxu0
        %v1711 = vpop.f32.mrb[0].mxu0
        %1712 = vdwg.mxu0
        %v1714 = vsel %vm1528, %v1484, 0
        %v1717 = vsel %vm1528, %v1504, 0
        %1719 = vmatprep.subr.bf16.mxu0 0
        %1720 = vmatpush1.bf16.xpose.msra.mxu0 %v1717
        %1721 = vmatprep.subr.bf16.mxu0 0
        %1722 = vmatpush1.bf16.xpose.msra.mxu0 0
        %1723 = vmatprep.subr.bf16.mxu0 0
        %1724 = vmatpush1.bf16.xpose.msra.mxu0 0
        %1725 = vmatprep.subr.bf16.mxu0 0
        %1726 = vmatpush1.bf16.xpose.msra.mxu0 0
        %1727 = vmatprep.subr.bf16.mxu0 0
        %1728 = vmatpush1.bf16.xpose.msra.mxu0 0
        %1729 = vmatprep.subr.bf16.mxu0 0
        %1730 = vmatpush1.bf16.xpose.msra.mxu0 0
        %1731 = vmatprep.subr.bf16.mxu0 0
        %1732 = vmatpush1.bf16.xpose.msra.mxu0 0
        %1733 = vmatprep.subr.bf16.mxu0 0
        %1734 = vmatpush1.bf16.xpose.msra.mxu0 0
        %1735 = vmatprep.subr.bf16.mxu0 0
        %1736 = vmatpush1.bf16.xpose.msra.mxu0 0
        %1737 = vmatprep.subr.bf16.mxu0 0
        %1738 = vmatpush1.bf16.xpose.msra.mxu0 0
        %1739 = vmatprep.subr.bf16.mxu0 0
        %1740 = vmatpush1.bf16.xpose.msra.mxu0 0
        %1741 = vmatprep.subr.bf16.mxu0 0
        %1742 = vmatpush1.bf16.xpose.msra.mxu0 0
        %1743 = vmatprep.subr.bf16.mxu0 0
        %1744 = vmatpush1.bf16.xpose.msra.mxu0 0
        %1745 = vmatprep.subr.bf16.mxu0 0
        %1746 = vmatpush1.bf16.xpose.msra.mxu0 0
        %1747 = vmatprep.subr.bf16.mxu0 0
        %1748 = vmatpush1.bf16.xpose.msra.mxu0 0
        %1749 = vmatprep.subr.bf16.mxu0 0
        %1750 = vmatpush1.bf16.xpose.msra.mxu0 0
        %1751 = vmatprep.mubr.bf16.mxu0 0
        %1752 = vmatmul.mubr.bf16.gmra.mrb[0].mxu0 %v1714
        %v1753 = vpop.f32.mrb[0].mxu0
        %v1754 = vadd.f32 0.0, %v1753
        %v1755 = vpop.f32.mrb[0].mxu0
        %v1756 = vpop.f32.mrb[0].mxu0
        %v1757 = vpop.f32.mrb[0].mxu0
        %1758 = vdwg.mxu0
        %v1760 = vsel %vm1528, %v1485, 0
        %v1763 = vsel %vm1528, %v1505, 0
        %1765 = vmatprep.subr.bf16.mxu0 0
        %1766 = vmatpush1.bf16.xpose.msra.mxu0 %v1763
        %1767 = vmatprep.subr.bf16.mxu0 0
        %1768 = vmatpush1.bf16.xpose.msra.mxu0 0
        %1769 = vmatprep.subr.bf16.mxu0 0
        %1770 = vmatpush1.bf16.xpose.msra.mxu0 0
        %1771 = vmatprep.subr.bf16.mxu0 0
        %1772 = vmatpush1.bf16.xpose.msra.mxu0 0
        %1773 = vmatprep.subr.bf16.mxu0 0
        %1774 = vmatpush1.bf16.xpose.msra.mxu0 0
        %1775 = vmatprep.subr.bf16.mxu0 0
        %1776 = vmatpush1.bf16.xpose.msra.mxu0 0
        %1777 = vmatprep.subr.bf16.mxu0 0
        %1778 = vmatpush1.bf16.xpose.msra.mxu0 0
        %1779 = vmatprep.subr.bf16.mxu0 0
        %1780 = vmatpush1.bf16.xpose.msra.mxu0 0
        %1781 = vmatprep.subr.bf16.mxu0 0
        %1782 = vmatpush1.bf16.xpose.msra.mxu0 0
        %1783 = vmatprep.subr.bf16.mxu0 0
        %1784 = vmatpush1.bf16.xpose.msra.mxu0 0
        %1785 = vmatprep.subr.bf16.mxu0 0
        %1786 = vmatpush1.bf16.xpose.msra.mxu0 0
        %1787 = vmatprep.subr.bf16.mxu0 0
        %1788 = vmatpush1.bf16.xpose.msra.mxu0 0
        %1789 = vmatprep.subr.bf16.mxu0 0
        %1790 = vmatpush1.bf16.xpose.msra.mxu0 0
        %1791 = vmatprep.subr.bf16.mxu0 0
        %1792 = vmatpush1.bf16.xpose.msra.mxu0 0
        %1793 = vmatprep.subr.bf16.mxu0 0
        %1794 = vmatpush1.bf16.xpose.msra.mxu0 0
        %1795 = vmatprep.subr.bf16.mxu0 0
        %1796 = vmatpush1.bf16.xpose.msra.mxu0 0
        %1797 = vmatprep.mubr.bf16.mxu0 0
        %1798 = vmatmul.mubr.bf16.gmra.mrb[0].mxu0 %v1760
        %v1799 = vpop.f32.mrb[0].mxu0
        %v1800 = vadd.f32 0.0, %v1799
        %v1801 = vpop.f32.mrb[0].mxu0
        %v1802 = vpop.f32.mrb[0].mxu0
        %v1803 = vpop.f32.mrb[0].mxu0
        %1804 = vdwg.mxu0
        %v1806 = vsel %vm1528, %v1486, 0
        %v1809 = vsel %vm1528, %v1506, 0
        %1811 = vmatprep.subr.bf16.mxu0 0
        %1812 = vmatpush1.bf16.xpose.msra.mxu0 %v1809
        %1813 = vmatprep.subr.bf16.mxu0 0
        %1814 = vmatpush1.bf16.xpose.msra.mxu0 0
        %1815 = vmatprep.subr.bf16.mxu0 0
        %1816 = vmatpush1.bf16.xpose.msra.mxu0 0
        %1817 = vmatprep.subr.bf16.mxu0 0
        %1818 = vmatpush1.bf16.xpose.msra.mxu0 0
        %1819 = vmatprep.subr.bf16.mxu0 0
        %1820 = vmatpush1.bf16.xpose.msra.mxu0 0
        %1821 = vmatprep.subr.bf16.mxu0 0
        %1822 = vmatpush1.bf16.xpose.msra.mxu0 0
        %1823 = vmatprep.subr.bf16.mxu0 0
        %1824 = vmatpush1.bf16.xpose.msra.mxu0 0
        %1825 = vmatprep.subr.bf16.mxu0 0
        %1826 = vmatpush1.bf16.xpose.msra.mxu0 0
        %1827 = vmatprep.subr.bf16.mxu0 0
        %1828 = vmatpush1.bf16.xpose.msra.mxu0 0
        %1829 = vmatprep.subr.bf16.mxu0 0
        %1830 = vmatpush1.bf16.xpose.msra.mxu0 0
        %1831 = vmatprep.subr.bf16.mxu0 0
        %1832 = vmatpush1.bf16.xpose.msra.mxu0 0
        %1833 = vmatprep.subr.bf16.mxu0 0
        %1834 = vmatpush1.bf16.xpose.msra.mxu0 0
        %1835 = vmatprep.subr.bf16.mxu0 0
        %1836 = vmatpush1.bf16.xpose.msra.mxu0 0
        %1837 = vmatprep.subr.bf16.mxu0 0
        %1838 = vmatpush1.bf16.xpose.msra.mxu0 0
        %1839 = vmatprep.subr.bf16.mxu0 0
        %1840 = vmatpush1.bf16.xpose.msra.mxu0 0
        %1841 = vmatprep.subr.bf16.mxu0 0
        %1842 = vmatpush1.bf16.xpose.msra.mxu0 0
        %1843 = vmatprep.mubr.bf16.mxu0 0
        %1844 = vmatmul.mubr.bf16.gmra.mrb[0].mxu0 %v1806
        %v1845 = vpop.f32.mrb[0].mxu0
        %v1846 = vadd.f32 0.0, %v1845
        %v1847 = vpop.f32.mrb[0].mxu0
        %v1848 = vpop.f32.mrb[0].mxu0
        %v1849 = vpop.f32.mrb[0].mxu0
        %1850 = vdwg.mxu0
        %v1852 = vsel %vm1528, %v1487, 0
        %v1855 = vsel %vm1528, %v1507, 0
        %1857 = vmatprep.subr.bf16.mxu0 0
        %1858 = vmatpush1.bf16.xpose.msra.mxu0 %v1855
        %1859 = vmatprep.subr.bf16.mxu0 0
        %1860 = vmatpush1.bf16.xpose.msra.mxu0 0
        %1861 = vmatprep.subr.bf16.mxu0 0
        %1862 = vmatpush1.bf16.xpose.msra.mxu0 0
        %1863 = vmatprep.subr.bf16.mxu0 0
        %1864 = vmatpush1.bf16.xpose.msra.mxu0 0
        %1865 = vmatprep.subr.bf16.mxu0 0
        %1866 = vmatpush1.bf16.xpose.msra.mxu0 0
        %1867 = vmatprep.subr.bf16.mxu0 0
        %1868 = vmatpush1.bf16.xpose.msra.mxu0 0
        %1869 = vmatprep.subr.bf16.mxu0 0
        %1870 = vmatpush1.bf16.xpose.msra.mxu0 0
        %1871 = vmatprep.subr.bf16.mxu0 0
        %1872 = vmatpush1.bf16.xpose.msra.mxu0 0
        %1873 = vmatprep.subr.bf16.mxu0 0
        %1874 = vmatpush1.bf16.xpose.msra.mxu0 0
        %1875 = vmatprep.subr.bf16.mxu0 0
        %1876 = vmatpush1.bf16.xpose.msra.mxu0 0
        %1877 = vmatprep.subr.bf16.mxu0 0
        %1878 = vmatpush1.bf16.xpose.msra.mxu0 0
        %1879 = vmatprep.subr.bf16.mxu0 0
        %1880 = vmatpush1.bf16.xpose.msra.mxu0 0
        %1881 = vmatprep.subr.bf16.mxu0 0
        %1882 = vmatpush1.bf16.xpose.msra.mxu0 0
        %1883 = vmatprep.subr.bf16.mxu0 0
        %1884 = vmatpush1.bf16.xpose.msra.mxu0 0
        %1885 = vmatprep.subr.bf16.mxu0 0
        %1886 = vmatpush1.bf16.xpose.msra.mxu0 0
        %1887 = vmatprep.subr.bf16.mxu0 0
        %1888 = vmatpush1.bf16.xpose.msra.mxu0 0
        %1889 = vmatprep.mubr.bf16.mxu0 0
        %1890 = vmatmul.mubr.bf16.gmra.mrb[0].mxu0 %v1852
        %v1891 = vpop.f32.mrb[0].mxu0
        %v1892 = vadd.f32 0.0, %v1891
        %v1893 = vpop.f32.mrb[0].mxu0
        %v1894 = vpop.f32.mrb[0].mxu0
        %v1895 = vpop.f32.mrb[0].mxu0
        %1896 = vdwg.mxu0
        %v1897 = vsel %vm750, 1, 0
        %vm1898 = vcmp.eq.s32.totalorder %v1897, 1
        %v1899 = vsel %vm1898, %v1570, -1000000.0
        %v1900 = vsel %vm1898, %v1616, -1000000.0
        %v1901 = vsel %vm1898, %v1662, -1000000.0
        %v1902 = vsel %vm1898, %v1708, -1000000.0
        %v1903 = vsel %vm1898, %v1754, -1000000.0
        %v1904 = vsel %vm1898, %v1800, -1000000.0
        %v1905 = vsel %vm1898, %v1846, -1000000.0
        %v1906 = vsel %vm1898, %v1892, -1000000.0
        %v1907 = vsel %vm1528, %v1899, -inf
        %1908 = vmax.xlane.f32.xlu0 %v1907
        %v1909 = vpop.xlane.xlu0 %1908
        %v1910 = vsel %vm1528, %v1900, -inf
        %1911 = vmax.xlane.f32.xlu0 %v1910
        %v1912 = vpop.xlane.xlu0 %1911
        %v1913 = vsel %vm1528, %v1901, -inf
        %1914 = vmax.xlane.f32.xlu0 %v1913
        %v1915 = vpop.xlane.xlu0 %1914
        %v1916 = vsel %vm1528, %v1902, -inf
        %1917 = vmax.xlane.f32.xlu0 %v1916
        %v1918 = vpop.xlane.xlu0 %1917
        %v1919 = vsel %vm1528, %v1903, -inf
        %1920 = vmax.xlane.f32.xlu0 %v1919
        %v1921 = vpop.xlane.xlu0 %1920
        %v1922 = vsel %vm1528, %v1904, -inf
        %1923 = vmax.xlane.f32.xlu0 %v1922
        %v1924 = vpop.xlane.xlu0 %1923
        %v1925 = vsel %vm1528, %v1905, -inf
        %1926 = vmax.xlane.f32.xlu0 %v1925
        %v1927 = vpop.xlane.xlu0 %1926
        %v1928 = vsel %vm1528, %v1906, -inf
        %1929 = vmax.xlane.f32.xlu0 %v1928
        %v1930 = vpop.xlane.xlu0 %1929
        %v1931 = vsub.f32 %v1899, %v1909
        %v1932 = vsub.f32 %v1900, %v1912
        %v1933 = vsub.f32 %v1901, %v1915
        %v1934 = vsub.f32 %v1902, %v1918
        %v1935 = vsub.f32 %v1903, %v1921
        %v1936 = vsub.f32 %v1904, %v1924
        %v1937 = vsub.f32 %v1905, %v1927
        %v1938 = vsub.f32 %v1906, %v1930
        %v1939 = vmul.f32 %v1931, 1.442695
        %v1940 = vpow.pop %v1939
        %v1941 = vmul.f32 %v1932, 1.442695
        %v1942 = vpow.pop %v1941
        %v1943 = vmul.f32 %v1933, 1.442695
        %v1944 = vpow.pop %v1943
        %v1945 = vmul.f32 %v1934, 1.442695
        %v1946 = vpow.pop %v1945
        %v1947 = vmul.f32 %v1935, 1.442695
        %v1948 = vpow.pop %v1947
        %v1949 = vmul.f32 %v1936, 1.442695
        %v1950 = vpow.pop %v1949
        %v1951 = vmul.f32 %v1937, 1.442695
        %v1952 = vpow.pop %v1951
        %v1953 = vmul.f32 %v1938, 1.442695
        %v1954 = vpow.pop %v1953
        %v1955 = vsel %vm1528, %v1940, 0.0
        %1956 = vadd.xlane.f32.xlu0 %v1955
        %v1957 = vpop.xlane.xlu0 %1956
        %v1958 = vsel %vm1528, %v1942, 0.0
        %1959 = vadd.xlane.f32.xlu0 %v1958
        %v1960 = vpop.xlane.xlu0 %1959
        %v1961 = vsel %vm1528, %v1944, 0.0
        %1962 = vadd.xlane.f32.xlu0 %v1961
        %v1963 = vpop.xlane.xlu0 %1962
        %v1964 = vsel %vm1528, %v1946, 0.0
        %1965 = vadd.xlane.f32.xlu0 %v1964
        %v1966 = vpop.xlane.xlu0 %1965
        %v1967 = vsel %vm1528, %v1948, 0.0
        %1968 = vadd.xlane.f32.xlu0 %v1967
        %v1969 = vpop.xlane.xlu0 %1968
        %v1970 = vsel %vm1528, %v1950, 0.0
        %1971 = vadd.xlane.f32.xlu0 %v1970
        %v1972 = vpop.xlane.xlu0 %1971
        %v1973 = vsel %vm1528, %v1952, 0.0
        %1974 = vadd.xlane.f32.xlu0 %v1973
        %v1975 = vpop.xlane.xlu0 %1974
        %v1976 = vsel %vm1528, %v1954, 0.0
        %1977 = vadd.xlane.f32.xlu0 %v1976
        %v1978 = vpop.xlane.xlu0 %1977
        %v1979 = vpack.c.bf16 %v1940, %v1940
        %v1980 = vpack.c.bf16 %v1942, %v1942
        %v1981 = vpack.c.bf16 %v1944, %v1944
        %v1982 = vpack.c.bf16 %v1946, %v1946
        %v1983 = vpack.c.bf16 %v1948, %v1948
        %v1984 = vpack.c.bf16 %v1950, %v1950
        %v1985 = vpack.c.bf16 %v1952, %v1952
        %v1986 = vpack.c.bf16 %v1954, %v1954
        %v1988 = vsel %vm1528, %v1979, 0
        %vm1990 = vcmask 1043456
        %v1992 = vsel %vm1990, %v1520, 0
        %1994 = vmatprep.subr.bf16.mxu0 0
        %1995 = vmatpush1.bf16.msra.mxu0 %v1992
        %1996 = vmatprep.subr.bf16.mxu0 0
        %1997 = vmatpush1.bf16.msra.mxu0 0
        %1998 = vmatprep.subr.bf16.mxu0 0
        %1999 = vmatpush1.bf16.msra.mxu0 0
        %2000 = vmatprep.subr.bf16.mxu0 0
        %2001 = vmatpush1.bf16.msra.mxu0 0
        %2002 = vmatprep.subr.bf16.mxu0 0
        %2003 = vmatpush1.bf16.msra.mxu0 0
        %2004 = vmatprep.subr.bf16.mxu0 0
        %2005 = vmatpush1.bf16.msra.mxu0 0
        %2006 = vmatprep.subr.bf16.mxu0 0
        %2007 = vmatpush1.bf16.msra.mxu0 0
        %2008 = vmatprep.subr.bf16.mxu0 0
        %2009 = vmatpush1.bf16.msra.mxu0 0
        %2010 = vmatprep.subr.bf16.mxu0 0
        %2011 = vmatpush1.bf16.msra.mxu0 0
        %2012 = vmatprep.subr.bf16.mxu0 0
        %2013 = vmatpush1.bf16.msra.mxu0 0
        %2014 = vmatprep.subr.bf16.mxu0 0
        %2015 = vmatpush1.bf16.msra.mxu0 0
        %2016 = vmatprep.subr.bf16.mxu0 0
        %2017 = vmatpush1.bf16.msra.mxu0 0
        %2018 = vmatprep.subr.bf16.mxu0 0
        %2019 = vmatpush1.bf16.msra.mxu0 0
        %2020 = vmatprep.subr.bf16.mxu0 0
        %2021 = vmatpush1.bf16.msra.mxu0 0
        %2022 = vmatprep.subr.bf16.mxu0 0
        %2023 = vmatpush1.bf16.msra.mxu0 0
        %2024 = vmatprep.subr.bf16.mxu0 0
        %2025 = vmatpush1.bf16.msra.mxu0 0
        %2026 = vmatprep.mubr.bf16.mxu0 0
        %2027 = vmatmul.mubr.bf16.gmra.mrb[0].mxu0 %v1988
        %v2028 = vpop.f32.mrb[0].mxu0
        %v2029 = vadd.f32 0.0, %v2028
        %v2030 = vpop.f32.mrb[0].mxu0
        %v2031 = vpop.f32.mrb[0].mxu0
        %v2032 = vpop.f32.mrb[0].mxu0
        %2033 = vdwg.mxu0
        %v2035 = vsel %vm1528, %v1980, 0
        %v2038 = vsel %vm1990, %v1521, 0
        %2040 = vmatprep.subr.bf16.mxu0 0
        %2041 = vmatpush1.bf16.msra.mxu0 %v2038
        %2042 = vmatprep.subr.bf16.mxu0 0
        %2043 = vmatpush1.bf16.msra.mxu0 0
        %2044 = vmatprep.subr.bf16.mxu0 0
        %2045 = vmatpush1.bf16.msra.mxu0 0
        %2046 = vmatprep.subr.bf16.mxu0 0
        %2047 = vmatpush1.bf16.msra.mxu0 0
        %2048 = vmatprep.subr.bf16.mxu0 0
        %2049 = vmatpush1.bf16.msra.mxu0 0
        %2050 = vmatprep.subr.bf16.mxu0 0
        %2051 = vmatpush1.bf16.msra.mxu0 0
        %2052 = vmatprep.subr.bf16.mxu0 0
        %2053 = vmatpush1.bf16.msra.mxu0 0
        %2054 = vmatprep.subr.bf16.mxu0 0
        %2055 = vmatpush1.bf16.msra.mxu0 0
        %2056 = vmatprep.subr.bf16.mxu0 0
        %2057 = vmatpush1.bf16.msra.mxu0 0
        %2058 = vmatprep.subr.bf16.mxu0 0
        %2059 = vmatpush1.bf16.msra.mxu0 0
        %2060 = vmatprep.subr.bf16.mxu0 0
        %2061 = vmatpush1.bf16.msra.mxu0 0
        %2062 = vmatprep.subr.bf16.mxu0 0
        %2063 = vmatpush1.bf16.msra.mxu0 0
        %2064 = vmatprep.subr.bf16.mxu0 0
        %2065 = vmatpush1.bf16.msra.mxu0 0
        %2066 = vmatprep.subr.bf16.mxu0 0
        %2067 = vmatpush1.bf16.msra.mxu0 0
        %2068 = vmatprep.subr.bf16.mxu0 0
        %2069 = vmatpush1.bf16.msra.mxu0 0
        %2070 = vmatprep.subr.bf16.mxu0 0
        %2071 = vmatpush1.bf16.msra.mxu0 0
        %2072 = vmatprep.mubr.bf16.mxu0 0
        %2073 = vmatmul.mubr.bf16.gmra.mrb[0].mxu0 %v2035
        %v2074 = vpop.f32.mrb[0].mxu0
        %v2075 = vadd.f32 0.0, %v2074
        %v2076 = vpop.f32.mrb[0].mxu0
        %v2077 = vpop.f32.mrb[0].mxu0
        %v2078 = vpop.f32.mrb[0].mxu0
        %2079 = vdwg.mxu0
        %v2081 = vsel %vm1528, %v1981, 0
        %v2084 = vsel %vm1990, %v1522, 0
        %2086 = vmatprep.subr.bf16.mxu0 0
        %2087 = vmatpush1.bf16.msra.mxu0 %v2084
        %2088 = vmatprep.subr.bf16.mxu0 0
        %2089 = vmatpush1.bf16.msra.mxu0 0
        %2090 = vmatprep.subr.bf16.mxu0 0
        %2091 = vmatpush1.bf16.msra.mxu0 0
        %2092 = vmatprep.subr.bf16.mxu0 0
        %2093 = vmatpush1.bf16.msra.mxu0 0
        %2094 = vmatprep.subr.bf16.mxu0 0
        %2095 = vmatpush1.bf16.msra.mxu0 0
        %2096 = vmatprep.subr.bf16.mxu0 0
        %2097 = vmatpush1.bf16.msra.mxu0 0
        %2098 = vmatprep.subr.bf16.mxu0 0
        %2099 = vmatpush1.bf16.msra.mxu0 0
        %2100 = vmatprep.subr.bf16.mxu0 0
        %2101 = vmatpush1.bf16.msra.mxu0 0
        %2102 = vmatprep.subr.bf16.mxu0 0
        %2103 = vmatpush1.bf16.msra.mxu0 0
        %2104 = vmatprep.subr.bf16.mxu0 0
        %2105 = vmatpush1.bf16.msra.mxu0 0
        %2106 = vmatprep.subr.bf16.mxu0 0
        %2107 = vmatpush1.bf16.msra.mxu0 0
        %2108 = vmatprep.subr.bf16.mxu0 0
        %2109 = vmatpush1.bf16.msra.mxu0 0
        %2110 = vmatprep.subr.bf16.mxu0 0
        %2111 = vmatpush1.bf16.msra.mxu0 0
        %2112 = vmatprep.subr.bf16.mxu0 0
        %2113 = vmatpush1.bf16.msra.mxu0 0
        %2114 = vmatprep.subr.bf16.mxu0 0
        %2115 = vmatpush1.bf16.msra.mxu0 0
        %2116 = vmatprep.subr.bf16.mxu0 0
        %2117 = vmatpush1.bf16.msra.mxu0 0
        %2118 = vmatprep.mubr.bf16.mxu0 0
        %2119 = vmatmul.mubr.bf16.gmra.mrb[0].mxu0 %v2081
        %v2120 = vpop.f32.mrb[0].mxu0
        %v2121 = vadd.f32 0.0, %v2120
        %v2122 = vpop.f32.mrb[0].mxu0
        %v2123 = vpop.f32.mrb[0].mxu0
        %v2124 = vpop.f32.mrb[0].mxu0
        %2125 = vdwg.mxu0
        %v2127 = vsel %vm1528, %v1982, 0
        %v2130 = vsel %vm1990, %v1523, 0
        %2132 = vmatprep.subr.bf16.mxu0 0
        %2133 = vmatpush1.bf16.msra.mxu0 %v2130
        %2134 = vmatprep.subr.bf16.mxu0 0
        %2135 = vmatpush1.bf16.msra.mxu0 0
        %2136 = vmatprep.subr.bf16.mxu0 0
        %2137 = vmatpush1.bf16.msra.mxu0 0
        %2138 = vmatprep.subr.bf16.mxu0 0
        %2139 = vmatpush1.bf16.msra.mxu0 0
        %2140 = vmatprep.subr.bf16.mxu0 0
        %2141 = vmatpush1.bf16.msra.mxu0 0
        %2142 = vmatprep.subr.bf16.mxu0 0
        %2143 = vmatpush1.bf16.msra.mxu0 0
        %2144 = vmatprep.subr.bf16.mxu0 0
        %2145 = vmatpush1.bf16.msra.mxu0 0
        %2146 = vmatprep.subr.bf16.mxu0 0
        %2147 = vmatpush1.bf16.msra.mxu0 0
        %2148 = vmatprep.subr.bf16.mxu0 0
        %2149 = vmatpush1.bf16.msra.mxu0 0
        %2150 = vmatprep.subr.bf16.mxu0 0
        %2151 = vmatpush1.bf16.msra.mxu0 0
        %2152 = vmatprep.subr.bf16.mxu0 0
        %2153 = vmatpush1.bf16.msra.mxu0 0
        %2154 = vmatprep.subr.bf16.mxu0 0
        %2155 = vmatpush1.bf16.msra.mxu0 0
        %2156 = vmatprep.subr.bf16.mxu0 0
        %2157 = vmatpush1.bf16.msra.mxu0 0
        %2158 = vmatprep.subr.bf16.mxu0 0
        %2159 = vmatpush1.bf16.msra.mxu0 0
        %2160 = vmatprep.subr.bf16.mxu0 0
        %2161 = vmatpush1.bf16.msra.mxu0 0
        %2162 = vmatprep.subr.bf16.mxu0 0
        %2163 = vmatpush1.bf16.msra.mxu0 0
        %2164 = vmatprep.mubr.bf16.mxu0 0
        %2165 = vmatmul.mubr.bf16.gmra.mrb[0].mxu0 %v2127
        %v2166 = vpop.f32.mrb[0].mxu0
        %v2167 = vadd.f32 0.0, %v2166
        %v2168 = vpop.f32.mrb[0].mxu0
        %v2169 = vpop.f32.mrb[0].mxu0
        %v2170 = vpop.f32.mrb[0].mxu0
        %2171 = vdwg.mxu0
        %v2173 = vsel %vm1528, %v1983, 0
        %v2176 = vsel %vm1990, %v1524, 0
        %2178 = vmatprep.subr.bf16.mxu0 0
        %2179 = vmatpush1.bf16.msra.mxu0 %v2176
        %2180 = vmatprep.subr.bf16.mxu0 0
        %2181 = vmatpush1.bf16.msra.mxu0 0
        %2182 = vmatprep.subr.bf16.mxu0 0
        %2183 = vmatpush1.bf16.msra.mxu0 0
        %2184 = vmatprep.subr.bf16.mxu0 0
        %2185 = vmatpush1.bf16.msra.mxu0 0
        %2186 = vmatprep.subr.bf16.mxu0 0
        %2187 = vmatpush1.bf16.msra.mxu0 0
        %2188 = vmatprep.subr.bf16.mxu0 0
        %2189 = vmatpush1.bf16.msra.mxu0 0
        %2190 = vmatprep.subr.bf16.mxu0 0
        %2191 = vmatpush1.bf16.msra.mxu0 0
        %2192 = vmatprep.subr.bf16.mxu0 0
        %2193 = vmatpush1.bf16.msra.mxu0 0
        %2194 = vmatprep.subr.bf16.mxu0 0
        %2195 = vmatpush1.bf16.msra.mxu0 0
        %2196 = vmatprep.subr.bf16.mxu0 0
        %2197 = vmatpush1.bf16.msra.mxu0 0
        %2198 = vmatprep.subr.bf16.mxu0 0
        %2199 = vmatpush1.bf16.msra.mxu0 0
        %2200 = vmatprep.subr.bf16.mxu0 0
        %2201 = vmatpush1.bf16.msra.mxu0 0
        %2202 = vmatprep.subr.bf16.mxu0 0
        %2203 = vmatpush1.bf16.msra.mxu0 0
        %2204 = vmatprep.subr.bf16.mxu0 0
        %2205 = vmatpush1.bf16.msra.mxu0 0
        %2206 = vmatprep.subr.bf16.mxu0 0
        %2207 = vmatpush1.bf16.msra.mxu0 0
        %2208 = vmatprep.subr.bf16.mxu0 0
        %2209 = vmatpush1.bf16.msra.mxu0 0
        %2210 = vmatprep.mubr.bf16.mxu0 0
        %2211 = vmatmul.mubr.bf16.gmra.mrb[0].mxu0 %v2173
        %v2212 = vpop.f32.mrb[0].mxu0
        %v2213 = vadd.f32 0.0, %v2212
        %v2214 = vpop.f32.mrb[0].mxu0
        %v2215 = vpop.f32.mrb[0].mxu0
        %v2216 = vpop.f32.mrb[0].mxu0
        %2217 = vdwg.mxu0
        %v2219 = vsel %vm1528, %v1984, 0
        %v2222 = vsel %vm1990, %v1525, 0
        %2224 = vmatprep.subr.bf16.mxu0 0
        %2225 = vmatpush1.bf16.msra.mxu0 %v2222
        %2226 = vmatprep.subr.bf16.mxu0 0
        %2227 = vmatpush1.bf16.msra.mxu0 0
        %2228 = vmatprep.subr.bf16.mxu0 0
        %2229 = vmatpush1.bf16.msra.mxu0 0
        %2230 = vmatprep.subr.bf16.mxu0 0
        %2231 = vmatpush1.bf16.msra.mxu0 0
        %2232 = vmatprep.subr.bf16.mxu0 0
        %2233 = vmatpush1.bf16.msra.mxu0 0
        %2234 = vmatprep.subr.bf16.mxu0 0
        %2235 = vmatpush1.bf16.msra.mxu0 0
        %2236 = vmatprep.subr.bf16.mxu0 0
        %2237 = vmatpush1.bf16.msra.mxu0 0
        %2238 = vmatprep.subr.bf16.mxu0 0
        %2239 = vmatpush1.bf16.msra.mxu0 0
        %2240 = vmatprep.subr.bf16.mxu0 0
        %2241 = vmatpush1.bf16.msra.mxu0 0
        %2242 = vmatprep.subr.bf16.mxu0 0
        %2243 = vmatpush1.bf16.msra.mxu0 0
        %2244 = vmatprep.subr.bf16.mxu0 0
        %2245 = vmatpush1.bf16.msra.mxu0 0
        %2246 = vmatprep.subr.bf16.mxu0 0
        %2247 = vmatpush1.bf16.msra.mxu0 0
        %2248 = vmatprep.subr.bf16.mxu0 0
        %2249 = vmatpush1.bf16.msra.mxu0 0
        %2250 = vmatprep.subr.bf16.mxu0 0
        %2251 = vmatpush1.bf16.msra.mxu0 0
        %2252 = vmatprep.subr.bf16.mxu0 0
        %2253 = vmatpush1.bf16.msra.mxu0 0
        %2254 = vmatprep.subr.bf16.mxu0 0
        %2255 = vmatpush1.bf16.msra.mxu0 0
        %2256 = vmatprep.mubr.bf16.mxu0 0
        %2257 = vmatmul.mubr.bf16.gmra.mrb[0].mxu0 %v2219
        %v2258 = vpop.f32.mrb[0].mxu0
        %v2259 = vadd.f32 0.0, %v2258
        %v2260 = vpop.f32.mrb[0].mxu0
        %v2261 = vpop.f32.mrb[0].mxu0
        %v2262 = vpop.f32.mrb[0].mxu0
        %2263 = vdwg.mxu0
        %v2265 = vsel %vm1528, %v1985, 0
        %v2268 = vsel %vm1990, %v1526, 0
        %2270 = vmatprep.subr.bf16.mxu0 0
        %2271 = vmatpush1.bf16.msra.mxu0 %v2268
        %2272 = vmatprep.subr.bf16.mxu0 0
        %2273 = vmatpush1.bf16.msra.mxu0 0
        %2274 = vmatprep.subr.bf16.mxu0 0
        %2275 = vmatpush1.bf16.msra.mxu0 0
        %2276 = vmatprep.subr.bf16.mxu0 0
        %2277 = vmatpush1.bf16.msra.mxu0 0
        %2278 = vmatprep.subr.bf16.mxu0 0
        %2279 = vmatpush1.bf16.msra.mxu0 0
        %2280 = vmatprep.subr.bf16.mxu0 0
        %2281 = vmatpush1.bf16.msra.mxu0 0
        %2282 = vmatprep.subr.bf16.mxu0 0
        %2283 = vmatpush1.bf16.msra.mxu0 0
        %2284 = vmatprep.subr.bf16.mxu0 0
        %2285 = vmatpush1.bf16.msra.mxu0 0
        %2286 = vmatprep.subr.bf16.mxu0 0
        %2287 = vmatpush1.bf16.msra.mxu0 0
        %2288 = vmatprep.subr.bf16.mxu0 0
        %2289 = vmatpush1.bf16.msra.mxu0 0
        %2290 = vmatprep.subr.bf16.mxu0 0
        %2291 = vmatpush1.bf16.msra.mxu0 0
        %2292 = vmatprep.subr.bf16.mxu0 0
        %2293 = vmatpush1.bf16.msra.mxu0 0
        %2294 = vmatprep.subr.bf16.mxu0 0
        %2295 = vmatpush1.bf16.msra.mxu0 0
        %2296 = vmatprep.subr.bf16.mxu0 0
        %2297 = vmatpush1.bf16.msra.mxu0 0
        %2298 = vmatprep.subr.bf16.mxu0 0
        %2299 = vmatpush1.bf16.msra.mxu0 0
        %2300 = vmatprep.subr.bf16.mxu0 0
        %2301 = vmatpush1.bf16.msra.mxu0 0
        %2302 = vmatprep.mubr.bf16.mxu0 0
        %2303 = vmatmul.mubr.bf16.gmra.mrb[0].mxu0 %v2265
        %v2304 = vpop.f32.mrb[0].mxu0
        %v2305 = vadd.f32 0.0, %v2304
        %v2306 = vpop.f32.mrb[0].mxu0
        %v2307 = vpop.f32.mrb[0].mxu0
        %v2308 = vpop.f32.mrb[0].mxu0
        %2309 = vdwg.mxu0
        %v2311 = vsel %vm1528, %v1986, 0
        %v2314 = vsel %vm1990, %v1527, 0
        %2316 = vmatprep.subr.bf16.mxu0 0
        %2317 = vmatpush1.bf16.msra.mxu0 %v2314
        %2318 = vmatprep.subr.bf16.mxu0 0
        %2319 = vmatpush1.bf16.msra.mxu0 0
        %2320 = vmatprep.subr.bf16.mxu0 0
        %2321 = vmatpush1.bf16.msra.mxu0 0
        %2322 = vmatprep.subr.bf16.mxu0 0
        %2323 = vmatpush1.bf16.msra.mxu0 0
        %2324 = vmatprep.subr.bf16.mxu0 0
        %2325 = vmatpush1.bf16.msra.mxu0 0
        %2326 = vmatprep.subr.bf16.mxu0 0
        %2327 = vmatpush1.bf16.msra.mxu0 0
        %2328 = vmatprep.subr.bf16.mxu0 0
        %2329 = vmatpush1.bf16.msra.mxu0 0
        %2330 = vmatprep.subr.bf16.mxu0 0
        %2331 = vmatpush1.bf16.msra.mxu0 0
        %2332 = vmatprep.subr.bf16.mxu0 0
        %2333 = vmatpush1.bf16.msra.mxu0 0
        %2334 = vmatprep.subr.bf16.mxu0 0
        %2335 = vmatpush1.bf16.msra.mxu0 0
        %2336 = vmatprep.subr.bf16.mxu0 0
        %2337 = vmatpush1.bf16.msra.mxu0 0
        %2338 = vmatprep.subr.bf16.mxu0 0
        %2339 = vmatpush1.bf16.msra.mxu0 0
        %2340 = vmatprep.subr.bf16.mxu0 0
        %2341 = vmatpush1.bf16.msra.mxu0 0
        %2342 = vmatprep.subr.bf16.mxu0 0
        %2343 = vmatpush1.bf16.msra.mxu0 0
        %2344 = vmatprep.subr.bf16.mxu0 0
        %2345 = vmatpush1.bf16.msra.mxu0 0
        %2346 = vmatprep.subr.bf16.mxu0 0
        %2347 = vmatpush1.bf16.msra.mxu0 0
        %2348 = vmatprep.mubr.bf16.mxu0 0
        %2349 = vmatmul.mubr.bf16.gmra.mrb[0].mxu0 %v2311
        %v2350 = vpop.f32.mrb[0].mxu0
        %v2351 = vadd.f32 0.0, %v2350
        %v2352 = vpop.f32.mrb[0].mxu0
        %v2353 = vpop.f32.mrb[0].mxu0
        %v2354 = vpop.f32.mrb[0].mxu0
        %2355 = vdwg.mxu0
        %v2356 = vrcp.pop %v1957
        %v2357 = vrcp.pop %v1960
        %v2358 = vrcp.pop %v1963
        %v2359 = vrcp.pop %v1966
        %v2360 = vrcp.pop %v1969
        %v2361 = vrcp.pop %v1972
        %v2362 = vrcp.pop %v1975
        %v2363 = vrcp.pop %v1978
        %v2364 = vmul.f32 %v2029, %v2356
        %v2365 = vmul.f32 %v2075, %v2357
        %v2366 = vmul.f32 %v2121, %v2358
        %v2367 = vmul.f32 %v2167, %v2359
        %v2368 = vmul.f32 %v2213, %v2360
        %v2369 = vmul.f32 %v2259, %v2361
        %v2370 = vmul.f32 %v2305, %v2362
        %v2371 = vmul.f32 %v2351, %v2363
        %v2372 = vpack.c.bf16 %v2365, %v2364
        %v2373 = vpack.c.bf16 %v2367, %v2366
        %v2374 = vpack.c.bf16 %v2369, %v2368
        %v2375 = vpack.c.bf16 %v2371, %v2370
        %v2376 = vld [vmem:[%s702] sm:$0xf]
        %v2377 = vld [vmem:[%s702 + $0x4] sm:$0xf]
        %v2378 = vld [vmem:[%s702 + $0x8] sm:$0xf]
        %v2379 = vld [vmem:[%s702 + $0xc] sm:$0xf]
        %v2381 = vsel %vm1528, %v2372, 0
        %v2384 = vsel %vm1990, %v2376, 0
        %2386 = vmatprep.subr.bf16.mxu0 0
        %2387 = vmatpush1.bf16.msra.mxu0 %v2384
        %2388 = vmatprep.subr.bf16.mxu0 0
        %2389 = vmatpush1.bf16.msra.mxu0 0
        %2390 = vmatprep.subr.bf16.mxu0 0
        %2391 = vmatpush1.bf16.msra.mxu0 0
        %2392 = vmatprep.subr.bf16.mxu0 0
        %2393 = vmatpush1.bf16.msra.mxu0 0
        %2394 = vmatprep.subr.bf16.mxu0 0
        %2395 = vmatpush1.bf16.msra.mxu0 0
        %2396 = vmatprep.subr.bf16.mxu0 0
        %2397 = vmatpush1.bf16.msra.mxu0 0
        %2398 = vmatprep.subr.bf16.mxu0 0
        %2399 = vmatpush1.bf16.msra.mxu0 0
        %2400 = vmatprep.subr.bf16.mxu0 0
        %2401 = vmatpush1.bf16.msra.mxu0 0
        %2402 = vmatprep.subr.bf16.mxu0 0
        %2403 = vmatpush1.bf16.msra.mxu0 0
        %2404 = vmatprep.subr.bf16.mxu0 0
        %2405 = vmatpush1.bf16.msra.mxu0 0
        %2406 = vmatprep.subr.bf16.mxu0 0
        %2407 = vmatpush1.bf16.msra.mxu0 0
        %2408 = vmatprep.subr.bf16.mxu0 0
        %2409 = vmatpush1.bf16.msra.mxu0 0
        %2410 = vmatprep.subr.bf16.mxu0 0
        %2411 = vmatpush1.bf16.msra.mxu0 0
        %2412 = vmatprep.subr.bf16.mxu0 0
        %2413 = vmatpush1.bf16.msra.mxu0 0
        %2414 = vmatprep.subr.bf16.mxu0 0
        %2415 = vmatpush1.bf16.msra.mxu0 0
        %2416 = vmatprep.subr.bf16.mxu0 0
        %2417 = vmatpush1.bf16.msra.mxu0 0
        %2418 = vmatprep.mubr.bf16.mxu0 0
        %2419 = vmatmul.mubr.bf16.gmra.mrb[0].mxu0 %v2381
        %v2420 = vpop.f32.mrb[0].mxu0
        %v2421 = vadd.f32 0.0, %v2420
        %v2422 = vpop.f32.mrb[0].mxu0
        %v2423 = vpop.f32.mrb[0].mxu0
        %v2424 = vadd.f32 0.0, %v2423
        %v2425 = vpop.f32.mrb[0].mxu0
        %2426 = vdwg.mxu0
        %v2428 = vsel %vm1528, %v2373, 0
        %v2431 = vsel %vm1990, %v2377, 0
        %2433 = vmatprep.subr.bf16.mxu0 0
        %2434 = vmatpush1.bf16.msra.mxu0 %v2431
        %2435 = vmatprep.subr.bf16.mxu0 0
        %2436 = vmatpush1.bf16.msra.mxu0 0
        %2437 = vmatprep.subr.bf16.mxu0 0
        %2438 = vmatpush1.bf16.msra.mxu0 0
        %2439 = vmatprep.subr.bf16.mxu0 0
        %2440 = vmatpush1.bf16.msra.mxu0 0
        %2441 = vmatprep.subr.bf16.mxu0 0
        %2442 = vmatpush1.bf16.msra.mxu0 0
        %2443 = vmatprep.subr.bf16.mxu0 0
        %2444 = vmatpush1.bf16.msra.mxu0 0
        %2445 = vmatprep.subr.bf16.mxu0 0
        %2446 = vmatpush1.bf16.msra.mxu0 0
        %2447 = vmatprep.subr.bf16.mxu0 0
        %2448 = vmatpush1.bf16.msra.mxu0 0
        %2449 = vmatprep.subr.bf16.mxu0 0
        %2450 = vmatpush1.bf16.msra.mxu0 0
        %2451 = vmatprep.subr.bf16.mxu0 0
        %2452 = vmatpush1.bf16.msra.mxu0 0
        %2453 = vmatprep.subr.bf16.mxu0 0
        %2454 = vmatpush1.bf16.msra.mxu0 0
        %2455 = vmatprep.subr.bf16.mxu0 0
        %2456 = vmatpush1.bf16.msra.mxu0 0
        %2457 = vmatprep.subr.bf16.mxu0 0
        %2458 = vmatpush1.bf16.msra.mxu0 0
        %2459 = vmatprep.subr.bf16.mxu0 0
        %2460 = vmatpush1.bf16.msra.mxu0 0
        %2461 = vmatprep.subr.bf16.mxu0 0
        %2462 = vmatpush1.bf16.msra.mxu0 0
        %2463 = vmatprep.subr.bf16.mxu0 0
        %2464 = vmatpush1.bf16.msra.mxu0 0
        %2465 = vmatprep.mubr.bf16.mxu0 0
        %2466 = vmatmul.mubr.bf16.gmra.mrb[0].mxu0 %v2428
        %v2467 = vpop.f32.mrb[0].mxu0
        %v2468 = vadd.f32 0.0, %v2467
        %v2469 = vpop.f32.mrb[0].mxu0
        %v2470 = vpop.f32.mrb[0].mxu0
        %v2471 = vadd.f32 0.0, %v2470
        %v2472 = vpop.f32.mrb[0].mxu0
        %2473 = vdwg.mxu0
        %v2475 = vsel %vm1528, %v2374, 0
        %v2478 = vsel %vm1990, %v2378, 0
        %2480 = vmatprep.subr.bf16.mxu0 0
        %2481 = vmatpush1.bf16.msra.mxu0 %v2478
        %2482 = vmatprep.subr.bf16.mxu0 0
        %2483 = vmatpush1.bf16.msra.mxu0 0
        %2484 = vmatprep.subr.bf16.mxu0 0
        %2485 = vmatpush1.bf16.msra.mxu0 0
        %2486 = vmatprep.subr.bf16.mxu0 0
        %2487 = vmatpush1.bf16.msra.mxu0 0
        %2488 = vmatprep.subr.bf16.mxu0 0
        %2489 = vmatpush1.bf16.msra.mxu0 0
        %2490 = vmatprep.subr.bf16.mxu0 0
        %2491 = vmatpush1.bf16.msra.mxu0 0
        %2492 = vmatprep.subr.bf16.mxu0 0
        %2493 = vmatpush1.bf16.msra.mxu0 0
        %2494 = vmatprep.subr.bf16.mxu0 0
        %2495 = vmatpush1.bf16.msra.mxu0 0
        %2496 = vmatprep.subr.bf16.mxu0 0
        %2497 = vmatpush1.bf16.msra.mxu0 0
        %2498 = vmatprep.subr.bf16.mxu0 0
        %2499 = vmatpush1.bf16.msra.mxu0 0
        %2500 = vmatprep.subr.bf16.mxu0 0
        %2501 = vmatpush1.bf16.msra.mxu0 0
        %2502 = vmatprep.subr.bf16.mxu0 0
        %2503 = vmatpush1.bf16.msra.mxu0 0
        %2504 = vmatprep.subr.bf16.mxu0 0
        %2505 = vmatpush1.bf16.msra.mxu0 0
        %2506 = vmatprep.subr.bf16.mxu0 0
        %2507 = vmatpush1.bf16.msra.mxu0 0
        %2508 = vmatprep.subr.bf16.mxu0 0
        %2509 = vmatpush1.bf16.msra.mxu0 0
        %2510 = vmatprep.subr.bf16.mxu0 0
        %2511 = vmatpush1.bf16.msra.mxu0 0
        %2512 = vmatprep.mubr.bf16.mxu0 0
        %2513 = vmatmul.mubr.bf16.gmra.mrb[0].mxu0 %v2475
        %v2514 = vpop.f32.mrb[0].mxu0
        %v2515 = vadd.f32 0.0, %v2514
        %v2516 = vpop.f32.mrb[0].mxu0
        %v2517 = vpop.f32.mrb[0].mxu0
        %v2518 = vadd.f32 0.0, %v2517
        %v2519 = vpop.f32.mrb[0].mxu0
        %2520 = vdwg.mxu0
        %v2522 = vsel %vm1528, %v2375, 0
        %v2525 = vsel %vm1990, %v2379, 0
        %2527 = vmatprep.subr.bf16.mxu0 0
        %2528 = vmatpush1.bf16.msra.mxu0 %v2525
        %2529 = vmatprep.subr.bf16.mxu0 0
        %2530 = vmatpush1.bf16.msra.mxu0 0
        %2531 = vmatprep.subr.bf16.mxu0 0
        %2532 = vmatpush1.bf16.msra.mxu0 0
        %2533 = vmatprep.subr.bf16.mxu0 0
        %2534 = vmatpush1.bf16.msra.mxu0 0
        %2535 = vmatprep.subr.bf16.mxu0 0
        %2536 = vmatpush1.bf16.msra.mxu0 0
        %2537 = vmatprep.subr.bf16.mxu0 0
        %2538 = vmatpush1.bf16.msra.mxu0 0
        %2539 = vmatprep.subr.bf16.mxu0 0
        %2540 = vmatpush1.bf16.msra.mxu0 0
        %2541 = vmatprep.subr.bf16.mxu0 0
        %2542 = vmatpush1.bf16.msra.mxu0 0
        %2543 = vmatprep.subr.bf16.mxu0 0
        %2544 = vmatpush1.bf16.msra.mxu0 0
        %2545 = vmatprep.subr.bf16.mxu0 0
        %2546 = vmatpush1.bf16.msra.mxu0 0
        %2547 = vmatprep.subr.bf16.mxu0 0
        %2548 = vmatpush1.bf16.msra.mxu0 0
        %2549 = vmatprep.subr.bf16.mxu0 0
        %2550 = vmatpush1.bf16.msra.mxu0 0
        %2551 = vmatprep.subr.bf16.mxu0 0
        %2552 = vmatpush1.bf16.msra.mxu0 0
        %2553 = vmatprep.subr.bf16.mxu0 0
        %2554 = vmatpush1.bf16.msra.mxu0 0
        %2555 = vmatprep.subr.bf16.mxu0 0
        %2556 = vmatpush1.bf16.msra.mxu0 0
        %2557 = vmatprep.subr.bf16.mxu0 0
        %2558 = vmatpush1.bf16.msra.mxu0 0
        %2559 = vmatprep.mubr.bf16.mxu0 0
        %2560 = vmatmul.mubr.bf16.gmra.mrb[0].mxu0 %v2522
        %v2561 = vpop.f32.mrb[0].mxu0
        %v2562 = vadd.f32 0.0, %v2561
        %v2563 = vpop.f32.mrb[0].mxu0
        %v2564 = vpop.f32.mrb[0].mxu0
        %v2565 = vadd.f32 0.0, %v2564
        %v2566 = vpop.f32.mrb[0].mxu0
        %2567 = vdwg.mxu0
        %v2568 = vadd.f32 %v2421, %v2468
        %v2569 = vadd.f32 %v2424, %v2471
        %v2570 = vadd.f32 %v2568, %v2515
        %v2571 = vadd.f32 %v2569, %v2518
        %v2572 = vadd.f32 %v2570, %v2562
        %v2573 = vadd.f32 %v2571, %v2565
        %v2574 = vadd.f32 %v747, %v2572
        %v2575 = vadd.f32 %v748, %v2573
        %v2576 = vld [vmem:[%s732] sm:$0x1]
        %v2577 = vld [vmem:[%s736] sm:$0x1]
        %v2578 = vsel %vm828, %v2574, 0.0
        %2579 = vadd.xlane.f32.xlu0 %v2578
        %v2580 = vpop.xlane.xlu0 %2579
        %v2581 = vsel %vm828, %v2575, 0.0
        %2582 = vadd.xlane.f32.xlu0 %v2581
        %v2583 = vpop.xlane.xlu0 %2582
        %v2584 = vrcp.pop 32.0
        %v2585 = vmul.f32 %v2580, %v2584
        %v2586 = vmul.f32 %v2583, %v2584
        %v2587 = vsub.f32 %v2574, %v2585
        %v2588 = vsub.f32 %v2575, %v2586
        %v2589 = vmul.f32 %v2587, %v2587
        %v2590 = vmul.f32 %v2588, %v2588
        %v2591 = vsel %vm828, %v2589, 0.0
        %2592 = vadd.xlane.f32.xlu0 %v2591
        %v2593 = vpop.xlane.xlu0 %2592
        %v2594 = vsel %vm828, %v2590, 0.0
        %2595 = vadd.xlane.f32.xlu0 %v2594
        %v2596 = vpop.xlane.xlu0 %2595
        %v2597 = vmul.f32 %v2593, %v2584
        %v2598 = vmul.f32 %v2596, %v2584
        %v2599 = vadd.f32 %v2597, 1e-05
        %v2600 = vadd.f32 %v2598, 1e-05
        %v2601 = vrsqrt.pop %v2599
        %v2602 = vrsqrt.pop %v2600
        %v2603 = vmul.f32 %v2587, %v2601
        %v2604 = vmul.f32 %v2588, %v2602
        %v2605 = vlaneseq
        %v2606 = vshrl.u32 %v2605, 7
        %v2607 = vsub.s32 0, %v2606
        %v2608 = vrot.slane %v2576, %v2607
        %v2609 = vmul.f32 %v2603, %v2608
        %v2610 = vmul.f32 %v2604, %v2608
        %v2611 = vlaneseq
        %v2612 = vshrl.u32 %v2611, 7
        %v2613 = vsub.s32 0, %v2612
        %v2614 = vrot.slane %v2577, %v2613
        %v2615 = vadd.f32 %v2609, %v2614
        %v2616 = vadd.f32 %v2610, %v2614
        %v2617 = vpack.c.bf16 %v2616, %v2615
        %v2618 = vld [vmem:[%s707] sm:$0xf]
        %v2619 = vld [vmem:[%s707 + $0x4] sm:$0xf]
        %v2620 = vld [vmem:[%s707 + $0x8] sm:$0xf]
        %v2621 = vld [vmem:[%s707 + $0xc] sm:$0xf]
        %v2622 = vld [vmem:[%s707 + $0x10] sm:$0xf]
        %v2623 = vld [vmem:[%s707 + $0x14] sm:$0xf]
        %v2624 = vld [vmem:[%s707 + $0x18] sm:$0xf]
        %v2625 = vld [vmem:[%s707 + $0x1c] sm:$0xf]
        %v2626 = vld [vmem:[%s707 + $0x20] sm:$0xf]
        %v2627 = vld [vmem:[%s707 + $0x24] sm:$0xf]
        %v2628 = vld [vmem:[%s707 + $0x28] sm:$0xf]
        %v2629 = vld [vmem:[%s707 + $0x2c] sm:$0xf]
        %v2630 = vld [vmem:[%s707 + $0x30] sm:$0xf]
        %v2631 = vld [vmem:[%s707 + $0x34] sm:$0xf]
        %v2632 = vld [vmem:[%s707 + $0x38] sm:$0xf]
        %v2633 = vld [vmem:[%s707 + $0x3c] sm:$0xf]
        %v2638 = vunpack.c.l.b16 %v2618
        %v2639 = vunpack.c.l.b16 %v2619
        %v2640 = vunpack.c.l.b16 %v2620
        %v2641 = vunpack.c.l.b16 %v2621
        %v2642 = vpack.c.b16 %v2639, %v2638
        %v2643 = vpack.c.b16 %v2641, %v2640
        %v2647 = vsel %vm828, %v2617, 0
        %2649 = vmatprep.subr.bf16.mxu0 0
        %2650 = vmatpush1.bf16.msra.mxu0 %v2642
        %2651 = vmatprep.subr.bf16.mxu0 0
        %2652 = vmatpush1.bf16.msra.mxu0 %v2643
        %2653 = vmatprep.subr.bf16.mxu0 0
        %2654 = vmatpush1.bf16.msra.mxu0 0
        %2655 = vmatprep.subr.bf16.mxu0 0
        %2656 = vmatpush1.bf16.msra.mxu0 0
        %2657 = vmatprep.subr.bf16.mxu0 0
        %2658 = vmatpush1.bf16.msra.mxu0 0
        %2659 = vmatprep.subr.bf16.mxu0 0
        %2660 = vmatpush1.bf16.msra.mxu0 0
        %2661 = vmatprep.subr.bf16.mxu0 0
        %2662 = vmatpush1.bf16.msra.mxu0 0
        %2663 = vmatprep.subr.bf16.mxu0 0
        %2664 = vmatpush1.bf16.msra.mxu0 0
        %2665 = vmatprep.subr.bf16.mxu0 0
        %2666 = vmatpush1.bf16.msra.mxu0 0
        %2667 = vmatprep.subr.bf16.mxu0 0
        %2668 = vmatpush1.bf16.msra.mxu0 0
        %2669 = vmatprep.subr.bf16.mxu0 0
        %2670 = vmatpush1.bf16.msra.mxu0 0
        %2671 = vmatprep.subr.bf16.mxu0 0
        %2672 = vmatpush1.bf16.msra.mxu0 0
        %2673 = vmatprep.subr.bf16.mxu0 0
        %2674 = vmatpush1.bf16.msra.mxu0 0
        %2675 = vmatprep.subr.bf16.mxu0 0
        %2676 = vmatpush1.bf16.msra.mxu0 0
        %2677 = vmatprep.subr.bf16.mxu0 0
        %2678 = vmatpush1.bf16.msra.mxu0 0
        %2679 = vmatprep.subr.bf16.mxu0 0
        %2680 = vmatpush1.bf16.msra.mxu0 0
        %2681 = vmatprep.mubr.bf16.mxu0 0
        %2682 = vmatmul.mubr.bf16.gmra.mrb[0].mxu0 %v2647
        %v2683 = vpop.f32.mrb[0].mxu0
        %v2684 = vadd.f32 0.0, %v2683
        %v2685 = vpop.f32.mrb[0].mxu0
        %v2686 = vpop.f32.mrb[0].mxu0
        %v2687 = vadd.f32 0.0, %v2686
        %v2688 = vpop.f32.mrb[0].mxu0
        %2689 = vdwg.mxu0
        %v2694 = vunpack.c.l.b16 %v2622
        %v2695 = vunpack.c.l.b16 %v2623
        %v2696 = vunpack.c.l.b16 %v2624
        %v2697 = vunpack.c.l.b16 %v2625
        %v2698 = vpack.c.b16 %v2695, %v2694
        %v2699 = vpack.c.b16 %v2697, %v2696
        %2702 = vmatprep.subr.bf16.mxu0 0
        %2703 = vmatpush1.bf16.msra.mxu0 %v2698
        %2704 = vmatprep.subr.bf16.mxu0 0
        %2705 = vmatpush1.bf16.msra.mxu0 %v2699
        %2706 = vmatprep.subr.bf16.mxu0 0
        %2707 = vmatpush1.bf16.msra.mxu0 0
        %2708 = vmatprep.subr.bf16.mxu0 0
        %2709 = vmatpush1.bf16.msra.mxu0 0
        %2710 = vmatprep.subr.bf16.mxu0 0
        %2711 = vmatpush1.bf16.msra.mxu0 0
        %2712 = vmatprep.subr.bf16.mxu0 0
        %2713 = vmatpush1.bf16.msra.mxu0 0
        %2714 = vmatprep.subr.bf16.mxu0 0
        %2715 = vmatpush1.bf16.msra.mxu0 0
        %2716 = vmatprep.subr.bf16.mxu0 0
        %2717 = vmatpush1.bf16.msra.mxu0 0
        %2718 = vmatprep.subr.bf16.mxu0 0
        %2719 = vmatpush1.bf16.msra.mxu0 0
        %2720 = vmatprep.subr.bf16.mxu0 0
        %2721 = vmatpush1.bf16.msra.mxu0 0
        %2722 = vmatprep.subr.bf16.mxu0 0
        %2723 = vmatpush1.bf16.msra.mxu0 0
        %2724 = vmatprep.subr.bf16.mxu0 0
        %2725 = vmatpush1.bf16.msra.mxu0 0
        %2726 = vmatprep.subr.bf16.mxu0 0
        %2727 = vmatpush1.bf16.msra.mxu0 0
        %2728 = vmatprep.subr.bf16.mxu0 0
        %2729 = vmatpush1.bf16.msra.mxu0 0
        %2730 = vmatprep.subr.bf16.mxu0 0
        %2731 = vmatpush1.bf16.msra.mxu0 0
        %2732 = vmatprep.subr.bf16.mxu0 0
        %2733 = vmatpush1.bf16.msra.mxu0 0
        %2734 = vmatprep.mubr.bf16.mxu0 0
        %2735 = vmatmul.mubr.bf16.gmra.mrb[0].mxu0 %v2647
        %v2736 = vpop.f32.mrb[0].mxu0
        %v2737 = vadd.f32 0.0, %v2736
        %v2738 = vpop.f32.mrb[0].mxu0
        %v2739 = vpop.f32.mrb[0].mxu0
        %v2740 = vadd.f32 0.0, %v2739
        %v2741 = vpop.f32.mrb[0].mxu0
        %2742 = vdwg.mxu0
        %v2747 = vunpack.c.l.b16 %v2626
        %v2748 = vunpack.c.l.b16 %v2627
        %v2749 = vunpack.c.l.b16 %v2628
        %v2750 = vunpack.c.l.b16 %v2629
        %v2751 = vpack.c.b16 %v2748, %v2747
        %v2752 = vpack.c.b16 %v2750, %v2749
        %2755 = vmatprep.subr.bf16.mxu0 0
        %2756 = vmatpush1.bf16.msra.mxu0 %v2751
        %2757 = vmatprep.subr.bf16.mxu0 0
        %2758 = vmatpush1.bf16.msra.mxu0 %v2752
        %2759 = vmatprep.subr.bf16.mxu0 0
        %2760 = vmatpush1.bf16.msra.mxu0 0
        %2761 = vmatprep.subr.bf16.mxu0 0
        %2762 = vmatpush1.bf16.msra.mxu0 0
        %2763 = vmatprep.subr.bf16.mxu0 0
        %2764 = vmatpush1.bf16.msra.mxu0 0
        %2765 = vmatprep.subr.bf16.mxu0 0
        %2766 = vmatpush1.bf16.msra.mxu0 0
        %2767 = vmatprep.subr.bf16.mxu0 0
        %2768 = vmatpush1.bf16.msra.mxu0 0
        %2769 = vmatprep.subr.bf16.mxu0 0
        %2770 = vmatpush1.bf16.msra.mxu0 0
        %2771 = vmatprep.subr.bf16.mxu0 0
        %2772 = vmatpush1.bf16.msra.mxu0 0
        %2773 = vmatprep.subr.bf16.mxu0 0
        %2774 = vmatpush1.bf16.msra.mxu0 0
        %2775 = vmatprep.subr.bf16.mxu0 0
        %2776 = vmatpush1.bf16.msra.mxu0 0
        %2777 = vmatprep.subr.bf16.mxu0 0
        %2778 = vmatpush1.bf16.msra.mxu0 0
        %2779 = vmatprep.subr.bf16.mxu0 0
        %2780 = vmatpush1.bf16.msra.mxu0 0
        %2781 = vmatprep.subr.bf16.mxu0 0
        %2782 = vmatpush1.bf16.msra.mxu0 0
        %2783 = vmatprep.subr.bf16.mxu0 0
        %2784 = vmatpush1.bf16.msra.mxu0 0
        %2785 = vmatprep.subr.bf16.mxu0 0
        %2786 = vmatpush1.bf16.msra.mxu0 0
        %2787 = vmatprep.mubr.bf16.mxu0 0
        %2788 = vmatmul.mubr.bf16.gmra.mrb[0].mxu0 %v2647
        %v2789 = vpop.f32.mrb[0].mxu0
        %v2790 = vadd.f32 0.0, %v2789
        %v2791 = vpop.f32.mrb[0].mxu0
        %v2792 = vpop.f32.mrb[0].mxu0
        %v2793 = vadd.f32 0.0, %v2792
        %v2794 = vpop.f32.mrb[0].mxu0
        %2795 = vdwg.mxu0
        %v2800 = vunpack.c.l.b16 %v2630
        %v2801 = vunpack.c.l.b16 %v2631
        %v2802 = vunpack.c.l.b16 %v2632
        %v2803 = vunpack.c.l.b16 %v2633
        %v2804 = vpack.c.b16 %v2801, %v2800
        %v2805 = vpack.c.b16 %v2803, %v2802
        %2808 = vmatprep.subr.bf16.mxu0 0
        %2809 = vmatpush1.bf16.msra.mxu0 %v2804
        %2810 = vmatprep.subr.bf16.mxu0 0
        %2811 = vmatpush1.bf16.msra.mxu0 %v2805
        %2812 = vmatprep.subr.bf16.mxu0 0
        %2813 = vmatpush1.bf16.msra.mxu0 0
        %2814 = vmatprep.subr.bf16.mxu0 0
        %2815 = vmatpush1.bf16.msra.mxu0 0
        %2816 = vmatprep.subr.bf16.mxu0 0
        %2817 = vmatpush1.bf16.msra.mxu0 0
        %2818 = vmatprep.subr.bf16.mxu0 0
        %2819 = vmatpush1.bf16.msra.mxu0 0
        %2820 = vmatprep.subr.bf16.mxu0 0
        %2821 = vmatpush1.bf16.msra.mxu0 0
        %2822 = vmatprep.subr.bf16.mxu0 0
        %2823 = vmatpush1.bf16.msra.mxu0 0
        %2824 = vmatprep.subr.bf16.mxu0 0
        %2825 = vmatpush1.bf16.msra.mxu0 0
        %2826 = vmatprep.subr.bf16.mxu0 0
        %2827 = vmatpush1.bf16.msra.mxu0 0
        %2828 = vmatprep.subr.bf16.mxu0 0
        %2829 = vmatpush1.bf16.msra.mxu0 0
        %2830 = vmatprep.subr.bf16.mxu0 0
        %2831 = vmatpush1.bf16.msra.mxu0 0
        %2832 = vmatprep.subr.bf16.mxu0 0
        %2833 = vmatpush1.bf16.msra.mxu0 0
        %2834 = vmatprep.subr.bf16.mxu0 0
        %2835 = vmatpush1.bf16.msra.mxu0 0
        %2836 = vmatprep.subr.bf16.mxu0 0
        %2837 = vmatpush1.bf16.msra.mxu0 0
        %2838 = vmatprep.subr.bf16.mxu0 0
        %2839 = vmatpush1.bf16.msra.mxu0 0
        %2840 = vmatprep.mubr.bf16.mxu0 0
        %2841 = vmatmul.mubr.bf16.gmra.mrb[0].mxu0 %v2647
        %v2842 = vpop.f32.mrb[0].mxu0
        %v2843 = vadd.f32 0.0, %v2842
        %v2844 = vpop.f32.mrb[0].mxu0
        %v2845 = vpop.f32.mrb[0].mxu0
        %v2846 = vadd.f32 0.0, %v2845
        %v2847 = vpop.f32.mrb[0].mxu0
        %2848 = vdwg.mxu0
        %v2849 = vpack.c.bf16 %v2687, %v2684
        %v2850 = vpack.c.bf16 %v2740, %v2737
        %v2851 = vpack.c.bf16 %v2793, %v2790
        %v2852 = vpack.c.bf16 %v2846, %v2843
        %v2857 = vunpack.c.l.b16 %v2849
        %v2858 = vunpack.c.h.b16 %v2849
        %v2859 = vunpack.c.l.b16 %v2850
        %v2860 = vunpack.c.h.b16 %v2850
        %v2861 = vunpack.c.l.b16 %v2851
        %v2862 = vunpack.c.h.b16 %v2851
        %v2863 = vunpack.c.l.b16 %v2852
        %v2864 = vunpack.c.h.b16 %v2852
        %v2865 = vpack.c.b16 %v2857, %v2857
        %v2866 = vpack.c.b16 %v2858, %v2858
        %v2867 = vpack.c.b16 %v2859, %v2859
        %v2868 = vpack.c.b16 %v2860, %v2860
        %v2869 = vpack.c.b16 %v2861, %v2861
        %v2870 = vpack.c.b16 %v2862, %v2862
        %v2871 = vpack.c.b16 %v2863, %v2863
        %v2872 = vpack.c.b16 %v2864, %v2864
        %v2873 = vld [vmem:[%s687] sm:$0xf]
        %v2874 = vld [vmem:[%s687 + $0x4] sm:$0x3]
        %v2875 = vld [vmem:[%s687 + $0x8] sm:$0xf]
        %v2876 = vld [vmem:[%s687 + $0xc] sm:$0x3]
        %v2877 = vld [vmem:[%s687 + $0x10] sm:$0xf]
        %v2878 = vld [vmem:[%s687 + $0x14] sm:$0x3]
        %v2879 = vld [vmem:[%s687 + $0x18] sm:$0xf]
        %v2880 = vld [vmem:[%s687 + $0x1c] sm:$0x3]
        %v2881 = vld [vmem:[%s687 + $0x20] sm:$0xf]
        %v2882 = vld [vmem:[%s687 + $0x24] sm:$0x3]
        %v2883 = vld [vmem:[%s687 + $0x28] sm:$0xf]
        %v2884 = vld [vmem:[%s687 + $0x2c] sm:$0x3]
        %v2885 = vld [vmem:[%s687 + $0x30] sm:$0xf]
        %v2886 = vld [vmem:[%s687 + $0x34] sm:$0x3]
        %v2887 = vld [vmem:[%s687 + $0x38] sm:$0xf]
        %v2888 = vld [vmem:[%s687 + $0x3c] sm:$0x3]
        %v2889 = vld [vmem:[%s692] sm:$0xf]
        %v2890 = vld [vmem:[%s692 + $0x4] sm:$0x3]
        %v2891 = vld [vmem:[%s692 + $0x8] sm:$0xf]
        %v2892 = vld [vmem:[%s692 + $0xc] sm:$0x3]
        %v2893 = vld [vmem:[%s692 + $0x10] sm:$0xf]
        %v2894 = vld [vmem:[%s692 + $0x14] sm:$0x3]
        %v2895 = vld [vmem:[%s692 + $0x18] sm:$0xf]
        %v2896 = vld [vmem:[%s692 + $0x1c] sm:$0x3]
        %v2897 = vld [vmem:[%s692 + $0x20] sm:$0xf]
        %v2898 = vld [vmem:[%s692 + $0x24] sm:$0x3]
        %v2899 = vld [vmem:[%s692 + $0x28] sm:$0xf]
        %v2900 = vld [vmem:[%s692 + $0x2c] sm:$0x3]
        %v2901 = vld [vmem:[%s692 + $0x30] sm:$0xf]
        %v2902 = vld [vmem:[%s692 + $0x34] sm:$0x3]
        %v2903 = vld [vmem:[%s692 + $0x38] sm:$0xf]
        %v2904 = vld [vmem:[%s692 + $0x3c] sm:$0x3]
        %v2907 = vunpack.c.l.b16 %v2873
        %v2908 = vunpack.c.l.b16 %v2874
        %v2909 = vpack.c.b16 %v2908, %v2907
        %v2911 = vsel %vm1528, %v2865, 0
        %v2914 = vsel %vm1528, %v2909, 0
        %2916 = vmatprep.subr.bf16.mxu0 0
        %2917 = vmatpush1.bf16.xpose.msra.mxu0 %v2914
        %2918 = vmatprep.subr.bf16.mxu0 0
        %2919 = vmatpush1.bf16.xpose.msra.mxu0 0
        %2920 = vmatprep.subr.bf16.mxu0 0
        %2921 = vmatpush1.bf16.xpose.msra.mxu0 0
        %2922 = vmatprep.subr.bf16.mxu0 0
        %2923 = vmatpush1.bf16.xpose.msra.mxu0 0
        %2924 = vmatprep.subr.bf16.mxu0 0
        %2925 = vmatpush1.bf16.xpose.msra.mxu0 0
        %2926 = vmatprep.subr.bf16.mxu0 0
        %2927 = vmatpush1.bf16.xpose.msra.mxu0 0
        %2928 = vmatprep.subr.bf16.mxu0 0
        %2929 = vmatpush1.bf16.xpose.msra.mxu0 0
        %2930 = vmatprep.subr.bf16.mxu0 0
        %2931 = vmatpush1.bf16.xpose.msra.mxu0 0
        %2932 = vmatprep.subr.bf16.mxu0 0
        %2933 = vmatpush1.bf16.xpose.msra.mxu0 0
        %2934 = vmatprep.subr.bf16.mxu0 0
        %2935 = vmatpush1.bf16.xpose.msra.mxu0 0
        %2936 = vmatprep.subr.bf16.mxu0 0
        %2937 = vmatpush1.bf16.xpose.msra.mxu0 0
        %2938 = vmatprep.subr.bf16.mxu0 0
        %2939 = vmatpush1.bf16.xpose.msra.mxu0 0
        %2940 = vmatprep.subr.bf16.mxu0 0
        %2941 = vmatpush1.bf16.xpose.msra.mxu0 0
        %2942 = vmatprep.subr.bf16.mxu0 0
        %2943 = vmatpush1.bf16.xpose.msra.mxu0 0
        %2944 = vmatprep.subr.bf16.mxu0 0
        %2945 = vmatpush1.bf16.xpose.msra.mxu0 0
        %2946 = vmatprep.subr.bf16.mxu0 0
        %2947 = vmatpush1.bf16.xpose.msra.mxu0 0
        %2948 = vmatprep.mubr.bf16.mxu0 0
        %2949 = vmatmul.mubr.bf16.gmra.mrb[0].mxu0 %v2911
        %v2950 = vpop.f32.mrb[0].mxu0
        %v2951 = vadd.f32 0.0, %v2950
        %v2952 = vpop.f32.mrb[0].mxu0
        %v2953 = vpop.f32.mrb[0].mxu0
        %v2954 = vpop.f32.mrb[0].mxu0
        %2955 = vdwg.mxu0
        %v2958 = vunpack.c.l.b16 %v2875
        %v2959 = vunpack.c.l.b16 %v2876
        %v2960 = vpack.c.b16 %v2959, %v2958
        %v2962 = vsel %vm1528, %v2866, 0
        %v2965 = vsel %vm1528, %v2960, 0
        %2967 = vmatprep.subr.bf16.mxu0 0
        %2968 = vmatpush1.bf16.xpose.msra.mxu0 %v2965
        %2969 = vmatprep.subr.bf16.mxu0 0
        %2970 = vmatpush1.bf16.xpose.msra.mxu0 0
        %2971 = vmatprep.subr.bf16.mxu0 0
        %2972 = vmatpush1.bf16.xpose.msra.mxu0 0
        %2973 = vmatprep.subr.bf16.mxu0 0
        %2974 = vmatpush1.bf16.xpose.msra.mxu0 0
        %2975 = vmatprep.subr.bf16.mxu0 0
        %2976 = vmatpush1.bf16.xpose.msra.mxu0 0
        %2977 = vmatprep.subr.bf16.mxu0 0
        %2978 = vmatpush1.bf16.xpose.msra.mxu0 0
        %2979 = vmatprep.subr.bf16.mxu0 0
        %2980 = vmatpush1.bf16.xpose.msra.mxu0 0
        %2981 = vmatprep.subr.bf16.mxu0 0
        %2982 = vmatpush1.bf16.xpose.msra.mxu0 0
        %2983 = vmatprep.subr.bf16.mxu0 0
        %2984 = vmatpush1.bf16.xpose.msra.mxu0 0
        %2985 = vmatprep.subr.bf16.mxu0 0
        %2986 = vmatpush1.bf16.xpose.msra.mxu0 0
        %2987 = vmatprep.subr.bf16.mxu0 0
        %2988 = vmatpush1.bf16.xpose.msra.mxu0 0
        %2989 = vmatprep.subr.bf16.mxu0 0
        %2990 = vmatpush1.bf16.xpose.msra.mxu0 0
        %2991 = vmatprep.subr.bf16.mxu0 0
        %2992 = vmatpush1.bf16.xpose.msra.mxu0 0
        %2993 = vmatprep.subr.bf16.mxu0 0
        %2994 = vmatpush1.bf16.xpose.msra.mxu0 0
        %2995 = vmatprep.subr.bf16.mxu0 0
        %2996 = vmatpush1.bf16.xpose.msra.mxu0 0
        %2997 = vmatprep.subr.bf16.mxu0 0
        %2998 = vmatpush1.bf16.xpose.msra.mxu0 0
        %2999 = vmatprep.mubr.bf16.mxu0 0
        %3000 = vmatmul.mubr.bf16.gmra.mrb[0].mxu0 %v2962
        %v3001 = vpop.f32.mrb[0].mxu0
        %v3002 = vadd.f32 0.0, %v3001
        %v3003 = vpop.f32.mrb[0].mxu0
        %v3004 = vpop.f32.mrb[0].mxu0
        %v3005 = vpop.f32.mrb[0].mxu0
        %3006 = vdwg.mxu0
        %v3009 = vunpack.c.l.b16 %v2877
        %v3010 = vunpack.c.l.b16 %v2878
        %v3011 = vpack.c.b16 %v3010, %v3009
        %v3013 = vsel %vm1528, %v2867, 0
        %v3016 = vsel %vm1528, %v3011, 0
        %3018 = vmatprep.subr.bf16.mxu0 0
        %3019 = vmatpush1.bf16.xpose.msra.mxu0 %v3016
        %3020 = vmatprep.subr.bf16.mxu0 0
        %3021 = vmatpush1.bf16.xpose.msra.mxu0 0
        %3022 = vmatprep.subr.bf16.mxu0 0
        %3023 = vmatpush1.bf16.xpose.msra.mxu0 0
        %3024 = vmatprep.subr.bf16.mxu0 0
        %3025 = vmatpush1.bf16.xpose.msra.mxu0 0
        %3026 = vmatprep.subr.bf16.mxu0 0
        %3027 = vmatpush1.bf16.xpose.msra.mxu0 0
        %3028 = vmatprep.subr.bf16.mxu0 0
        %3029 = vmatpush1.bf16.xpose.msra.mxu0 0
        %3030 = vmatprep.subr.bf16.mxu0 0
        %3031 = vmatpush1.bf16.xpose.msra.mxu0 0
        %3032 = vmatprep.subr.bf16.mxu0 0
        %3033 = vmatpush1.bf16.xpose.msra.mxu0 0
        %3034 = vmatprep.subr.bf16.mxu0 0
        %3035 = vmatpush1.bf16.xpose.msra.mxu0 0
        %3036 = vmatprep.subr.bf16.mxu0 0
        %3037 = vmatpush1.bf16.xpose.msra.mxu0 0
        %3038 = vmatprep.subr.bf16.mxu0 0
        %3039 = vmatpush1.bf16.xpose.msra.mxu0 0
        %3040 = vmatprep.subr.bf16.mxu0 0
        %3041 = vmatpush1.bf16.xpose.msra.mxu0 0
        %3042 = vmatprep.subr.bf16.mxu0 0
        %3043 = vmatpush1.bf16.xpose.msra.mxu0 0
        %3044 = vmatprep.subr.bf16.mxu0 0
        %3045 = vmatpush1.bf16.xpose.msra.mxu0 0
        %3046 = vmatprep.subr.bf16.mxu0 0
        %3047 = vmatpush1.bf16.xpose.msra.mxu0 0
        %3048 = vmatprep.subr.bf16.mxu0 0
        %3049 = vmatpush1.bf16.xpose.msra.mxu0 0
        %3050 = vmatprep.mubr.bf16.mxu0 0
        %3051 = vmatmul.mubr.bf16.gmra.mrb[0].mxu0 %v3013
        %v3052 = vpop.f32.mrb[0].mxu0
        %v3053 = vadd.f32 0.0, %v3052
        %v3054 = vpop.f32.mrb[0].mxu0
        %v3055 = vpop.f32.mrb[0].mxu0
        %v3056 = vpop.f32.mrb[0].mxu0
        %3057 = vdwg.mxu0
        %v3060 = vunpack.c.l.b16 %v2879
        %v3061 = vunpack.c.l.b16 %v2880
        %v3062 = vpack.c.b16 %v3061, %v3060
        %v3064 = vsel %vm1528, %v2868, 0
        %v3067 = vsel %vm1528, %v3062, 0
        %3069 = vmatprep.subr.bf16.mxu0 0
        %3070 = vmatpush1.bf16.xpose.msra.mxu0 %v3067
        %3071 = vmatprep.subr.bf16.mxu0 0
        %3072 = vmatpush1.bf16.xpose.msra.mxu0 0
        %3073 = vmatprep.subr.bf16.mxu0 0
        %3074 = vmatpush1.bf16.xpose.msra.mxu0 0
        %3075 = vmatprep.subr.bf16.mxu0 0
        %3076 = vmatpush1.bf16.xpose.msra.mxu0 0
        %3077 = vmatprep.subr.bf16.mxu0 0
        %3078 = vmatpush1.bf16.xpose.msra.mxu0 0
        %3079 = vmatprep.subr.bf16.mxu0 0
        %3080 = vmatpush1.bf16.xpose.msra.mxu0 0
        %3081 = vmatprep.subr.bf16.mxu0 0
        %3082 = vmatpush1.bf16.xpose.msra.mxu0 0
        %3083 = vmatprep.subr.bf16.mxu0 0
        %3084 = vmatpush1.bf16.xpose.msra.mxu0 0
        %3085 = vmatprep.subr.bf16.mxu0 0
        %3086 = vmatpush1.bf16.xpose.msra.mxu0 0
        %3087 = vmatprep.subr.bf16.mxu0 0
        %3088 = vmatpush1.bf16.xpose.msra.mxu0 0
        %3089 = vmatprep.subr.bf16.mxu0 0
        %3090 = vmatpush1.bf16.xpose.msra.mxu0 0
        %3091 = vmatprep.subr.bf16.mxu0 0
        %3092 = vmatpush1.bf16.xpose.msra.mxu0 0
        %3093 = vmatprep.subr.bf16.mxu0 0
        %3094 = vmatpush1.bf16.xpose.msra.mxu0 0
        %3095 = vmatprep.subr.bf16.mxu0 0
        %3096 = vmatpush1.bf16.xpose.msra.mxu0 0
        %3097 = vmatprep.subr.bf16.mxu0 0
        %3098 = vmatpush1.bf16.xpose.msra.mxu0 0
        %3099 = vmatprep.subr.bf16.mxu0 0
        %3100 = vmatpush1.bf16.xpose.msra.mxu0 0
        %3101 = vmatprep.mubr.bf16.mxu0 0
        %3102 = vmatmul.mubr.bf16.gmra.mrb[0].mxu0 %v3064
        %v3103 = vpop.f32.mrb[0].mxu0
        %v3104 = vadd.f32 0.0, %v3103
        %v3105 = vpop.f32.mrb[0].mxu0
        %v3106 = vpop.f32.mrb[0].mxu0
        %v3107 = vpop.f32.mrb[0].mxu0
        %3108 = vdwg.mxu0
        %v3111 = vunpack.c.l.b16 %v2881
        %v3112 = vunpack.c.l.b16 %v2882
        %v3113 = vpack.c.b16 %v3112, %v3111
        %v3115 = vsel %vm1528, %v2869, 0
        %v3118 = vsel %vm1528, %v3113, 0
        %3120 = vmatprep.subr.bf16.mxu0 0
        %3121 = vmatpush1.bf16.xpose.msra.mxu0 %v3118
        %3122 = vmatprep.subr.bf16.mxu0 0
        %3123 = vmatpush1.bf16.xpose.msra.mxu0 0
        %3124 = vmatprep.subr.bf16.mxu0 0
        %3125 = vmatpush1.bf16.xpose.msra.mxu0 0
        %3126 = vmatprep.subr.bf16.mxu0 0
        %3127 = vmatpush1.bf16.xpose.msra.mxu0 0
        %3128 = vmatprep.subr.bf16.mxu0 0
        %3129 = vmatpush1.bf16.xpose.msra.mxu0 0
        %3130 = vmatprep.subr.bf16.mxu0 0
        %3131 = vmatpush1.bf16.xpose.msra.mxu0 0
        %3132 = vmatprep.subr.bf16.mxu0 0
        %3133 = vmatpush1.bf16.xpose.msra.mxu0 0
        %3134 = vmatprep.subr.bf16.mxu0 0
        %3135 = vmatpush1.bf16.xpose.msra.mxu0 0
        %3136 = vmatprep.subr.bf16.mxu0 0
        %3137 = vmatpush1.bf16.xpose.msra.mxu0 0
        %3138 = vmatprep.subr.bf16.mxu0 0
        %3139 = vmatpush1.bf16.xpose.msra.mxu0 0
        %3140 = vmatprep.subr.bf16.mxu0 0
        %3141 = vmatpush1.bf16.xpose.msra.mxu0 0
        %3142 = vmatprep.subr.bf16.mxu0 0
        %3143 = vmatpush1.bf16.xpose.msra.mxu0 0
        %3144 = vmatprep.subr.bf16.mxu0 0
        %3145 = vmatpush1.bf16.xpose.msra.mxu0 0
        %3146 = vmatprep.subr.bf16.mxu0 0
        %3147 = vmatpush1.bf16.xpose.msra.mxu0 0
        %3148 = vmatprep.subr.bf16.mxu0 0
        %3149 = vmatpush1.bf16.xpose.msra.mxu0 0
        %3150 = vmatprep.subr.bf16.mxu0 0
        %3151 = vmatpush1.bf16.xpose.msra.mxu0 0
        %3152 = vmatprep.mubr.bf16.mxu0 0
        %3153 = vmatmul.mubr.bf16.gmra.mrb[0].mxu0 %v3115
        %v3154 = vpop.f32.mrb[0].mxu0
        %v3155 = vadd.f32 0.0, %v3154
        %v3156 = vpop.f32.mrb[0].mxu0
        %v3157 = vpop.f32.mrb[0].mxu0
        %v3158 = vpop.f32.mrb[0].mxu0
        %3159 = vdwg.mxu0
        %v3162 = vunpack.c.l.b16 %v2883
        %v3163 = vunpack.c.l.b16 %v2884
        %v3164 = vpack.c.b16 %v3163, %v3162
        %v3166 = vsel %vm1528, %v2870, 0
        %v3169 = vsel %vm1528, %v3164, 0
        %3171 = vmatprep.subr.bf16.mxu0 0
        %3172 = vmatpush1.bf16.xpose.msra.mxu0 %v3169
        %3173 = vmatprep.subr.bf16.mxu0 0
        %3174 = vmatpush1.bf16.xpose.msra.mxu0 0
        %3175 = vmatprep.subr.bf16.mxu0 0
        %3176 = vmatpush1.bf16.xpose.msra.mxu0 0
        %3177 = vmatprep.subr.bf16.mxu0 0
        %3178 = vmatpush1.bf16.xpose.msra.mxu0 0
        %3179 = vmatprep.subr.bf16.mxu0 0
        %3180 = vmatpush1.bf16.xpose.msra.mxu0 0
        %3181 = vmatprep.subr.bf16.mxu0 0
        %3182 = vmatpush1.bf16.xpose.msra.mxu0 0
        %3183 = vmatprep.subr.bf16.mxu0 0
        %3184 = vmatpush1.bf16.xpose.msra.mxu0 0
        %3185 = vmatprep.subr.bf16.mxu0 0
        %3186 = vmatpush1.bf16.xpose.msra.mxu0 0
        %3187 = vmatprep.subr.bf16.mxu0 0
        %3188 = vmatpush1.bf16.xpose.msra.mxu0 0
        %3189 = vmatprep.subr.bf16.mxu0 0
        %3190 = vmatpush1.bf16.xpose.msra.mxu0 0
        %3191 = vmatprep.subr.bf16.mxu0 0
        %3192 = vmatpush1.bf16.xpose.msra.mxu0 0
        %3193 = vmatprep.subr.bf16.mxu0 0
        %3194 = vmatpush1.bf16.xpose.msra.mxu0 0
        %3195 = vmatprep.subr.bf16.mxu0 0
        %3196 = vmatpush1.bf16.xpose.msra.mxu0 0
        %3197 = vmatprep.subr.bf16.mxu0 0
        %3198 = vmatpush1.bf16.xpose.msra.mxu0 0
        %3199 = vmatprep.subr.bf16.mxu0 0
        %3200 = vmatpush1.bf16.xpose.msra.mxu0 0
        %3201 = vmatprep.subr.bf16.mxu0 0
        %3202 = vmatpush1.bf16.xpose.msra.mxu0 0
        %3203 = vmatprep.mubr.bf16.mxu0 0
        %3204 = vmatmul.mubr.bf16.gmra.mrb[0].mxu0 %v3166
        %v3205 = vpop.f32.mrb[0].mxu0
        %v3206 = vadd.f32 0.0, %v3205
        %v3207 = vpop.f32.mrb[0].mxu0
        %v3208 = vpop.f32.mrb[0].mxu0
        %v3209 = vpop.f32.mrb[0].mxu0
        %3210 = vdwg.mxu0
        %v3213 = vunpack.c.l.b16 %v2885
        %v3214 = vunpack.c.l.b16 %v2886
        %v3215 = vpack.c.b16 %v3214, %v3213
        %v3217 = vsel %vm1528, %v2871, 0
        %v3220 = vsel %vm1528, %v3215, 0
        %3222 = vmatprep.subr.bf16.mxu0 0
        %3223 = vmatpush1.bf16.xpose.msra.mxu0 %v3220
        %3224 = vmatprep.subr.bf16.mxu0 0
        %3225 = vmatpush1.bf16.xpose.msra.mxu0 0
        %3226 = vmatprep.subr.bf16.mxu0 0
        %3227 = vmatpush1.bf16.xpose.msra.mxu0 0
        %3228 = vmatprep.subr.bf16.mxu0 0
        %3229 = vmatpush1.bf16.xpose.msra.mxu0 0
        %3230 = vmatprep.subr.bf16.mxu0 0
        %3231 = vmatpush1.bf16.xpose.msra.mxu0 0
        %3232 = vmatprep.subr.bf16.mxu0 0
        %3233 = vmatpush1.bf16.xpose.msra.mxu0 0
        %3234 = vmatprep.subr.bf16.mxu0 0
        %3235 = vmatpush1.bf16.xpose.msra.mxu0 0
        %3236 = vmatprep.subr.bf16.mxu0 0
        %3237 = vmatpush1.bf16.xpose.msra.mxu0 0
        %3238 = vmatprep.subr.bf16.mxu0 0
        %3239 = vmatpush1.bf16.xpose.msra.mxu0 0
        %3240 = vmatprep.subr.bf16.mxu0 0
        %3241 = vmatpush1.bf16.xpose.msra.mxu0 0
        %3242 = vmatprep.subr.bf16.mxu0 0
        %3243 = vmatpush1.bf16.xpose.msra.mxu0 0
        %3244 = vmatprep.subr.bf16.mxu0 0
        %3245 = vmatpush1.bf16.xpose.msra.mxu0 0
        %3246 = vmatprep.subr.bf16.mxu0 0
        %3247 = vmatpush1.bf16.xpose.msra.mxu0 0
        %3248 = vmatprep.subr.bf16.mxu0 0
        %3249 = vmatpush1.bf16.xpose.msra.mxu0 0
        %3250 = vmatprep.subr.bf16.mxu0 0
        %3251 = vmatpush1.bf16.xpose.msra.mxu0 0
        %3252 = vmatprep.subr.bf16.mxu0 0
        %3253 = vmatpush1.bf16.xpose.msra.mxu0 0
        %3254 = vmatprep.mubr.bf16.mxu0 0
        %3255 = vmatmul.mubr.bf16.gmra.mrb[0].mxu0 %v3217
        %v3256 = vpop.f32.mrb[0].mxu0
        %v3257 = vadd.f32 0.0, %v3256
        %v3258 = vpop.f32.mrb[0].mxu0
        %v3259 = vpop.f32.mrb[0].mxu0
        %v3260 = vpop.f32.mrb[0].mxu0
        %3261 = vdwg.mxu0
        %v3264 = vunpack.c.l.b16 %v2887
        %v3265 = vunpack.c.l.b16 %v2888
        %v3266 = vpack.c.b16 %v3265, %v3264
        %v3268 = vsel %vm1528, %v2872, 0
        %v3271 = vsel %vm1528, %v3266, 0
        %3273 = vmatprep.subr.bf16.mxu0 0
        %3274 = vmatpush1.bf16.xpose.msra.mxu0 %v3271
        %3275 = vmatprep.subr.bf16.mxu0 0
        %3276 = vmatpush1.bf16.xpose.msra.mxu0 0
        %3277 = vmatprep.subr.bf16.mxu0 0
        %3278 = vmatpush1.bf16.xpose.msra.mxu0 0
        %3279 = vmatprep.subr.bf16.mxu0 0
        %3280 = vmatpush1.bf16.xpose.msra.mxu0 0
        %3281 = vmatprep.subr.bf16.mxu0 0
        %3282 = vmatpush1.bf16.xpose.msra.mxu0 0
        %3283 = vmatprep.subr.bf16.mxu0 0
        %3284 = vmatpush1.bf16.xpose.msra.mxu0 0
        %3285 = vmatprep.subr.bf16.mxu0 0
        %3286 = vmatpush1.bf16.xpose.msra.mxu0 0
        %3287 = vmatprep.subr.bf16.mxu0 0
        %3288 = vmatpush1.bf16.xpose.msra.mxu0 0
        %3289 = vmatprep.subr.bf16.mxu0 0
        %3290 = vmatpush1.bf16.xpose.msra.mxu0 0
        %3291 = vmatprep.subr.bf16.mxu0 0
        %3292 = vmatpush1.bf16.xpose.msra.mxu0 0
        %3293 = vmatprep.subr.bf16.mxu0 0
        %3294 = vmatpush1.bf16.xpose.msra.mxu0 0
        %3295 = vmatprep.subr.bf16.mxu0 0
        %3296 = vmatpush1.bf16.xpose.msra.mxu0 0
        %3297 = vmatprep.subr.bf16.mxu0 0
        %3298 = vmatpush1.bf16.xpose.msra.mxu0 0
        %3299 = vmatprep.subr.bf16.mxu0 0
        %3300 = vmatpush1.bf16.xpose.msra.mxu0 0
        %3301 = vmatprep.subr.bf16.mxu0 0
        %3302 = vmatpush1.bf16.xpose.msra.mxu0 0
        %3303 = vmatprep.subr.bf16.mxu0 0
        %3304 = vmatpush1.bf16.xpose.msra.mxu0 0
        %3305 = vmatprep.mubr.bf16.mxu0 0
        %3306 = vmatmul.mubr.bf16.gmra.mrb[0].mxu0 %v3268
        %v3307 = vpop.f32.mrb[0].mxu0
        %v3308 = vadd.f32 0.0, %v3307
        %v3309 = vpop.f32.mrb[0].mxu0
        %v3310 = vpop.f32.mrb[0].mxu0
        %v3311 = vpop.f32.mrb[0].mxu0
        %3312 = vdwg.mxu0
        %v3313 = vsel %vm759, 1, 0
        %v3314 = vsel %vm760, 1, 0
        %v3315 = vsel %vm761, 1, 0
        %v3316 = vsel %vm762, 1, 0
        %v3317 = vsel %vm763, 1, 0
        %v3318 = vsel %vm764, 1, 0
        %v3319 = vsel %vm765, 1, 0
        %v3320 = vsel %vm766, 1, 0
        %v3321 = vlaneseq
        %v3322 = vshrl.u32 %v3321, 7
        %v3323 = vsub.s32 0, %v3322
        %v3324 = vrot.slane %v3313, %v3323
        %v3325 = vlaneseq
        %v3326 = vshrl.u32 %v3325, 7
        %v3327 = vsub.s32 0, %v3326
        %v3328 = vrot.slane %v3314, %v3327
        %v3329 = vlaneseq
        %v3330 = vshrl.u32 %v3329, 7
        %v3331 = vsub.s32 0, %v3330
        %v3332 = vrot.slane %v3315, %v3331
        %v3333 = vlaneseq
        %v3334 = vshrl.u32 %v3333, 7
        %v3335 = vsub.s32 0, %v3334
        %v3336 = vrot.slane %v3316, %v3335
        %v3337 = vlaneseq
        %v3338 = vshrl.u32 %v3337, 7
        %v3339 = vsub.s32 0, %v3338
        %v3340 = vrot.slane %v3317, %v3339
        %v3341 = vlaneseq
        %v3342 = vshrl.u32 %v3341, 7
        %v3343 = vsub.s32 0, %v3342
        %v3344 = vrot.slane %v3318, %v3343
        %v3345 = vlaneseq
        %v3346 = vshrl.u32 %v3345, 7
        %v3347 = vsub.s32 0, %v3346
        %v3348 = vrot.slane %v3319, %v3347
        %v3349 = vlaneseq
        %v3350 = vshrl.u32 %v3349, 7
        %v3351 = vsub.s32 0, %v3350
        %v3352 = vrot.slane %v3320, %v3351
        %vm3353 = vcmp.eq.s32.totalorder %v3324, 1
        %vm3354 = vcmp.eq.s32.totalorder %v3328, 1
        %vm3355 = vcmp.eq.s32.totalorder %v3332, 1
        %vm3356 = vcmp.eq.s32.totalorder %v3336, 1
        %vm3357 = vcmp.eq.s32.totalorder %v3340, 1
        %vm3358 = vcmp.eq.s32.totalorder %v3344, 1
        %vm3359 = vcmp.eq.s32.totalorder %v3348, 1
        %vm3360 = vcmp.eq.s32.totalorder %v3352, 1
        %v3361 = vsel %vm3353, %v2951, -1000000.0
        %v3362 = vsel %vm3354, %v3002, -1000000.0
        %v3363 = vsel %vm3355, %v3053, -1000000.0
        %v3364 = vsel %vm3356, %v3104, -1000000.0
        %v3365 = vsel %vm3357, %v3155, -1000000.0
        %v3366 = vsel %vm3358, %v3206, -1000000.0
        %v3367 = vsel %vm3359, %v3257, -1000000.0
        %v3368 = vsel %vm3360, %v3308, -1000000.0
        %vm3369 = vcmask 97280
        %v3370 = vsel %vm3369, %v3361, -inf
        %3371 = vmax.xlane.f32.xlu0 %v3370
        %v3372 = vpop.xlane.xlu0 %3371
        %v3373 = vsel %vm3369, %v3362, -inf
        %3374 = vmax.xlane.f32.xlu0 %v3373
        %v3375 = vpop.xlane.xlu0 %3374
        %v3376 = vsel %vm3369, %v3363, -inf
        %3377 = vmax.xlane.f32.xlu0 %v3376
        %v3378 = vpop.xlane.xlu0 %3377
        %v3379 = vsel %vm3369, %v3364, -inf
        %3380 = vmax.xlane.f32.xlu0 %v3379
        %v3381 = vpop.xlane.xlu0 %3380
        %v3382 = vsel %vm3369, %v3365, -inf
        %3383 = vmax.xlane.f32.xlu0 %v3382
        %v3384 = vpop.xlane.xlu0 %3383
        %v3385 = vsel %vm3369, %v3366, -inf
        %3386 = vmax.xlane.f32.xlu0 %v3385
        %v3387 = vpop.xlane.xlu0 %3386
        %v3388 = vsel %vm3369, %v3367, -inf
        %3389 = vmax.xlane.f32.xlu0 %v3388
        %v3390 = vpop.xlane.xlu0 %3389
        %v3391 = vsel %vm3369, %v3368, -inf
        %3392 = vmax.xlane.f32.xlu0 %v3391
        %v3393 = vpop.xlane.xlu0 %3392
        %v3394 = vsub.f32 %v3361, %v3372
        %v3395 = vsub.f32 %v3362, %v3375
        %v3396 = vsub.f32 %v3363, %v3378
        %v3397 = vsub.f32 %v3364, %v3381
        %v3398 = vsub.f32 %v3365, %v3384
        %v3399 = vsub.f32 %v3366, %v3387
        %v3400 = vsub.f32 %v3367, %v3390
        %v3401 = vsub.f32 %v3368, %v3393
        %v3402 = vmul.f32 %v3394, 1.442695
        %v3403 = vpow.pop %v3402
        %v3404 = vmul.f32 %v3395, 1.442695
        %v3405 = vpow.pop %v3404
        %v3406 = vmul.f32 %v3396, 1.442695
        %v3407 = vpow.pop %v3406
        %v3408 = vmul.f32 %v3397, 1.442695
        %v3409 = vpow.pop %v3408
        %v3410 = vmul.f32 %v3398, 1.442695
        %v3411 = vpow.pop %v3410
        %v3412 = vmul.f32 %v3399, 1.442695
        %v3413 = vpow.pop %v3412
        %v3414 = vmul.f32 %v3400, 1.442695
        %v3415 = vpow.pop %v3414
        %v3416 = vmul.f32 %v3401, 1.442695
        %v3417 = vpow.pop %v3416
        %v3418 = vsel %vm3369, %v3403, 0.0
        %3419 = vadd.xlane.f32.xlu0 %v3418
        %v3420 = vpop.xlane.xlu0 %3419
        %v3421 = vsel %vm3369, %v3405, 0.0
        %3422 = vadd.xlane.f32.xlu0 %v3421
        %v3423 = vpop.xlane.xlu0 %3422
        %v3424 = vsel %vm3369, %v3407, 0.0
        %3425 = vadd.xlane.f32.xlu0 %v3424
        %v3426 = vpop.xlane.xlu0 %3425
        %v3427 = vsel %vm3369, %v3409, 0.0
        %3428 = vadd.xlane.f32.xlu0 %v3427
        %v3429 = vpop.xlane.xlu0 %3428
        %v3430 = vsel %vm3369, %v3411, 0.0
        %3431 = vadd.xlane.f32.xlu0 %v3430
        %v3432 = vpop.xlane.xlu0 %3431
        %v3433 = vsel %vm3369, %v3413, 0.0
        %3434 = vadd.xlane.f32.xlu0 %v3433
        %v3435 = vpop.xlane.xlu0 %3434
        %v3436 = vsel %vm3369, %v3415, 0.0
        %3437 = vadd.xlane.f32.xlu0 %v3436
        %v3438 = vpop.xlane.xlu0 %3437
        %v3439 = vsel %vm3369, %v3417, 0.0
        %3440 = vadd.xlane.f32.xlu0 %v3439
        %v3441 = vpop.xlane.xlu0 %3440
        %v3442 = vpack.c.bf16 %v3403, %v3403
        %v3443 = vpack.c.bf16 %v3405, %v3405
        %v3444 = vpack.c.bf16 %v3407, %v3407
        %v3445 = vpack.c.bf16 %v3409, %v3409
        %v3446 = vpack.c.bf16 %v3411, %v3411
        %v3447 = vpack.c.bf16 %v3413, %v3413
        %v3448 = vpack.c.bf16 %v3415, %v3415
        %v3449 = vpack.c.bf16 %v3417, %v3417
        %v3452 = vunpack.c.l.b16 %v2889
        %v3453 = vunpack.c.l.b16 %v2890
        %v3454 = vpack.c.b16 %v3453, %v3452
        %v3456 = vsel %vm3369, %v3442, 0
        %vm3458 = vcmask 1045504
        %v3460 = vsel %vm3458, %v3454, 0
        %3462 = vmatprep.subr.bf16.mxu0 0
        %3463 = vmatpush1.bf16.msra.mxu0 %v3460
        %3464 = vmatprep.subr.bf16.mxu0 0
        %3465 = vmatpush1.bf16.msra.mxu0 0
        %3466 = vmatprep.subr.bf16.mxu0 0
        %3467 = vmatpush1.bf16.msra.mxu0 0
        %3468 = vmatprep.subr.bf16.mxu0 0
        %3469 = vmatpush1.bf16.msra.mxu0 0
        %3470 = vmatprep.subr.bf16.mxu0 0
        %3471 = vmatpush1.bf16.msra.mxu0 0
        %3472 = vmatprep.subr.bf16.mxu0 0
        %3473 = vmatpush1.bf16.msra.mxu0 0
        %3474 = vmatprep.subr.bf16.mxu0 0
        %3475 = vmatpush1.bf16.msra.mxu0 0
        %3476 = vmatprep.subr.bf16.mxu0 0
        %3477 = vmatpush1.bf16.msra.mxu0 0
        %3478 = vmatprep.subr.bf16.mxu0 0
        %3479 = vmatpush1.bf16.msra.mxu0 0
        %3480 = vmatprep.subr.bf16.mxu0 0
        %3481 = vmatpush1.bf16.msra.mxu0 0
        %3482 = vmatprep.subr.bf16.mxu0 0
        %3483 = vmatpush1.bf16.msra.mxu0 0
        %3484 = vmatprep.subr.bf16.mxu0 0
        %3485 = vmatpush1.bf16.msra.mxu0 0
        %3486 = vmatprep.subr.bf16.mxu0 0
        %3487 = vmatpush1.bf16.msra.mxu0 0
        %3488 = vmatprep.subr.bf16.mxu0 0
        %3489 = vmatpush1.bf16.msra.mxu0 0
        %3490 = vmatprep.subr.bf16.mxu0 0
        %3491 = vmatpush1.bf16.msra.mxu0 0
        %3492 = vmatprep.subr.bf16.mxu0 0
        %3493 = vmatpush1.bf16.msra.mxu0 0
        %3494 = vmatprep.mubr.bf16.mxu0 0
        %3495 = vmatmul.mubr.bf16.gmra.mrb[0].mxu0 %v3456
        %v3496 = vpop.f32.mrb[0].mxu0
        %v3497 = vadd.f32 0.0, %v3496
        %v3498 = vpop.f32.mrb[0].mxu0
        %v3499 = vpop.f32.mrb[0].mxu0
        %v3500 = vpop.f32.mrb[0].mxu0
        %3501 = vdwg.mxu0
        %v3504 = vunpack.c.l.b16 %v2891
        %v3505 = vunpack.c.l.b16 %v2892
        %v3506 = vpack.c.b16 %v3505, %v3504
        %v3508 = vsel %vm3369, %v3443, 0
        %v3511 = vsel %vm3458, %v3506, 0
        %3513 = vmatprep.subr.bf16.mxu0 0
        %3514 = vmatpush1.bf16.msra.mxu0 %v3511
        %3515 = vmatprep.subr.bf16.mxu0 0
        %3516 = vmatpush1.bf16.msra.mxu0 0
        %3517 = vmatprep.subr.bf16.mxu0 0
        %3518 = vmatpush1.bf16.msra.mxu0 0
        %3519 = vmatprep.subr.bf16.mxu0 0
        %3520 = vmatpush1.bf16.msra.mxu0 0
        %3521 = vmatprep.subr.bf16.mxu0 0
        %3522 = vmatpush1.bf16.msra.mxu0 0
        %3523 = vmatprep.subr.bf16.mxu0 0
        %3524 = vmatpush1.bf16.msra.mxu0 0
        %3525 = vmatprep.subr.bf16.mxu0 0
        %3526 = vmatpush1.bf16.msra.mxu0 0
        %3527 = vmatprep.subr.bf16.mxu0 0
        %3528 = vmatpush1.bf16.msra.mxu0 0
        %3529 = vmatprep.subr.bf16.mxu0 0
        %3530 = vmatpush1.bf16.msra.mxu0 0
        %3531 = vmatprep.subr.bf16.mxu0 0
        %3532 = vmatpush1.bf16.msra.mxu0 0
        %3533 = vmatprep.subr.bf16.mxu0 0
        %3534 = vmatpush1.bf16.msra.mxu0 0
        %3535 = vmatprep.subr.bf16.mxu0 0
        %3536 = vmatpush1.bf16.msra.mxu0 0
        %3537 = vmatprep.subr.bf16.mxu0 0
        %3538 = vmatpush1.bf16.msra.mxu0 0
        %3539 = vmatprep.subr.bf16.mxu0 0
        %3540 = vmatpush1.bf16.msra.mxu0 0
        %3541 = vmatprep.subr.bf16.mxu0 0
        %3542 = vmatpush1.bf16.msra.mxu0 0
        %3543 = vmatprep.subr.bf16.mxu0 0
        %3544 = vmatpush1.bf16.msra.mxu0 0
        %3545 = vmatprep.mubr.bf16.mxu0 0
        %3546 = vmatmul.mubr.bf16.gmra.mrb[0].mxu0 %v3508
        %v3547 = vpop.f32.mrb[0].mxu0
        %v3548 = vadd.f32 0.0, %v3547
        %v3549 = vpop.f32.mrb[0].mxu0
        %v3550 = vpop.f32.mrb[0].mxu0
        %v3551 = vpop.f32.mrb[0].mxu0
        %3552 = vdwg.mxu0
        %v3555 = vunpack.c.l.b16 %v2893
        %v3556 = vunpack.c.l.b16 %v2894
        %v3557 = vpack.c.b16 %v3556, %v3555
        %v3559 = vsel %vm3369, %v3444, 0
        %v3562 = vsel %vm3458, %v3557, 0
        %3564 = vmatprep.subr.bf16.mxu0 0
        %3565 = vmatpush1.bf16.msra.mxu0 %v3562
        %3566 = vmatprep.subr.bf16.mxu0 0
        %3567 = vmatpush1.bf16.msra.mxu0 0
        %3568 = vmatprep.subr.bf16.mxu0 0
        %3569 = vmatpush1.bf16.msra.mxu0 0
        %3570 = vmatprep.subr.bf16.mxu0 0
        %3571 = vmatpush1.bf16.msra.mxu0 0
        %3572 = vmatprep.subr.bf16.mxu0 0
        %3573 = vmatpush1.bf16.msra.mxu0 0
        %3574 = vmatprep.subr.bf16.mxu0 0
        %3575 = vmatpush1.bf16.msra.mxu0 0
        %3576 = vmatprep.subr.bf16.mxu0 0
        %3577 = vmatpush1.bf16.msra.mxu0 0
        %3578 = vmatprep.subr.bf16.mxu0 0
        %3579 = vmatpush1.bf16.msra.mxu0 0
        %3580 = vmatprep.subr.bf16.mxu0 0
        %3581 = vmatpush1.bf16.msra.mxu0 0
        %3582 = vmatprep.subr.bf16.mxu0 0
        %3583 = vmatpush1.bf16.msra.mxu0 0
        %3584 = vmatprep.subr.bf16.mxu0 0
        %3585 = vmatpush1.bf16.msra.mxu0 0
        %3586 = vmatprep.subr.bf16.mxu0 0
        %3587 = vmatpush1.bf16.msra.mxu0 0
        %3588 = vmatprep.subr.bf16.mxu0 0
        %3589 = vmatpush1.bf16.msra.mxu0 0
        %3590 = vmatprep.subr.bf16.mxu0 0
        %3591 = vmatpush1.bf16.msra.mxu0 0
        %3592 = vmatprep.subr.bf16.mxu0 0
        %3593 = vmatpush1.bf16.msra.mxu0 0
        %3594 = vmatprep.subr.bf16.mxu0 0
        %3595 = vmatpush1.bf16.msra.mxu0 0
        %3596 = vmatprep.mubr.bf16.mxu0 0
        %3597 = vmatmul.mubr.bf16.gmra.mrb[0].mxu0 %v3559
        %v3598 = vpop.f32.mrb[0].mxu0
        %v3599 = vadd.f32 0.0, %v3598
        %v3600 = vpop.f32.mrb[0].mxu0
        %v3601 = vpop.f32.mrb[0].mxu0
        %v3602 = vpop.f32.mrb[0].mxu0
        %3603 = vdwg.mxu0
        %v3606 = vunpack.c.l.b16 %v2895
        %v3607 = vunpack.c.l.b16 %v2896
        %v3608 = vpack.c.b16 %v3607, %v3606
        %v3610 = vsel %vm3369, %v3445, 0
        %v3613 = vsel %vm3458, %v3608, 0
        %3615 = vmatprep.subr.bf16.mxu0 0
        %3616 = vmatpush1.bf16.msra.mxu0 %v3613
        %3617 = vmatprep.subr.bf16.mxu0 0
        %3618 = vmatpush1.bf16.msra.mxu0 0
        %3619 = vmatprep.subr.bf16.mxu0 0
        %3620 = vmatpush1.bf16.msra.mxu0 0
        %3621 = vmatprep.subr.bf16.mxu0 0
        %3622 = vmatpush1.bf16.msra.mxu0 0
        %3623 = vmatprep.subr.bf16.mxu0 0
        %3624 = vmatpush1.bf16.msra.mxu0 0
        %3625 = vmatprep.subr.bf16.mxu0 0
        %3626 = vmatpush1.bf16.msra.mxu0 0
        %3627 = vmatprep.subr.bf16.mxu0 0
        %3628 = vmatpush1.bf16.msra.mxu0 0
        %3629 = vmatprep.subr.bf16.mxu0 0
        %3630 = vmatpush1.bf16.msra.mxu0 0
        %3631 = vmatprep.subr.bf16.mxu0 0
        %3632 = vmatpush1.bf16.msra.mxu0 0
        %3633 = vmatprep.subr.bf16.mxu0 0
        %3634 = vmatpush1.bf16.msra.mxu0 0
        %3635 = vmatprep.subr.bf16.mxu0 0
        %3636 = vmatpush1.bf16.msra.mxu0 0
        %3637 = vmatprep.subr.bf16.mxu0 0
        %3638 = vmatpush1.bf16.msra.mxu0 0
        %3639 = vmatprep.subr.bf16.mxu0 0
        %3640 = vmatpush1.bf16.msra.mxu0 0
        %3641 = vmatprep.subr.bf16.mxu0 0
        %3642 = vmatpush1.bf16.msra.mxu0 0
        %3643 = vmatprep.subr.bf16.mxu0 0
        %3644 = vmatpush1.bf16.msra.mxu0 0
        %3645 = vmatprep.subr.bf16.mxu0 0
        %3646 = vmatpush1.bf16.msra.mxu0 0
        %3647 = vmatprep.mubr.bf16.mxu0 0
        %3648 = vmatmul.mubr.bf16.gmra.mrb[0].mxu0 %v3610
        %v3649 = vpop.f32.mrb[0].mxu0
        %v3650 = vadd.f32 0.0, %v3649
        %v3651 = vpop.f32.mrb[0].mxu0
        %v3652 = vpop.f32.mrb[0].mxu0
        %v3653 = vpop.f32.mrb[0].mxu0
        %3654 = vdwg.mxu0
        %v3657 = vunpack.c.l.b16 %v2897
        %v3658 = vunpack.c.l.b16 %v2898
        %v3659 = vpack.c.b16 %v3658, %v3657
        %v3661 = vsel %vm3369, %v3446, 0
        %v3664 = vsel %vm3458, %v3659, 0
        %3666 = vmatprep.subr.bf16.mxu0 0
        %3667 = vmatpush1.bf16.msra.mxu0 %v3664
        %3668 = vmatprep.subr.bf16.mxu0 0
        %3669 = vmatpush1.bf16.msra.mxu0 0
        %3670 = vmatprep.subr.bf16.mxu0 0
        %3671 = vmatpush1.bf16.msra.mxu0 0
        %3672 = vmatprep.subr.bf16.mxu0 0
        %3673 = vmatpush1.bf16.msra.mxu0 0
        %3674 = vmatprep.subr.bf16.mxu0 0
        %3675 = vmatpush1.bf16.msra.mxu0 0
        %3676 = vmatprep.subr.bf16.mxu0 0
        %3677 = vmatpush1.bf16.msra.mxu0 0
        %3678 = vmatprep.subr.bf16.mxu0 0
        %3679 = vmatpush1.bf16.msra.mxu0 0
        %3680 = vmatprep.subr.bf16.mxu0 0
        %3681 = vmatpush1.bf16.msra.mxu0 0
        %3682 = vmatprep.subr.bf16.mxu0 0
        %3683 = vmatpush1.bf16.msra.mxu0 0
        %3684 = vmatprep.subr.bf16.mxu0 0
        %3685 = vmatpush1.bf16.msra.mxu0 0
        %3686 = vmatprep.subr.bf16.mxu0 0
        %3687 = vmatpush1.bf16.msra.mxu0 0
        %3688 = vmatprep.subr.bf16.mxu0 0
        %3689 = vmatpush1.bf16.msra.mxu0 0
        %3690 = vmatprep.subr.bf16.mxu0 0
        %3691 = vmatpush1.bf16.msra.mxu0 0
        %3692 = vmatprep.subr.bf16.mxu0 0
        %3693 = vmatpush1.bf16.msra.mxu0 0
        %3694 = vmatprep.subr.bf16.mxu0 0
        %3695 = vmatpush1.bf16.msra.mxu0 0
        %3696 = vmatprep.subr.bf16.mxu0 0
        %3697 = vmatpush1.bf16.msra.mxu0 0
        %3698 = vmatprep.mubr.bf16.mxu0 0
        %3699 = vmatmul.mubr.bf16.gmra.mrb[0].mxu0 %v3661
        %v3700 = vpop.f32.mrb[0].mxu0
        %v3701 = vadd.f32 0.0, %v3700
        %v3702 = vpop.f32.mrb[0].mxu0
        %v3703 = vpop.f32.mrb[0].mxu0
        %v3704 = vpop.f32.mrb[0].mxu0
        %3705 = vdwg.mxu0
        %v3708 = vunpack.c.l.b16 %v2899
        %v3709 = vunpack.c.l.b16 %v2900
        %v3710 = vpack.c.b16 %v3709, %v3708
        %v3712 = vsel %vm3369, %v3447, 0
        %v3715 = vsel %vm3458, %v3710, 0
        %3717 = vmatprep.subr.bf16.mxu0 0
        %3718 = vmatpush1.bf16.msra.mxu0 %v3715
        %3719 = vmatprep.subr.bf16.mxu0 0
        %3720 = vmatpush1.bf16.msra.mxu0 0
        %3721 = vmatprep.subr.bf16.mxu0 0
        %3722 = vmatpush1.bf16.msra.mxu0 0
        %3723 = vmatprep.subr.bf16.mxu0 0
        %3724 = vmatpush1.bf16.msra.mxu0 0
        %3725 = vmatprep.subr.bf16.mxu0 0
        %3726 = vmatpush1.bf16.msra.mxu0 0
        %3727 = vmatprep.subr.bf16.mxu0 0
        %3728 = vmatpush1.bf16.msra.mxu0 0
        %3729 = vmatprep.subr.bf16.mxu0 0
        %3730 = vmatpush1.bf16.msra.mxu0 0
        %3731 = vmatprep.subr.bf16.mxu0 0
        %3732 = vmatpush1.bf16.msra.mxu0 0
        %3733 = vmatprep.subr.bf16.mxu0 0
        %3734 = vmatpush1.bf16.msra.mxu0 0
        %3735 = vmatprep.subr.bf16.mxu0 0
        %3736 = vmatpush1.bf16.msra.mxu0 0
        %3737 = vmatprep.subr.bf16.mxu0 0
        %3738 = vmatpush1.bf16.msra.mxu0 0
        %3739 = vmatprep.subr.bf16.mxu0 0
        %3740 = vmatpush1.bf16.msra.mxu0 0
        %3741 = vmatprep.subr.bf16.mxu0 0
        %3742 = vmatpush1.bf16.msra.mxu0 0
        %3743 = vmatprep.subr.bf16.mxu0 0
        %3744 = vmatpush1.bf16.msra.mxu0 0
        %3745 = vmatprep.subr.bf16.mxu0 0
        %3746 = vmatpush1.bf16.msra.mxu0 0
        %3747 = vmatprep.subr.bf16.mxu0 0
        %3748 = vmatpush1.bf16.msra.mxu0 0
        %3749 = vmatprep.mubr.bf16.mxu0 0
        %3750 = vmatmul.mubr.bf16.gmra.mrb[0].mxu0 %v3712
        %v3751 = vpop.f32.mrb[0].mxu0
        %v3752 = vadd.f32 0.0, %v3751
        %v3753 = vpop.f32.mrb[0].mxu0
        %v3754 = vpop.f32.mrb[0].mxu0
        %v3755 = vpop.f32.mrb[0].mxu0
        %3756 = vdwg.mxu0
        %v3759 = vunpack.c.l.b16 %v2901
        %v3760 = vunpack.c.l.b16 %v2902
        %v3761 = vpack.c.b16 %v3760, %v3759
        %v3763 = vsel %vm3369, %v3448, 0
        %v3766 = vsel %vm3458, %v3761, 0
        %3768 = vmatprep.subr.bf16.mxu0 0
        %3769 = vmatpush1.bf16.msra.mxu0 %v3766
        %3770 = vmatprep.subr.bf16.mxu0 0
        %3771 = vmatpush1.bf16.msra.mxu0 0
        %3772 = vmatprep.subr.bf16.mxu0 0
        %3773 = vmatpush1.bf16.msra.mxu0 0
        %3774 = vmatprep.subr.bf16.mxu0 0
        %3775 = vmatpush1.bf16.msra.mxu0 0
        %3776 = vmatprep.subr.bf16.mxu0 0
        %3777 = vmatpush1.bf16.msra.mxu0 0
        %3778 = vmatprep.subr.bf16.mxu0 0
        %3779 = vmatpush1.bf16.msra.mxu0 0
        %3780 = vmatprep.subr.bf16.mxu0 0
        %3781 = vmatpush1.bf16.msra.mxu0 0
        %3782 = vmatprep.subr.bf16.mxu0 0
        %3783 = vmatpush1.bf16.msra.mxu0 0
        %3784 = vmatprep.subr.bf16.mxu0 0
        %3785 = vmatpush1.bf16.msra.mxu0 0
        %3786 = vmatprep.subr.bf16.mxu0 0
        %3787 = vmatpush1.bf16.msra.mxu0 0
        %3788 = vmatprep.subr.bf16.mxu0 0
        %3789 = vmatpush1.bf16.msra.mxu0 0
        %3790 = vmatprep.subr.bf16.mxu0 0
        %3791 = vmatpush1.bf16.msra.mxu0 0
        %3792 = vmatprep.subr.bf16.mxu0 0
        %3793 = vmatpush1.bf16.msra.mxu0 0
        %3794 = vmatprep.subr.bf16.mxu0 0
        %3795 = vmatpush1.bf16.msra.mxu0 0
        %3796 = vmatprep.subr.bf16.mxu0 0
        %3797 = vmatpush1.bf16.msra.mxu0 0
        %3798 = vmatprep.subr.bf16.mxu0 0
        %3799 = vmatpush1.bf16.msra.mxu0 0
        %3800 = vmatprep.mubr.bf16.mxu0 0
        %3801 = vmatmul.mubr.bf16.gmra.mrb[0].mxu0 %v3763
        %v3802 = vpop.f32.mrb[0].mxu0
        %v3803 = vadd.f32 0.0, %v3802
        %v3804 = vpop.f32.mrb[0].mxu0
        %v3805 = vpop.f32.mrb[0].mxu0
        %v3806 = vpop.f32.mrb[0].mxu0
        %3807 = vdwg.mxu0
        %v3810 = vunpack.c.l.b16 %v2903
        %v3811 = vunpack.c.l.b16 %v2904
        %v3812 = vpack.c.b16 %v3811, %v3810
        %v3814 = vsel %vm3369, %v3449, 0
        %v3817 = vsel %vm3458, %v3812, 0
        %3819 = vmatprep.subr.bf16.mxu0 0
        %3820 = vmatpush1.bf16.msra.mxu0 %v3817
        %3821 = vmatprep.subr.bf16.mxu0 0
        %3822 = vmatpush1.bf16.msra.mxu0 0
        %3823 = vmatprep.subr.bf16.mxu0 0
        %3824 = vmatpush1.bf16.msra.mxu0 0
        %3825 = vmatprep.subr.bf16.mxu0 0
        %3826 = vmatpush1.bf16.msra.mxu0 0
        %3827 = vmatprep.subr.bf16.mxu0 0
        %3828 = vmatpush1.bf16.msra.mxu0 0
        %3829 = vmatprep.subr.bf16.mxu0 0
        %3830 = vmatpush1.bf16.msra.mxu0 0
        %3831 = vmatprep.subr.bf16.mxu0 0
        %3832 = vmatpush1.bf16.msra.mxu0 0
        %3833 = vmatprep.subr.bf16.mxu0 0
        %3834 = vmatpush1.bf16.msra.mxu0 0
        %3835 = vmatprep.subr.bf16.mxu0 0
        %3836 = vmatpush1.bf16.msra.mxu0 0
        %3837 = vmatprep.subr.bf16.mxu0 0
        %3838 = vmatpush1.bf16.msra.mxu0 0
        %3839 = vmatprep.subr.bf16.mxu0 0
        %3840 = vmatpush1.bf16.msra.mxu0 0
        %3841 = vmatprep.subr.bf16.mxu0 0
        %3842 = vmatpush1.bf16.msra.mxu0 0
        %3843 = vmatprep.subr.bf16.mxu0 0
        %3844 = vmatpush1.bf16.msra.mxu0 0
        %3845 = vmatprep.subr.bf16.mxu0 0
        %3846 = vmatpush1.bf16.msra.mxu0 0
        %3847 = vmatprep.subr.bf16.mxu0 0
        %3848 = vmatpush1.bf16.msra.mxu0 0
        %3849 = vmatprep.subr.bf16.mxu0 0
        %3850 = vmatpush1.bf16.msra.mxu0 0
        %3851 = vmatprep.mubr.bf16.mxu0 0
        %3852 = vmatmul.mubr.bf16.gmra.mrb[0].mxu0 %v3814
        %v3853 = vpop.f32.mrb[0].mxu0
        %v3854 = vadd.f32 0.0, %v3853
        %v3855 = vpop.f32.mrb[0].mxu0
        %v3856 = vpop.f32.mrb[0].mxu0
        %v3857 = vpop.f32.mrb[0].mxu0
        %3858 = vdwg.mxu0
        %v3859 = vrcp.pop %v3420
        %v3860 = vrcp.pop %v3423
        %v3861 = vrcp.pop %v3426
        %v3862 = vrcp.pop %v3429
        %v3863 = vrcp.pop %v3432
        %v3864 = vrcp.pop %v3435
        %v3865 = vrcp.pop %v3438
        %v3866 = vrcp.pop %v3441
        %v3867 = vmul.f32 %v3497, %v3859
        %v3868 = vmul.f32 %v3548, %v3860
        %v3869 = vmul.f32 %v3599, %v3861
        %v3870 = vmul.f32 %v3650, %v3862
        %v3871 = vmul.f32 %v3701, %v3863
        %v3872 = vmul.f32 %v3752, %v3864
        %v3873 = vmul.f32 %v3803, %v3865
        %v3874 = vmul.f32 %v3854, %v3866
        %v3875 = vpack.c.bf16 %v3868, %v3867
        %v3876 = vpack.c.bf16 %v3870, %v3869
        %v3877 = vpack.c.bf16 %v3872, %v3871
        %v3878 = vpack.c.bf16 %v3874, %v3873
        %v3879 = vld [vmem:[%s712] sm:$0xf]
        %v3880 = vld [vmem:[%s712 + $0x4] sm:$0xf]
        %v3881 = vld [vmem:[%s712 + $0x8] sm:$0xf]
        %v3882 = vld [vmem:[%s712 + $0xc] sm:$0xf]
        %v3884 = vsel %vm1528, %v3875, 0
        %v3887 = vsel %vm1990, %v3879, 0
        %3889 = vmatprep.subr.bf16.mxu0 0
        %3890 = vmatpush1.bf16.msra.mxu0 %v3887
        %3891 = vmatprep.subr.bf16.mxu0 0
        %3892 = vmatpush1.bf16.msra.mxu0 0
        %3893 = vmatprep.subr.bf16.mxu0 0
        %3894 = vmatpush1.bf16.msra.mxu0 0
        %3895 = vmatprep.subr.bf16.mxu0 0
        %3896 = vmatpush1.bf16.msra.mxu0 0
        %3897 = vmatprep.subr.bf16.mxu0 0
        %3898 = vmatpush1.bf16.msra.mxu0 0
        %3899 = vmatprep.subr.bf16.mxu0 0
        %3900 = vmatpush1.bf16.msra.mxu0 0
        %3901 = vmatprep.subr.bf16.mxu0 0
        %3902 = vmatpush1.bf16.msra.mxu0 0
        %3903 = vmatprep.subr.bf16.mxu0 0
        %3904 = vmatpush1.bf16.msra.mxu0 0
        %3905 = vmatprep.subr.bf16.mxu0 0
        %3906 = vmatpush1.bf16.msra.mxu0 0
        %3907 = vmatprep.subr.bf16.mxu0 0
        %3908 = vmatpush1.bf16.msra.mxu0 0
        %3909 = vmatprep.subr.bf16.mxu0 0
        %3910 = vmatpush1.bf16.msra.mxu0 0
        %3911 = vmatprep.subr.bf16.mxu0 0
        %3912 = vmatpush1.bf16.msra.mxu0 0
        %3913 = vmatprep.subr.bf16.mxu0 0
        %3914 = vmatpush1.bf16.msra.mxu0 0
        %3915 = vmatprep.subr.bf16.mxu0 0
        %3916 = vmatpush1.bf16.msra.mxu0 0
        %3917 = vmatprep.subr.bf16.mxu0 0
        %3918 = vmatpush1.bf16.msra.mxu0 0
        %3919 = vmatprep.subr.bf16.mxu0 0
        %3920 = vmatpush1.bf16.msra.mxu0 0
        %3921 = vmatprep.mubr.bf16.mxu0 0
        %3922 = vmatmul.mubr.bf16.gmra.mrb[0].mxu0 %v3884
        %v3923 = vpop.f32.mrb[0].mxu0
        %v3924 = vadd.f32 0.0, %v3923
        %v3925 = vpop.f32.mrb[0].mxu0
        %v3926 = vpop.f32.mrb[0].mxu0
        %v3927 = vadd.f32 0.0, %v3926
        %v3928 = vpop.f32.mrb[0].mxu0
        %3929 = vdwg.mxu0
        %v3931 = vsel %vm1528, %v3876, 0
        %v3934 = vsel %vm1990, %v3880, 0
        %3936 = vmatprep.subr.bf16.mxu0 0
        %3937 = vmatpush1.bf16.msra.mxu0 %v3934
        %3938 = vmatprep.subr.bf16.mxu0 0
        %3939 = vmatpush1.bf16.msra.mxu0 0
        %3940 = vmatprep.subr.bf16.mxu0 0
        %3941 = vmatpush1.bf16.msra.mxu0 0
        %3942 = vmatprep.subr.bf16.mxu0 0
        %3943 = vmatpush1.bf16.msra.mxu0 0
        %3944 = vmatprep.subr.bf16.mxu0 0
        %3945 = vmatpush1.bf16.msra.mxu0 0
        %3946 = vmatprep.subr.bf16.mxu0 0
        %3947 = vmatpush1.bf16.msra.mxu0 0
        %3948 = vmatprep.subr.bf16.mxu0 0
        %3949 = vmatpush1.bf16.msra.mxu0 0
        %3950 = vmatprep.subr.bf16.mxu0 0
        %3951 = vmatpush1.bf16.msra.mxu0 0
        %3952 = vmatprep.subr.bf16.mxu0 0
        %3953 = vmatpush1.bf16.msra.mxu0 0
        %3954 = vmatprep.subr.bf16.mxu0 0
        %3955 = vmatpush1.bf16.msra.mxu0 0
        %3956 = vmatprep.subr.bf16.mxu0 0
        %3957 = vmatpush1.bf16.msra.mxu0 0
        %3958 = vmatprep.subr.bf16.mxu0 0
        %3959 = vmatpush1.bf16.msra.mxu0 0
        %3960 = vmatprep.subr.bf16.mxu0 0
        %3961 = vmatpush1.bf16.msra.mxu0 0
        %3962 = vmatprep.subr.bf16.mxu0 0
        %3963 = vmatpush1.bf16.msra.mxu0 0
        %3964 = vmatprep.subr.bf16.mxu0 0
        %3965 = vmatpush1.bf16.msra.mxu0 0
        %3966 = vmatprep.subr.bf16.mxu0 0
        %3967 = vmatpush1.bf16.msra.mxu0 0
        %3968 = vmatprep.mubr.bf16.mxu0 0
        %3969 = vmatmul.mubr.bf16.gmra.mrb[0].mxu0 %v3931
        %v3970 = vpop.f32.mrb[0].mxu0
        %v3971 = vadd.f32 0.0, %v3970
        %v3972 = vpop.f32.mrb[0].mxu0
        %v3973 = vpop.f32.mrb[0].mxu0
        %v3974 = vadd.f32 0.0, %v3973
        %v3975 = vpop.f32.mrb[0].mxu0
        %3976 = vdwg.mxu0
        %v3978 = vsel %vm1528, %v3877, 0
        %v3981 = vsel %vm1990, %v3881, 0
        %3983 = vmatprep.subr.bf16.mxu0 0
        %3984 = vmatpush1.bf16.msra.mxu0 %v3981
        %3985 = vmatprep.subr.bf16.mxu0 0
        %3986 = vmatpush1.bf16.msra.mxu0 0
        %3987 = vmatprep.subr.bf16.mxu0 0
        %3988 = vmatpush1.bf16.msra.mxu0 0
        %3989 = vmatprep.subr.bf16.mxu0 0
        %3990 = vmatpush1.bf16.msra.mxu0 0
        %3991 = vmatprep.subr.bf16.mxu0 0
        %3992 = vmatpush1.bf16.msra.mxu0 0
        %3993 = vmatprep.subr.bf16.mxu0 0
        %3994 = vmatpush1.bf16.msra.mxu0 0
        %3995 = vmatprep.subr.bf16.mxu0 0
        %3996 = vmatpush1.bf16.msra.mxu0 0
        %3997 = vmatprep.subr.bf16.mxu0 0
        %3998 = vmatpush1.bf16.msra.mxu0 0
        %3999 = vmatprep.subr.bf16.mxu0 0
        %4000 = vmatpush1.bf16.msra.mxu0 0
        %4001 = vmatprep.subr.bf16.mxu0 0
        %4002 = vmatpush1.bf16.msra.mxu0 0
        %4003 = vmatprep.subr.bf16.mxu0 0
        %4004 = vmatpush1.bf16.msra.mxu0 0
        %4005 = vmatprep.subr.bf16.mxu0 0
        %4006 = vmatpush1.bf16.msra.mxu0 0
        %4007 = vmatprep.subr.bf16.mxu0 0
        %4008 = vmatpush1.bf16.msra.mxu0 0
        %4009 = vmatprep.subr.bf16.mxu0 0
        %4010 = vmatpush1.bf16.msra.mxu0 0
        %4011 = vmatprep.subr.bf16.mxu0 0
        %4012 = vmatpush1.bf16.msra.mxu0 0
        %4013 = vmatprep.subr.bf16.mxu0 0
        %4014 = vmatpush1.bf16.msra.mxu0 0
        %4015 = vmatprep.mubr.bf16.mxu0 0
        %4016 = vmatmul.mubr.bf16.gmra.mrb[0].mxu0 %v3978
        %v4017 = vpop.f32.mrb[0].mxu0
        %v4018 = vadd.f32 0.0, %v4017
        %v4019 = vpop.f32.mrb[0].mxu0
        %v4020 = vpop.f32.mrb[0].mxu0
        %v4021 = vadd.f32 0.0, %v4020
        %v4022 = vpop.f32.mrb[0].mxu0
        %4023 = vdwg.mxu0
        %v4025 = vsel %vm1528, %v3878, 0
        %v4028 = vsel %vm1990, %v3882, 0
        %4030 = vmatprep.subr.bf16.mxu0 0
        %4031 = vmatpush1.bf16.msra.mxu0 %v4028
        %4032 = vmatprep.subr.bf16.mxu0 0
        %4033 = vmatpush1.bf16.msra.mxu0 0
        %4034 = vmatprep.subr.bf16.mxu0 0
        %4035 = vmatpush1.bf16.msra.mxu0 0
        %4036 = vmatprep.subr.bf16.mxu0 0
        %4037 = vmatpush1.bf16.msra.mxu0 0
        %4038 = vmatprep.subr.bf16.mxu0 0
        %4039 = vmatpush1.bf16.msra.mxu0 0
        %4040 = vmatprep.subr.bf16.mxu0 0
        %4041 = vmatpush1.bf16.msra.mxu0 0
        %4042 = vmatprep.subr.bf16.mxu0 0
        %4043 = vmatpush1.bf16.msra.mxu0 0
        %4044 = vmatprep.subr.bf16.mxu0 0
        %4045 = vmatpush1.bf16.msra.mxu0 0
        %4046 = vmatprep.subr.bf16.mxu0 0
        %4047 = vmatpush1.bf16.msra.mxu0 0
        %4048 = vmatprep.subr.bf16.mxu0 0
        %4049 = vmatpush1.bf16.msra.mxu0 0
        %4050 = vmatprep.subr.bf16.mxu0 0
        %4051 = vmatpush1.bf16.msra.mxu0 0
        %4052 = vmatprep.subr.bf16.mxu0 0
        %4053 = vmatpush1.bf16.msra.mxu0 0
        %4054 = vmatprep.subr.bf16.mxu0 0
        %4055 = vmatpush1.bf16.msra.mxu0 0
        %4056 = vmatprep.subr.bf16.mxu0 0
        %4057 = vmatpush1.bf16.msra.mxu0 0
        %4058 = vmatprep.subr.bf16.mxu0 0
        %4059 = vmatpush1.bf16.msra.mxu0 0
        %4060 = vmatprep.subr.bf16.mxu0 0
        %4061 = vmatpush1.bf16.msra.mxu0 0
        %4062 = vmatprep.mubr.bf16.mxu0 0
        %4063 = vmatmul.mubr.bf16.gmra.mrb[0].mxu0 %v4025
        %v4064 = vpop.f32.mrb[0].mxu0
        %v4065 = vadd.f32 0.0, %v4064
        %v4066 = vpop.f32.mrb[0].mxu0
        %v4067 = vpop.f32.mrb[0].mxu0
        %v4068 = vadd.f32 0.0, %v4067
        %v4069 = vpop.f32.mrb[0].mxu0
        %4070 = vdwg.mxu0
        %v4071 = vadd.f32 %v3924, %v3971
        %v4072 = vadd.f32 %v3927, %v3974
        %v4073 = vadd.f32 %v4071, %v4018
        %v4074 = vadd.f32 %v4072, %v4021
        %v4075 = vadd.f32 %v4073, %v4065
        %v4076 = vadd.f32 %v4074, %v4068
        %v4077 = vadd.f32 %v2615, %v4075
        %v4078 = vadd.f32 %v2616, %v4076
        %v4079 = vld [vmem:[%s732 + $0x1] sm:$0x1]
        %v4080 = vld [vmem:[%s736 + $0x1] sm:$0x1]
        %v4081 = vsel %vm828, %v4077, 0.0
        %4082 = vadd.xlane.f32.xlu0 %v4081
        %v4083 = vpop.xlane.xlu0 %4082
        %v4084 = vsel %vm828, %v4078, 0.0
        %4085 = vadd.xlane.f32.xlu0 %v4084
        %v4086 = vpop.xlane.xlu0 %4085
        %v4087 = vmul.f32 %v4083, %v2584
        %v4088 = vmul.f32 %v4086, %v2584
        %v4089 = vsub.f32 %v4077, %v4087
        %v4090 = vsub.f32 %v4078, %v4088
        %v4091 = vmul.f32 %v4089, %v4089
        %v4092 = vmul.f32 %v4090, %v4090
        %v4093 = vsel %vm828, %v4091, 0.0
        %4094 = vadd.xlane.f32.xlu0 %v4093
        %v4095 = vpop.xlane.xlu0 %4094
        %v4096 = vsel %vm828, %v4092, 0.0
        %4097 = vadd.xlane.f32.xlu0 %v4096
        %v4098 = vpop.xlane.xlu0 %4097
        %v4099 = vmul.f32 %v4095, %v2584
        %v4100 = vmul.f32 %v4098, %v2584
        %v4101 = vadd.f32 %v4099, 1e-05
        %v4102 = vadd.f32 %v4100, 1e-05
        %v4103 = vrsqrt.pop %v4101
        %v4104 = vrsqrt.pop %v4102
        %v4105 = vmul.f32 %v4089, %v4103
        %v4106 = vmul.f32 %v4090, %v4104
        %v4107 = vlaneseq
        %v4108 = vshrl.u32 %v4107, 7
        %v4109 = vsub.s32 0, %v4108
        %v4110 = vrot.slane %v4079, %v4109
        %v4111 = vmul.f32 %v4105, %v4110
        %v4112 = vmul.f32 %v4106, %v4110
        %v4113 = vlaneseq
        %v4114 = vshrl.u32 %v4113, 7
        %v4115 = vsub.s32 0, %v4114
        %v4116 = vrot.slane %v4080, %v4115
        %v4117 = vadd.f32 %v4111, %v4116
        %v4118 = vadd.f32 %v4112, %v4116
        %v4119 = vpack.c.bf16 %v4118, %v4117
        %v4120 = vld [vmem:[%s717] sm:$0xf]
        %v4121 = vld [vmem:[%s717 + $0x4] sm:$0xf]
        %v4122 = vld [vmem:[%s717 + $0x8] sm:$0xf]
        %v4123 = vld [vmem:[%s717 + $0xc] sm:$0xf]
        %v4124 = vld [vmem:[%s720] sm:$0x1]
        %v4126 = vlaneseq
        %v4127 = vshrl.u32 %v4126, 7
        %v4128 = vsub.s32 0, %v4127
        %v4129 = vrot.slane %v4124, %v4128
        %v4135 = vunpack.c.l.b16 %v4120
        %v4136 = vunpack.c.l.b16 %v4121
        %v4137 = vunpack.c.l.b16 %v4122
        %v4138 = vunpack.c.l.b16 %v4123
        %v4139 = vpack.c.b16 %v4136, %v4135
        %v4140 = vpack.c.b16 %v4138, %v4137
        %v4144 = vsel %vm828, %v4119, 0
        %4146 = vmatprep.subr.bf16.mxu0 0
        %4147 = vmatpush1.bf16.msra.mxu0 %v4139
        %4148 = vmatprep.subr.bf16.mxu0 0
        %4149 = vmatpush1.bf16.msra.mxu0 %v4140
        %4150 = vmatprep.subr.bf16.mxu0 0
        %4151 = vmatpush1.bf16.msra.mxu0 0
        %4152 = vmatprep.subr.bf16.mxu0 0
        %4153 = vmatpush1.bf16.msra.mxu0 0
        %4154 = vmatprep.subr.bf16.mxu0 0
        %4155 = vmatpush1.bf16.msra.mxu0 0
        %4156 = vmatprep.subr.bf16.mxu0 0
        %4157 = vmatpush1.bf16.msra.mxu0 0
        %4158 = vmatprep.subr.bf16.mxu0 0
        %4159 = vmatpush1.bf16.msra.mxu0 0
        %4160 = vmatprep.subr.bf16.mxu0 0
        %4161 = vmatpush1.bf16.msra.mxu0 0
        %4162 = vmatprep.subr.bf16.mxu0 0
        %4163 = vmatpush1.bf16.msra.mxu0 0
        %4164 = vmatprep.subr.bf16.mxu0 0
        %4165 = vmatpush1.bf16.msra.mxu0 0
        %4166 = vmatprep.subr.bf16.mxu0 0
        %4167 = vmatpush1.bf16.msra.mxu0 0
        %4168 = vmatprep.subr.bf16.mxu0 0
        %4169 = vmatpush1.bf16.msra.mxu0 0
        %4170 = vmatprep.subr.bf16.mxu0 0
        %4171 = vmatpush1.bf16.msra.mxu0 0
        %4172 = vmatprep.subr.bf16.mxu0 0
        %4173 = vmatpush1.bf16.msra.mxu0 0
        %4174 = vmatprep.subr.bf16.mxu0 0
        %4175 = vmatpush1.bf16.msra.mxu0 0
        %4176 = vmatprep.subr.bf16.mxu0 0
        %4177 = vmatpush1.bf16.msra.mxu0 0
        %4178 = vmatprep.mubr.bf16.mxu0 0
        %4179 = vmatmul.mubr.bf16.gmra.mrb[0].mxu0 %v4144
        %v4180 = vpop.f32.mrb[0].mxu0
        %v4181 = vadd.f32 %v4129, %v4180
        %v4182 = vpop.f32.mrb[0].mxu0
        %v4183 = vpop.f32.mrb[0].mxu0
        %v4184 = vadd.f32 %v4129, %v4183
        %v4185 = vpop.f32.mrb[0].mxu0
        %4186 = vdwg.mxu0
        %v4187 = vmax.f32 %v4181, 0.0
        %v4188 = vmax.f32 %v4184, 0.0
        %v4189 = vpack.c.bf16 %v4188, %v4187
        %v4190 = vld [vmem:[%s725] sm:$0xf]
        %v4191 = vld [vmem:[%s725 + $0x4] sm:$0xf]
        %v4192 = vld [vmem:[%s725 + $0x8] sm:$0xf]
        %v4193 = vld [vmem:[%s725 + $0xc] sm:$0xf]
        %v4194 = vld [vmem:[%s725 + $0x10] sm:$0xf]
        %v4195 = vld [vmem:[%s725 + $0x14] sm:$0xf]
        %v4196 = vld [vmem:[%s725 + $0x18] sm:$0xf]
        %v4197 = vld [vmem:[%s725 + $0x1c] sm:$0xf]
        %v4198 = vld [vmem:[%s728] sm:$0x1]
        %v4200 = vlaneseq
        %v4201 = vshrl.u32 %v4200, 7
        %v4202 = vsub.s32 0, %v4201
        %v4203 = vrot.slane %v4198, %v4202
        %v4213 = vunpack.c.l.b16 %v4190
        %v4214 = vunpack.c.l.b16 %v4191
        %v4215 = vunpack.c.l.b16 %v4192
        %v4216 = vunpack.c.l.b16 %v4193
        %v4217 = vunpack.c.l.b16 %v4194
        %v4218 = vunpack.c.l.b16 %v4195
        %v4219 = vunpack.c.l.b16 %v4196
        %v4220 = vunpack.c.l.b16 %v4197
        %v4221 = vpack.c.b16 %v4214, %v4213
        %v4222 = vpack.c.b16 %v4216, %v4215
        %v4223 = vpack.c.b16 %v4218, %v4217
        %v4224 = vpack.c.b16 %v4220, %v4219
        %vm4229 = vcmask 523264
        %v4231 = vsel %vm4229, %v4189, 0
        %4233 = vmatprep.subr.bf16.mxu0 0
        %4234 = vmatpush1.bf16.msra.mxu0 %v4221
        %4235 = vmatprep.subr.bf16.mxu0 0
        %4236 = vmatpush1.bf16.msra.mxu0 %v4222
        %4237 = vmatprep.subr.bf16.mxu0 0
        %4238 = vmatpush1.bf16.msra.mxu0 %v4223
        %4239 = vmatprep.subr.bf16.mxu0 0
        %4240 = vmatpush1.bf16.msra.mxu0 %v4224
        %4241 = vmatprep.subr.bf16.mxu0 0
        %4242 = vmatpush1.bf16.msra.mxu0 0
        %4243 = vmatprep.subr.bf16.mxu0 0
        %4244 = vmatpush1.bf16.msra.mxu0 0
        %4245 = vmatprep.subr.bf16.mxu0 0
        %4246 = vmatpush1.bf16.msra.mxu0 0
        %4247 = vmatprep.subr.bf16.mxu0 0
        %4248 = vmatpush1.bf16.msra.mxu0 0
        %4249 = vmatprep.subr.bf16.mxu0 0
        %4250 = vmatpush1.bf16.msra.mxu0 0
        %4251 = vmatprep.subr.bf16.mxu0 0
        %4252 = vmatpush1.bf16.msra.mxu0 0
        %4253 = vmatprep.subr.bf16.mxu0 0
        %4254 = vmatpush1.bf16.msra.mxu0 0
        %4255 = vmatprep.subr.bf16.mxu0 0
        %4256 = vmatpush1.bf16.msra.mxu0 0
        %4257 = vmatprep.subr.bf16.mxu0 0
        %4258 = vmatpush1.bf16.msra.mxu0 0
        %4259 = vmatprep.subr.bf16.mxu0 0
        %4260 = vmatpush1.bf16.msra.mxu0 0
        %4261 = vmatprep.subr.bf16.mxu0 0
        %4262 = vmatpush1.bf16.msra.mxu0 0
        %4263 = vmatprep.subr.bf16.mxu0 0
        %4264 = vmatpush1.bf16.msra.mxu0 0
        %4265 = vmatprep.mubr.bf16.mxu0 0
        %4266 = vmatmul.mubr.bf16.gmra.mrb[0].mxu0 %v4231
        %v4267 = vpop.f32.mrb[0].mxu0
        %v4268 = vadd.f32 %v4203, %v4267
        %v4269 = vpop.f32.mrb[0].mxu0
        %v4270 = vpop.f32.mrb[0].mxu0
        %v4271 = vadd.f32 %v4203, %v4270
        %v4272 = vpop.f32.mrb[0].mxu0
        %4273 = vdwg.mxu0
        %v4274 = vadd.f32 %v4117, %v4268
        %v4275 = vadd.f32 %v4118, %v4271
        %v4276 = vld [vmem:[%s732 + $0x2] sm:$0x1]
        %v4277 = vld [vmem:[%s736 + $0x2] sm:$0x1]
        %v4278 = vsel %vm828, %v4274, 0.0
        %4279 = vadd.xlane.f32.xlu0 %v4278
        %v4280 = vpop.xlane.xlu0 %4279
        %v4281 = vsel %vm828, %v4275, 0.0
        %4282 = vadd.xlane.f32.xlu0 %v4281
        %v4283 = vpop.xlane.xlu0 %4282
        %v4284 = vmul.f32 %v4280, %v2584
        %v4285 = vmul.f32 %v4283, %v2584
        %v4286 = vsub.f32 %v4274, %v4284
        %v4287 = vsub.f32 %v4275, %v4285
        %v4288 = vmul.f32 %v4286, %v4286
        %v4289 = vmul.f32 %v4287, %v4287
        %v4290 = vsel %vm828, %v4288, 0.0
        %4291 = vadd.xlane.f32.xlu0 %v4290
        %v4292 = vpop.xlane.xlu0 %4291
        %v4293 = vsel %vm828, %v4289, 0.0
        %4294 = vadd.xlane.f32.xlu0 %v4293
        %v4295 = vpop.xlane.xlu0 %4294
        %v4296 = vmul.f32 %v4292, %v2584
        %v4297 = vmul.f32 %v4295, %v2584
        %v4298 = vadd.f32 %v4296, 1e-05
        %v4299 = vadd.f32 %v4297, 1e-05
        %v4300 = vrsqrt.pop %v4298
        %v4301 = vrsqrt.pop %v4299
        %v4302 = vmul.f32 %v4286, %v4300
        %v4303 = vmul.f32 %v4287, %v4301
        %v4304 = vlaneseq
        %v4305 = vshrl.u32 %v4304, 7
        %v4306 = vsub.s32 0, %v4305
        %v4307 = vrot.slane %v4276, %v4306
        %v4308 = vmul.f32 %v4302, %v4307
        %v4309 = vmul.f32 %v4303, %v4307
        %v4310 = vlaneseq
        %v4311 = vshrl.u32 %v4310, 7
        %v4312 = vsub.s32 0, %v4311
        %v4313 = vrot.slane %v4277, %v4312
        %v4314 = vadd.f32 %v4308, %v4313
        %v4315 = vadd.f32 %v4309, %v4313
        %4316 = vst.msk [vmem:[#allocation2] sm:$0xff] %vm828, %v4314
        %4317 = vst.msk [vmem:[#allocation2 + $0x8] sm:$0xff] %vm828, %v4315
        %p4318 = scmp.eq.s32.totalorder %s29, 1
        // Predicated region
        $region93: #{tpu_custom_call.1} parent=87 // pred_check
          %p4319 = pneg %p4318
        $region94: #{tpu_custom_call.1} parent=87 // pred_check_branch
          %4321 = sbr.rel (%p4319) target = $region96
        $region95: #{tpu_custom_call.1} parent=87 // pred_region
          %v4322 = vpack.c.bf16 %v4315, %v4314
          %v4323 = vld [vmem:[%s15] sm:$0xf]
          %v4324 = vld [vmem:[%s15 + $0x4] sm:$0xf]
          %v4325 = vld [vmem:[%s15 + $0x8] sm:$0xf]
          %v4326 = vld [vmem:[%s15 + $0xc] sm:$0xf]
          %v4327 = vld [vmem:[%s16] sm:$0x1]
          %v4329 = vlaneseq
          %v4330 = vshrl.u32 %v4329, 7
          %v4331 = vsub.s32 0, %v4330
          %v4332 = vrot.slane %v4327, %v4331
          %v4338 = vunpack.c.l.b16 %v4323
          %v4339 = vunpack.c.l.b16 %v4324
          %v4340 = vunpack.c.l.b16 %v4325
          %v4341 = vunpack.c.l.b16 %v4326
          %v4342 = vpack.c.b16 %v4339, %v4338
          %v4343 = vpack.c.b16 %v4341, %v4340
          %v4347 = vsel %vm828, %v4322, 0
          %4349 = vmatprep.subr.bf16.mxu0 0
          %4350 = vmatpush1.bf16.msra.mxu0 %v4342
          %4351 = vmatprep.subr.bf16.mxu0 0
          %4352 = vmatpush1.bf16.msra.mxu0 %v4343
          %4353 = vmatprep.subr.bf16.mxu0 0
          %4354 = vmatpush1.bf16.msra.mxu0 0
          %4355 = vmatprep.subr.bf16.mxu0 0
          %4356 = vmatpush1.bf16.msra.mxu0 0
          %4357 = vmatprep.subr.bf16.mxu0 0
          %4358 = vmatpush1.bf16.msra.mxu0 0
          %4359 = vmatprep.subr.bf16.mxu0 0
          %4360 = vmatpush1.bf16.msra.mxu0 0
          %4361 = vmatprep.subr.bf16.mxu0 0
          %4362 = vmatpush1.bf16.msra.mxu0 0
          %4363 = vmatprep.subr.bf16.mxu0 0
          %4364 = vmatpush1.bf16.msra.mxu0 0
          %4365 = vmatprep.subr.bf16.mxu0 0
          %4366 = vmatpush1.bf16.msra.mxu0 0
          %4367 = vmatprep.subr.bf16.mxu0 0
          %4368 = vmatpush1.bf16.msra.mxu0 0
          %4369 = vmatprep.subr.bf16.mxu0 0
          %4370 = vmatpush1.bf16.msra.mxu0 0
          %4371 = vmatprep.subr.bf16.mxu0 0
          %4372 = vmatpush1.bf16.msra.mxu0 0
          %4373 = vmatprep.subr.bf16.mxu0 0
          %4374 = vmatpush1.bf16.msra.mxu0 0
          %4375 = vmatprep.subr.bf16.mxu0 0
          %4376 = vmatpush1.bf16.msra.mxu0 0
          %4377 = vmatprep.subr.bf16.mxu0 0
          %4378 = vmatpush1.bf16.msra.mxu0 0
          %4379 = vmatprep.subr.bf16.mxu0 0
          %4380 = vmatpush1.bf16.msra.mxu0 0
          %4381 = vmatprep.mubr.bf16.mxu0 0
          %4382 = vmatmul.mubr.bf16.gmra.mrb[0].mxu0 %v4347
          %v4383 = vpop.f32.mrb[0].mxu0
          %v4384 = vadd.f32 %v4332, %v4383
          %v4385 = vpop.f32.mrb[0].mxu0
          %v4386 = vpop.f32.mrb[0].mxu0
          %v4387 = vadd.f32 %v4332, %v4386
          %v4388 = vpop.f32.mrb[0].mxu0
          %4389 = vdwg.mxu0
          %4390 = vst.msk [vmem:[#allocation3] sm:$0xff] %vm828, %v4384
          %4391 = vst.msk [vmem:[#allocation3 + $0x8] sm:$0xff] %vm828, %v4387
        $region96: #{tpu_custom_call.1} parent=87 // pred_fallthru
          _
        // Predicated region
        $region97: #{tpu_custom_call.1} parent=87 // pred_check
          %p4392 = pneg %p459
        $region98: #{tpu_custom_call.1} parent=87 // pred_check_branch
          %4394 = sbr.rel (%p4392) target = $region100
        $region99: #{tpu_custom_call.1} parent=87 // pred_region
          %s4396 = ssub.s32 256, 256
          %4397 = vsyncadd [#allocation4], %s4396
          %s4398 = sshll.u32 [#allocation3], 4
          %s4399 = int_to_ptr.vmem [resolvable:$true] %s4398
          %4404 = dma.vmem_to_hbm [thread:$0]  %s4399, 256, %s17, [#allocation4], 128, 128, 8
        $region100: #{tpu_custom_call.1} parent=87 // pred_fallthru
          _
        // Predicated region
        $region101: #{tpu_custom_call.1} parent=87 // pred_check
          %p4405 = pneg %p459
        $region102: #{tpu_custom_call.1} parent=87 // pred_check_branch
          %4407 = sbr.rel (%p4405) target = $region104
        $region103: #{tpu_custom_call.1} parent=87 // pred_region
          %4408 = dma.done [#allocation4], 256
        $region104: #{tpu_custom_call.1} parent=87 // pred_fallthru
          _
      $region88: #{tpu_custom_call.1} parent=5 // pred_fallthru
        _
      %p4409 = scmp.le.s32.totalorder 2, %s24
      // Predicated region
      $region105: #{tpu_custom_call.1} parent=5 // pred_check
        %p4410 = pneg %p4409
      $region106: #{tpu_custom_call.1} parent=5 // pred_check_branch
        %4412 = sbr.rel (%p4410) target = $region108
      $region107: #{tpu_custom_call.1} parent=5 // pred_region
        %s4413 = ssub.s32 %s24, 2
      $region108: #{tpu_custom_call.1} parent=5 // pred_fallthru
        _
    $region6: #{tpu_custom_call.1} parent=1 // loop_footer
      %s28 = sadd.s32 1, %s24
    $region7: #{tpu_custom_call.1} parent=1 // loop_footer_branch
      %23 = sbr.rel target = $region3
    $region8: #{tpu_custom_call.1} parent=1 // loop_exit
      _
    %4414 = vsyncpa [#allocation4], 1
    %s4415 = scalar_lea.sflag [#allocation4], 1
    %4416 = vsyncpa %s4415, 1

</llo_original>
